<compile_context>
chip_gen: v6e
topology: v6e:2x2x1
jax: 0.10.0
libtpu: 0.0.40
codegen_flags: <defaults>
</compile_context>

<pallas_src>
import functools
import math

import jax
import jax.numpy as jnp
from jax.experimental import pallas as pl
from jax.experimental.pallas import tpu as pltpu

LANE = 128  # TPU lane width; all channel dims are padded to a multiple of this


def _round_up(x, m):
    return (x + m - 1) // m * m


# ---------------- in-kernel helpers (pure jnp, traced inside the kernel) -------------

def _edge_masks(R, L, C):
    """Boolean (R, C) masks marking the first / last row of every length-L sample."""
    r = jax.lax.broadcasted_iota(jnp.int32, (R, C), 0)
    if L & (L - 1) == 0:                     # valid DPCNN lengths are powers of two
        l = jnp.bitwise_and(r, L - 1)
    else:
        l = jax.lax.rem(r, L)
    return l == 0, l == (L - 1)


def _shift_down(x):
    """Row r of the result holds x[r-1]; row 0 is zero."""
    z = jnp.zeros((1, x.shape[1]), x.dtype)
    return jnp.concatenate([z, x[:-1, :]], axis=0)


def _shift_up(x):
    """Row r of the result holds x[r+1]; the last row is zero."""
    z = jnp.zeros((1, x.shape[1]), x.dtype)
    return jnp.concatenate([x[1:, :], z], axis=0)


def _conv3_fused(x, w2d, b, L):
    """k=3 'same' conv over each length-L sample of a row-flattened (R, Ci) tensor.

    x   : (R, Ci)   activations, R = bt*L (f32 or bf16)
    w2d : (3*Ci, Co) bf16, rows ordered [tap l-1 | tap l | tap l+1]
    b   : (1, Co)    f32
    ->    (R, Co)    f32
    One MXU matmul with K = 3*Ci; taps are cast to bf16 BEFORE shifting/stacking.
    """
    R, Ci = x.shape
    xb = x.astype(jnp.bfloat16)
    first, last = _edge_masks(R, L, Ci)
    left = jnp.where(first, 0.0, _shift_down(xb))     # x[l-1], zero at sample start
    right = jnp.where(last, 0.0, _shift_up(xb))       # x[l+1], zero at sample end
    stacked = jnp.concatenate([left, xb, right], axis=-1)          # (R, 3*Ci) bf16
    out = jnp.dot(stacked, w2d, preferred_element_type=jnp.float32)
    return out + b                                                  # (R, Co) f32


def _two_conv_block(x, w1, b1, w2, b2, L):
    """Pre-activation residual block: x + conv(relu(conv(relu(x))))."""
    h = _conv3_fused(jax.nn.relu(x), w1, b1, L)
    h = _conv3_fused(jax.nn.relu(h), w2, b2, L)
    return h + x


def _maxpool3_s2_p1(x, pool_ref, L):
    """MaxPool1d(k=3, s=2, p=1) on row-flattened samples of (even) length L."""
    R, C = x.shape
    if L == 1:
        return x
    first, last = _edge_masks(R, L, C)
    neg = float("-inf")
    left = jnp.where(first, neg, _shift_down(x))
    right = jnp.where(last, neg, _shift_up(x))
    m = jnp.maximum(jnp.maximum(left, x), right)                    # full-width window max
    # Even-centre decimation as ONE strided sublane read (not l_out 1-row copies).
    pool_ref[0:R, :] = m
    return pool_ref[pl.ds(0, R // 2, stride=2), :]


# ---------------------------------- Pallas kernel ------------------------------------

def _dpcnn_kernel(x_ref, reg_w_ref, reg_b_ref,
                  cw1_ref, cb1_ref, cw2_ref, cb2_ref,
                  rw1_ref, rb1_ref, rw2_ref, rb2_ref,
                  lin_w_ref, lin_b_ref, out_ref, pool_ref, *, seq_len):
    L = seq_len
    x = x_ref[...]                                                  # (bt*L, Hp) bf16

    # regional embedding: Conv1d(hidden -> feature_map, k=3, pad=1)
    h = _conv3_fused(x, reg_w_ref[...], reg_b_ref[...], L)          # (bt*L, Fp) f32

    # Conv module: two pre-activation convs + shortcut
    h = _two_conv_block(h, cw1_ref[...], cb1_ref[...], cw2_ref[...], cb2_ref[...], L)

    # ResBlocks (statically unrolled; each halves the per-sample length)
    n_blocks = rw1_ref.shape[0]
    for i in range(n_blocks):
        h = _maxpool3_s2_p1(h, pool_ref, L)
        L = (L - 1) // 2 + 1
        h = _two_conv_block(h, rw1_ref[i], rb1_ref[i:i + 1],
                            rw2_ref[i], rb2_ref[i:i + 1], L)

    # L == 1 here -> h is (bt, Fp). Dropout is identity at inference.
    feat = h.astype(jnp.bfloat16)
    logits = jnp.dot(feat, lin_w_ref[...],
                     preferred_element_type=jnp.float32) + lin_b_ref[...]
    out_ref[:, 0, :] = logits


# ------------------------------------ wrapper ----------------------------------------

def _vmem_capacity_bytes():
    try:
        return int(pltpu.get_tpu_info().vmem_capacity_bytes)
    except Exception:
        return 64 * 1024 * 1024        # conservative default: v7x physical VMEM


def _prepare_params(params):
    """Pad channels to 128 lanes, flatten conv taps to (3*Ci, Co), cast weights to bf16."""
    H = params["reg_w"].shape[1]
    F = params["reg_w"].shape[2]
    NC = params["lin_w"].shape[1]
    nb = params["res_w1"].shape[0]
    Hp, Fp, NCp = _round_up(H, LANE), _round_up(F, LANE), _round_up(NC, LANE)

    def pad_w(w, ci, co, cip, cop):            # (3, ci, co) -> (3*cip, cop) bf16
        wp = jnp.pad(w, ((0, 0), (0, cip - ci), (0, cop - co)))
        return wp.reshape(3 * cip, cop).astype(jnp.bfloat16)

    def pad_w_stack(w, ci, co, cip, cop):      # (nb, 3, ci, co) -> (nb, 3*cip, cop) bf16
        wp = jnp.pad(w, ((0, 0), (0, 0), (0, cip - ci), (0, cop - co)))
        return wp.reshape(nb, 3 * cip, cop).astype(jnp.bfloat16)

    def pad_b(b, c, cp):                       # (1, c) -> (1, cp) f32
        return jnp.pad(b.reshape(1, -1), ((0, 0), (0, cp - c))).astype(jnp.float32)

    return {
        "Hp": Hp, "Fp": Fp, "NCp": NCp, "nb": nb,
        "reg_w": pad_w(params["reg_w"], H, F, Hp, Fp),
        "reg_b": pad_b(params["reg_b"], F, Fp),
        "conv_w1": pad_w(params["conv_w1"], F, F, Fp, Fp),
        "conv_b1": pad_b(params["conv_b1"], F, Fp),
        "conv_w2": pad_w(params["conv_w2"], F, F, Fp, Fp),
        "conv_b2": pad_b(params["conv_b2"], F, Fp),
        "res_w1": pad_w_stack(params["res_w1"], F, F, Fp, Fp),
        "res_b1": jnp.pad(params["res_b1"], ((0, 0), (0, Fp - F))).astype(jnp.float32),
        "res_w2": pad_w_stack(params["res_w2"], F, F, Fp, Fp),
        "res_b2": jnp.pad(params["res_b2"], ((0, 0), (0, Fp - F))).astype(jnp.float32),
        "lin_w": jnp.pad(params["lin_w"], ((0, Fp - F), (0, NCp - NC))).astype(jnp.bfloat16),
        "lin_b": pad_b(params["lin_b"], NC, NCp),
    }


def dpcnn_forward(x_ids, params, *, batch_tile=None):
    """x_ids: (B, seq_len) int32 token ids -> logits (B, num_class)."""
    B, L = x_ids.shape
    H = params["reg_w"].shape[1]
    num_class = params["lin_w"].shape[1]

    prep = _prepare_params(params)
    Hp, Fp, NCp, nb = prep["Hp"], prep["Fp"], prep["NCp"], prep["nb"]

    # mirror the PyTorch `assert conv_res.size(2) == 1`
    l = L
    for _ in range(nb):
        l = (l - 1) // 2 + 1
    if l != 1:
        raise ValueError(f"seq_len={L} does not pool down to 1 with {nb} ResBlocks")

    weight_args = (prep["reg_w"], prep["reg_b"],
                   prep["conv_w1"], prep["conv_b1"], prep["conv_w2"], prep["conv_b2"],
                   prep["res_w1"], prep["res_b1"], prep["res_w2"], prep["res_b2"],
                   prep["lin_w"], prep["lin_b"])
    weight_bytes = sum(a.size * a.dtype.itemsize for a in weight_args)

    # ---- per-generation tile sizing (v7x: 64 MiB VMEM, v5e/v6e: 128 MiB) ------------
    vmem_cap = _vmem_capacity_bytes()
    # per-sample VMEM bytes: double-buffered bf16 input tile, ~4 live f32 activation
    # copies, the bf16 3-tap stack and the f32 pool scratch.
    per_sample = 2 * L * Hp * 2 + 4 * L * Fp * 4 + L * 3 * Fp * 2 + L * Fp * 4
    if batch_tile is None:
        budget = int(0.4 * vmem_cap) - 2 * weight_bytes
        bt = max(1, min(32, budget // max(per_sample, 1)))
        if B >= 2:
            bt = min(bt, max(1, B // 2))       # keep >=2 grid steps (both TCs on v7x)
        bt = max(1, min(bt, B))
    else:
        bt = max(1, int(batch_tile))
    step = 8 // math.gcd(8, L)                 # keep bt*L a multiple of 8 sublanes
    bt = max(step, (bt // step) * step)

    B_pad = _round_up(B, bt)                   # pad odd batches instead of failing
    ids = x_ids if B_pad == B else jnp.pad(x_ids, ((0, B_pad - B), (0, 0)))

    # Embedding gather stays in plain JAX; the table is pre-padded to Hp lanes and
    # pre-cast to bf16 once so no extra pad/astype pass over (B, L, Hp) is needed.
    emb = jnp.pad(params["embedding"], ((0, 0), (0, Hp - H))).astype(jnp.bfloat16)
    x2 = emb[ids.reshape(-1)]                  # (B_pad*L, Hp) bf16, row-flattened

    vmem_limit = int(min(0.75 * vmem_cap,
                         max(32 << 20, 2 * (2 * weight_bytes + bt * per_sample))))

    grid = (B_pad // bt,)
    kernel = functools.partial(_dpcnn_kernel, seq_len=L)

    def const_spec(a):
        nd = a.ndim
        return pl.BlockSpec(a.shape, lambda b, _n=nd: (0,) * _n)

    in_specs = [pl.BlockSpec((bt * L, Hp), lambda b: (b, 0))]
    in_specs += [const_spec(a) for a in weight_args]
    out_specs = pl.BlockSpec((bt, 1, NCp), lambda b: (b, 0, 0))

    # advisory cost estimate (fused-conv flops + DMA bytes)
    flops = 2 * B_pad * L * (3 * Hp) * Fp + 2 * (2 * B_pad * L * (3 * Fp) * Fp)
    ll = L
    for _ in range(nb):
        ll = (ll - 1) // 2 + 1
        flops += 2 * (2 * B_pad * ll * (3 * Fp) * Fp)
    flops += 2 * B_pad * Fp * NCp
    bytes_accessed = B_pad * NCp * 4 + x2.size * x2.dtype.itemsize + weight_bytes

    out = pl.pallas_call(
        kernel,
        out_shape=jax.ShapeDtypeStruct((B_pad, 1, NCp), jnp.float32),
        grid=grid,
        in_specs=in_specs,
        out_specs=out_specs,
        scratch_shapes=[pltpu.VMEM((bt * L, Fp), jnp.float32)],   # maxpool decimation
        compiler_params=pltpu.CompilerParams(
            dimension_semantics=("parallel",),
            vmem_limit_bytes=vmem_limit),
        cost_estimate=pl.CostEstimate(flops=int(flops), transcendentals=0,
                                      bytes_accessed=int(bytes_accessed)),
    )(x2, *weight_args)

    return out[:B, 0, :num_class]


# ------------------- pure-JAX reference (independent implementation) -----------------

def _ref_conv3(x, w, b):
    B, L, Ci = x.shape
    Co = w.shape[-1]
    zp = jnp.zeros((B, 1, Ci), x.dtype)
    xp = jnp.concatenate([zp, x, zp], axis=1)
    out = jnp.zeros((B, L, Co), jnp.float32) + b.reshape(1, 1, Co)
    for k in range(3):
        xs = xp[:, k:k + L, :].reshape(B * L, Ci).astype(jnp.bfloat16)
        out = out + jnp.dot(xs, w[k].astype(jnp.bfloat16),
                            preferred_element_type=jnp.float32).reshape(B, L, Co)
    return out


def _ref_block(x, w1, b1, w2, b2):
    h = _ref_conv3(jax.nn.relu(x), w1, b1)
    h = _ref_conv3(jax.nn.relu(h), w2, b2)
    return h + x


def _ref_maxpool(x):
    B, L, C = x.shape
    neg = jnp.full((B, 1, C), -jnp.inf, x.dtype)
    xp = jnp.concatenate([neg, x, neg], axis=1)
    l_out = (L - 1) // 2 + 1
    cols = [jnp.max(xp[:, 2 * i:2 * i + 3, :], axis=1, keepdims=True) for i in range(l_out)]
    return jnp.concatenate(cols, axis=1)


def dpcnn_reference(x_ids, params):
    x = params["embedding"][x_ids].astype(jnp.float32)
    h = _ref_conv3(x, params["reg_w"], params["reg_b"])
    h = _ref_block(h, params["conv_w1"], params["conv_b1"],
                   params["conv_w2"], params["conv_b2"])
    for i in range(params["res_w1"].shape[0]):
        h = _ref_maxpool(h)
        h = _ref_block(h, params["res_w1"][i], params["res_b1"][i:i + 1],
                       params["res_w2"][i], params["res_b2"][i:i + 1])
    feat = h[:, 0, :].astype(jnp.bfloat16)
    return (jnp.dot(feat, params["lin_w"].astype(jnp.bfloat16),
                    preferred_element_type=jnp.float32) + params["lin_b"])


# --------------------------------------- init ----------------------------------------

def init_params(key, *, hidden_size, feature_map, seq_len, num_class, vocab_size):
    n_blocks = 0
    s = seq_len
    while s > 1:                       # mirrors the PyTorch __init__ while-loop
        n_blocks += 1
        s //= 2
    ks = jax.random.split(key, 16)
    scale = 0.05
    return {
        "embedding": scale * jax.random.normal(ks[0], (vocab_size, hidden_size), jnp.float32),
        "reg_w":   scale * jax.random.normal(ks[1], (3, hidden_size, feature_map), jnp.float32),
        "reg_b":   scale * jax.random.normal(ks[2], (1, feature_map), jnp.float32),
        "conv_w1": scale * jax.random.normal(ks[3], (3, feature_map, feature_map), jnp.float32),
        "conv_b1": scale * jax.random.normal(ks[4], (1, feature_map), jnp.float32),
        "conv_w2": scale * jax.random.normal(ks[5], (3, feature_map, feature_map), jnp.float32),
        "conv_b2": scale * jax.random.normal(ks[6], (1, feature_map), jnp.float32),
        "res_w1":  scale * jax.random.normal(ks[7], (n_blocks, 3, feature_map, feature_map), jnp.float32),
        "res_b1":  scale * jax.random.normal(ks[8], (n_blocks, feature_map), jnp.float32),
        "res_w2":  scale * jax.random.normal(ks[9], (n_blocks, 3, feature_map, feature_map), jnp.float32),
        "res_b2":  scale * jax.random.normal(ks[10], (n_blocks, feature_map), jnp.float32),
        "lin_w":   scale * jax.random.normal(ks[11], (feature_map, num_class), jnp.float32),
        "lin_b":   scale * jax.random.normal(ks[12], (1, num_class), jnp.float32),
    }


if __name__ == "__main__":
    batch, seq_len = 8, 8
    hidden_size, feature_map = 32, 32
    num_class, vocab_size = 4, 100

    key = jax.random.PRNGKey(0)
    k_par, k_ids = jax.random.split(key)
    params = init_params(k_par, hidden_size=hidden_size, feature_map=feature_map,
                         seq_len=seq_len, num_class=num_class, vocab_size=vocab_size)
    x_ids = jax.random.randint(k_ids, (batch, seq_len), 0, vocab_size, dtype=jnp.int32)

    logits = dpcnn_forward(x_ids, params)          # auto batch_tile (4 here -> grid=2)
    logits = jax.block_until_ready(logits)

    ref = dpcnn_reference(x_ids, params)
    assert logits.shape == (batch, num_class)
    assert jnp.allclose(logits, ref, atol=1e-3, rtol=1e-2), "mismatch vs reference"
    print("KERNEL_OK")
</pallas_src>

<mosaic_0001>
module attributes {stable_mosaic.version = 11 : i64} {
  func.func @_dpcnn_kernel(%arg0: i32, %arg1: memref<32x128xbf16, #tpu.memory_space<vmem>>, %arg2: memref<384x128xbf16, #tpu.memory_space<vmem>>, %arg3: memref<1x128xf32, #tpu.memory_space<vmem>>, %arg4: memref<384x128xbf16, #tpu.memory_space<vmem>>, %arg5: memref<1x128xf32, #tpu.memory_space<vmem>>, %arg6: memref<384x128xbf16, #tpu.memory_space<vmem>>, %arg7: memref<1x128xf32, #tpu.memory_space<vmem>>, %arg8: memref<3x384x128xbf16, #tpu.memory_space<vmem>>, %arg9: memref<3x128xf32, #tpu.memory_space<vmem>>, %arg10: memref<3x384x128xbf16, #tpu.memory_space<vmem>>, %arg11: memref<3x128xf32, #tpu.memory_space<vmem>>, %arg12: memref<128x128xbf16, #tpu.memory_space<vmem>>, %arg13: memref<1x128xf32, #tpu.memory_space<vmem>>, %arg14: memref<4x1x128xf32, #tpu.memory_space<vmem>>, %arg15: memref<32x128xf32, #tpu.memory_space<vmem>>) attributes {dimension_semantics = [#tpu.dimension_semantics<parallel>], iteration_bounds = array<i64: 2>, scalar_prefetch = 0 : i64, scratch_operands = 1 : i64, tpu.core_type = #tpu.core_type<tc>, window_params = [{transform_indices = @transform_0, window_bounds = array<i64: 32, 128>}, {pipeline_mode = #tpu.pipeline_mode<synchronous>, transform_indices = @transform_1, window_bounds = array<i64: 384, 128>}, {pipeline_mode = #tpu.pipeline_mode<synchronous>, transform_indices = @transform_2, window_bounds = array<i64: 1, 128>}, {pipeline_mode = #tpu.pipeline_mode<synchronous>, transform_indices = @transform_3, window_bounds = array<i64: 384, 128>}, {pipeline_mode = #tpu.pipeline_mode<synchronous>, transform_indices = @transform_4, window_bounds = array<i64: 1, 128>}, {pipeline_mode = #tpu.pipeline_mode<synchronous>, transform_indices = @transform_5, window_bounds = array<i64: 384, 128>}, {pipeline_mode = #tpu.pipeline_mode<synchronous>, transform_indices = @transform_6, window_bounds = array<i64: 1, 128>}, {pipeline_mode = #tpu.pipeline_mode<synchronous>, transform_indices = @transform_7, window_bounds = array<i64: 3, 384, 128>}, {pipeline_mode = #tpu.pipeline_mode<synchronous>, transform_indices = @transform_8, window_bounds = array<i64: 3, 128>}, {pipeline_mode = #tpu.pipeline_mode<synchronous>, transform_indices = @transform_9, window_bounds = array<i64: 3, 384, 128>}, {pipeline_mode = #tpu.pipeline_mode<synchronous>, transform_indices = @transform_10, window_bounds = array<i64: 3, 128>}, {pipeline_mode = #tpu.pipeline_mode<synchronous>, transform_indices = @transform_11, window_bounds = array<i64: 128, 128>}, {pipeline_mode = #tpu.pipeline_mode<synchronous>, transform_indices = @transform_12, window_bounds = array<i64: 1, 128>}, {transform_indices = @transform_13, window_bounds = array<i64: 4, 1, 128>}]} {
    %c0 = arith.constant 0 : index
    %c0_0 = arith.constant 0 : index
    %0 = vector.load %arg1[%c0, %c0_0] : memref<32x128xbf16, #tpu.memory_space<vmem>>, vector<32x128xbf16>
    %c0_1 = arith.constant 0 : index
    %c0_2 = arith.constant 0 : index
    %1 = vector.load %arg2[%c0_1, %c0_2] : memref<384x128xbf16, #tpu.memory_space<vmem>>, vector<384x128xbf16>
    %c0_3 = arith.constant 0 : index
    %c0_4 = arith.constant 0 : index
    %2 = vector.load %arg3[%c0_3, %c0_4] : memref<1x128xf32, #tpu.memory_space<vmem>>, vector<1x128xf32>
    %3 = tpu.iota {dimensions = array<i32: 0>} : vector<32x128xi32>
    %c7_i32 = arith.constant 7 : i32
    %4 = vector.broadcast %c7_i32 : i32 to vector<32x128xi32>
    %5 = arith.andi %3, %4 : vector<32x128xi32>
    %c0_i32 = arith.constant 0 : i32
    %6 = vector.broadcast %c0_i32 : i32 to vector<32x128xi32>
    %7 = arith.cmpi eq, %5, %6 : vector<32x128xi32>
    %c7_i32_5 = arith.constant 7 : i32
    %8 = vector.broadcast %c7_i32_5 : i32 to vector<32x128xi32>
    %9 = arith.cmpi eq, %5, %8 : vector<32x128xi32>
    %cst = arith.constant 0.000000e+00 : bf16
    %10 = vector.broadcast %cst : bf16 to vector<1x128xbf16>
    %11 = vector.extract_strided_slice %0 {offsets = [0, 0], sizes = [31, 128], strides = [1, 1]} : vector<32x128xbf16> to vector<31x128xbf16>
    %12 = tpu.concatenate %10, %11 in 0 : vector<1x128xbf16>, vector<31x128xbf16> -> vector<32x128xbf16>
    %cst_6 = arith.constant 0.000000e+00 : f32
    %13 = arith.truncf %cst_6 : f32 to bf16
    %14 = vector.broadcast %13 : bf16 to vector<32x128xbf16>
    %15 = arith.select %7, %14, %12 : vector<32x128xi1>, vector<32x128xbf16>
    %cst_7 = arith.constant 0.000000e+00 : bf16
    %16 = vector.broadcast %cst_7 : bf16 to vector<1x128xbf16>
    %17 = vector.extract_strided_slice %0 {offsets = [1, 0], sizes = [31, 128], strides = [1, 1]} : vector<32x128xbf16> to vector<31x128xbf16>
    %18 = tpu.concatenate %17, %16 in 0 : vector<31x128xbf16>, vector<1x128xbf16> -> vector<32x128xbf16>
    %cst_8 = arith.constant 0.000000e+00 : f32
    %19 = arith.truncf %cst_8 : f32 to bf16
    %20 = vector.broadcast %19 : bf16 to vector<32x128xbf16>
    %21 = arith.select %9, %20, %18 : vector<32x128xi1>, vector<32x128xbf16>
    %22 = tpu.concatenate %15, %0, %21 in 1 : vector<32x128xbf16>, vector<32x128xbf16>, vector<32x128xbf16> -> vector<32x384xbf16>
    %cst_9 = arith.constant dense<0.000000e+00> : vector<32x128xf32>
    %23 = tpu.matmul %22, %1, %cst_9 {dimension_numbers = #tpu.dot_dimension_numbers<[1], [0], [0], [1], [0, 0, 1, 1], [], []>} : vector<32x384xbf16>, vector<384x128xbf16>, vector<32x128xf32> -> vector<32x128xf32>
    %24 = vector.broadcast %2 : vector<1x128xf32> to vector<32x128xf32>
    %25 = arith.addf %23, %24 : vector<32x128xf32>
    %c0_10 = arith.constant 0 : index
    %c0_11 = arith.constant 0 : index
    %26 = vector.load %arg4[%c0_10, %c0_11] : memref<384x128xbf16, #tpu.memory_space<vmem>>, vector<384x128xbf16>
    %c0_12 = arith.constant 0 : index
    %c0_13 = arith.constant 0 : index
    %27 = vector.load %arg5[%c0_12, %c0_13] : memref<1x128xf32, #tpu.memory_space<vmem>>, vector<1x128xf32>
    %c0_14 = arith.constant 0 : index
    %c0_15 = arith.constant 0 : index
    %28 = vector.load %arg6[%c0_14, %c0_15] : memref<384x128xbf16, #tpu.memory_space<vmem>>, vector<384x128xbf16>
    %c0_16 = arith.constant 0 : index
    %c0_17 = arith.constant 0 : index
    %29 = vector.load %arg7[%c0_16, %c0_17] : memref<1x128xf32, #tpu.memory_space<vmem>>, vector<1x128xf32>
    %cst_18 = arith.constant 0.000000e+00 : f32
    %30 = vector.broadcast %cst_18 : f32 to vector<32x128xf32>
    %31 = arith.maximumf %25, %30 : vector<32x128xf32>
    %32 = arith.truncf %31 : vector<32x128xf32> to vector<32x128xbf16>
    %33 = tpu.iota {dimensions = array<i32: 0>} : vector<32x128xi32>
    %c7_i32_19 = arith.constant 7 : i32
    %34 = vector.broadcast %c7_i32_19 : i32 to vector<32x128xi32>
    %35 = arith.andi %33, %34 : vector<32x128xi32>
    %c0_i32_20 = arith.constant 0 : i32
    %36 = vector.broadcast %c0_i32_20 : i32 to vector<32x128xi32>
    %37 = arith.cmpi eq, %35, %36 : vector<32x128xi32>
    %c7_i32_21 = arith.constant 7 : i32
    %38 = vector.broadcast %c7_i32_21 : i32 to vector<32x128xi32>
    %39 = arith.cmpi eq, %35, %38 : vector<32x128xi32>
    %cst_22 = arith.constant 0.000000e+00 : bf16
    %40 = vector.broadcast %cst_22 : bf16 to vector<1x128xbf16>
    %41 = vector.extract_strided_slice %32 {offsets = [0, 0], sizes = [31, 128], strides = [1, 1]} : vector<32x128xbf16> to vector<31x128xbf16>
    %42 = tpu.concatenate %40, %41 in 0 : vector<1x128xbf16>, vector<31x128xbf16> -> vector<32x128xbf16>
    %cst_23 = arith.constant 0.000000e+00 : f32
    %43 = arith.truncf %cst_23 : f32 to bf16
    %44 = vector.broadcast %43 : bf16 to vector<32x128xbf16>
    %45 = arith.select %37, %44, %42 : vector<32x128xi1>, vector<32x128xbf16>
    %cst_24 = arith.constant 0.000000e+00 : bf16
    %46 = vector.broadcast %cst_24 : bf16 to vector<1x128xbf16>
    %47 = vector.extract_strided_slice %32 {offsets = [1, 0], sizes = [31, 128], strides = [1, 1]} : vector<32x128xbf16> to vector<31x128xbf16>
    %48 = tpu.concatenate %47, %46 in 0 : vector<31x128xbf16>, vector<1x128xbf16> -> vector<32x128xbf16>
    %cst_25 = arith.constant 0.000000e+00 : f32
    %49 = arith.truncf %cst_25 : f32 to bf16
    %50 = vector.broadcast %49 : bf16 to vector<32x128xbf16>
    %51 = arith.select %39, %50, %48 : vector<32x128xi1>, vector<32x128xbf16>
    %52 = tpu.concatenate %45, %32, %51 in 1 : vector<32x128xbf16>, vector<32x128xbf16>, vector<32x128xbf16> -> vector<32x384xbf16>
    %cst_26 = arith.constant dense<0.000000e+00> : vector<32x128xf32>
    %53 = tpu.matmul %52, %26, %cst_26 {dimension_numbers = #tpu.dot_dimension_numbers<[1], [0], [0], [1], [0, 0, 1, 1], [], []>} : vector<32x384xbf16>, vector<384x128xbf16>, vector<32x128xf32> -> vector<32x128xf32>
    %54 = vector.broadcast %27 : vector<1x128xf32> to vector<32x128xf32>
    %55 = arith.addf %53, %54 : vector<32x128xf32>
    %cst_27 = arith.constant 0.000000e+00 : f32
    %56 = vector.broadcast %cst_27 : f32 to vector<32x128xf32>
    %57 = arith.maximumf %55, %56 : vector<32x128xf32>
    %58 = arith.truncf %57 : vector<32x128xf32> to vector<32x128xbf16>
    %59 = tpu.iota {dimensions = array<i32: 0>} : vector<32x128xi32>
    %c7_i32_28 = arith.constant 7 : i32
    %60 = vector.broadcast %c7_i32_28 : i32 to vector<32x128xi32>
    %61 = arith.andi %59, %60 : vector<32x128xi32>
    %c0_i32_29 = arith.constant 0 : i32
    %62 = vector.broadcast %c0_i32_29 : i32 to vector<32x128xi32>
    %63 = arith.cmpi eq, %61, %62 : vector<32x128xi32>
    %c7_i32_30 = arith.constant 7 : i32
    %64 = vector.broadcast %c7_i32_30 : i32 to vector<32x128xi32>
    %65 = arith.cmpi eq, %61, %64 : vector<32x128xi32>
    %cst_31 = arith.constant 0.000000e+00 : bf16
    %66 = vector.broadcast %cst_31 : bf16 to vector<1x128xbf16>
    %67 = vector.extract_strided_slice %58 {offsets = [0, 0], sizes = [31, 128], strides = [1, 1]} : vector<32x128xbf16> to vector<31x128xbf16>
    %68 = tpu.concatenate %66, %67 in 0 : vector<1x128xbf16>, vector<31x128xbf16> -> vector<32x128xbf16>
    %cst_32 = arith.constant 0.000000e+00 : f32
    %69 = arith.truncf %cst_32 : f32 to bf16
    %70 = vector.broadcast %69 : bf16 to vector<32x128xbf16>
    %71 = arith.select %63, %70, %68 : vector<32x128xi1>, vector<32x128xbf16>
    %cst_33 = arith.constant 0.000000e+00 : bf16
    %72 = vector.broadcast %cst_33 : bf16 to vector<1x128xbf16>
    %73 = vector.extract_strided_slice %58 {offsets = [1, 0], sizes = [31, 128], strides = [1, 1]} : vector<32x128xbf16> to vector<31x128xbf16>
    %74 = tpu.concatenate %73, %72 in 0 : vector<31x128xbf16>, vector<1x128xbf16> -> vector<32x128xbf16>
    %cst_34 = arith.constant 0.000000e+00 : f32
    %75 = arith.truncf %cst_34 : f32 to bf16
    %76 = vector.broadcast %75 : bf16 to vector<32x128xbf16>
    %77 = arith.select %65, %76, %74 : vector<32x128xi1>, vector<32x128xbf16>
    %78 = tpu.concatenate %71, %58, %77 in 1 : vector<32x128xbf16>, vector<32x128xbf16>, vector<32x128xbf16> -> vector<32x384xbf16>
    %cst_35 = arith.constant dense<0.000000e+00> : vector<32x128xf32>
    %79 = tpu.matmul %78, %28, %cst_35 {dimension_numbers = #tpu.dot_dimension_numbers<[1], [0], [0], [1], [0, 0, 1, 1], [], []>} : vector<32x384xbf16>, vector<384x128xbf16>, vector<32x128xf32> -> vector<32x128xf32>
    %80 = vector.broadcast %29 : vector<1x128xf32> to vector<32x128xf32>
    %81 = arith.addf %79, %80 : vector<32x128xf32>
    %82 = arith.addf %81, %25 : vector<32x128xf32>
    %83 = tpu.iota {dimensions = array<i32: 0>} : vector<32x128xi32>
    %c7_i32_36 = arith.constant 7 : i32
    %84 = vector.broadcast %c7_i32_36 : i32 to vector<32x128xi32>
    %85 = arith.andi %83, %84 : vector<32x128xi32>
    %c0_i32_37 = arith.constant 0 : i32
    %86 = vector.broadcast %c0_i32_37 : i32 to vector<32x128xi32>
    %87 = arith.cmpi eq, %85, %86 : vector<32x128xi32>
    %c7_i32_38 = arith.constant 7 : i32
    %88 = vector.broadcast %c7_i32_38 : i32 to vector<32x128xi32>
    %89 = arith.cmpi eq, %85, %88 : vector<32x128xi32>
    %cst_39 = arith.constant 0.000000e+00 : f32
    %90 = vector.broadcast %cst_39 : f32 to vector<1x128xf32>
    %91 = vector.extract_strided_slice %82 {offsets = [0, 0], sizes = [31, 128], strides = [1, 1]} : vector<32x128xf32> to vector<31x128xf32>
    %92 = tpu.concatenate %90, %91 in 0 : vector<1x128xf32>, vector<31x128xf32> -> vector<32x128xf32>
    %cst_40 = arith.constant 0xFF800000 : f32
    %93 = vector.broadcast %cst_40 : f32 to vector<32x128xf32>
    %94 = arith.select %87, %93, %92 : vector<32x128xi1>, vector<32x128xf32>
    %cst_41 = arith.constant 0.000000e+00 : f32
    %95 = vector.broadcast %cst_41 : f32 to vector<1x128xf32>
    %96 = vector.extract_strided_slice %82 {offsets = [1, 0], sizes = [31, 128], strides = [1, 1]} : vector<32x128xf32> to vector<31x128xf32>
    %97 = tpu.concatenate %96, %95 in 0 : vector<31x128xf32>, vector<1x128xf32> -> vector<32x128xf32>
    %cst_42 = arith.constant 0xFF800000 : f32
    %98 = vector.broadcast %cst_42 : f32 to vector<32x128xf32>
    %99 = arith.select %89, %98, %97 : vector<32x128xi1>, vector<32x128xf32>
    %100 = arith.maximumf %94, %82 : vector<32x128xf32>
    %101 = arith.maximumf %100, %99 : vector<32x128xf32>
    %c0_43 = arith.constant 0 : index
    %c0_44 = arith.constant 0 : index
    %102 = vector.load %arg15[%c0_43, %c0_44] : memref<32x128xf32, #tpu.memory_space<vmem>>, vector<32x128xf32>
    tpu.vector_store %arg15[%c0_43, %c0_44], %101 {strides = array<i32>} : memref<32x128xf32, #tpu.memory_space<vmem>>, vector<32x128xf32>,
    %c0_45 = arith.constant 0 : index
    %c0_46 = arith.constant 0 : index
    %103 = tpu.strided_load %arg15[%c0_45, %c0_46] {strides = array<i32: 2, 1>} : memref<32x128xf32, #tpu.memory_space<vmem>>, vector<16x128xf32>
    %c0_47 = arith.constant 0 : index
    %c0_48 = arith.constant 0 : index
    %c0_49 = arith.constant 0 : index
    %104 = vector.load %arg8[%c0_47, %c0_48, %c0_49] : memref<3x384x128xbf16, #tpu.memory_space<vmem>>, vector<1x384x128xbf16>
    %105 = vector.shape_cast %104 : vector<1x384x128xbf16> to vector<384x128xbf16>
    %c0_50 = arith.constant 0 : index
    %c0_51 = arith.constant 0 : index
    %106 = vector.load %arg9[%c0_50, %c0_51] : memref<3x128xf32, #tpu.memory_space<vmem>>, vector<1x128xf32>
    %c0_52 = arith.constant 0 : index
    %c0_53 = arith.constant 0 : index
    %c0_54 = arith.constant 0 : index
    %107 = vector.load %arg10[%c0_52, %c0_53, %c0_54] : memref<3x384x128xbf16, #tpu.memory_space<vmem>>, vector<1x384x128xbf16>
    %108 = vector.shape_cast %107 : vector<1x384x128xbf16> to vector<384x128xbf16>
    %c0_55 = arith.constant 0 : index
    %c0_56 = arith.constant 0 : index
    %109 = vector.load %arg11[%c0_55, %c0_56] : memref<3x128xf32, #tpu.memory_space<vmem>>, vector<1x128xf32>
    %cst_57 = arith.constant 0.000000e+00 : f32
    %110 = vector.broadcast %cst_57 : f32 to vector<16x128xf32>
    %111 = arith.maximumf %103, %110 : vector<16x128xf32>
    %112 = arith.truncf %111 : vector<16x128xf32> to vector<16x128xbf16>
    %113 = tpu.iota {dimensions = array<i32: 0>} : vector<16x128xi32>
    %c3_i32 = arith.constant 3 : i32
    %114 = vector.broadcast %c3_i32 : i32 to vector<16x128xi32>
    %115 = arith.andi %113, %114 : vector<16x128xi32>
    %c0_i32_58 = arith.constant 0 : i32
    %116 = vector.broadcast %c0_i32_58 : i32 to vector<16x128xi32>
    %117 = arith.cmpi eq, %115, %116 : vector<16x128xi32>
    %c3_i32_59 = arith.constant 3 : i32
    %118 = vector.broadcast %c3_i32_59 : i32 to vector<16x128xi32>
    %119 = arith.cmpi eq, %115, %118 : vector<16x128xi32>
    %cst_60 = arith.constant 0.000000e+00 : bf16
    %120 = vector.broadcast %cst_60 : bf16 to vector<1x128xbf16>
    %121 = vector.extract_strided_slice %112 {offsets = [0, 0], sizes = [15, 128], strides = [1, 1]} : vector<16x128xbf16> to vector<15x128xbf16>
    %122 = tpu.concatenate %120, %121 in 0 : vector<1x128xbf16>, vector<15x128xbf16> -> vector<16x128xbf16>
    %cst_61 = arith.constant 0.000000e+00 : f32
    %123 = arith.truncf %cst_61 : f32 to bf16
    %124 = vector.broadcast %123 : bf16 to vector<16x128xbf16>
    %125 = arith.select %117, %124, %122 : vector<16x128xi1>, vector<16x128xbf16>
    %cst_62 = arith.constant 0.000000e+00 : bf16
    %126 = vector.broadcast %cst_62 : bf16 to vector<1x128xbf16>
    %127 = vector.extract_strided_slice %112 {offsets = [1, 0], sizes = [15, 128], strides = [1, 1]} : vector<16x128xbf16> to vector<15x128xbf16>
    %128 = tpu.concatenate %127, %126 in 0 : vector<15x128xbf16>, vector<1x128xbf16> -> vector<16x128xbf16>
    %cst_63 = arith.constant 0.000000e+00 : f32
    %129 = arith.truncf %cst_63 : f32 to bf16
    %130 = vector.broadcast %129 : bf16 to vector<16x128xbf16>
    %131 = arith.select %119, %130, %128 : vector<16x128xi1>, vector<16x128xbf16>
    %132 = tpu.concatenate %125, %112, %131 in 1 : vector<16x128xbf16>, vector<16x128xbf16>, vector<16x128xbf16> -> vector<16x384xbf16>
    %cst_64 = arith.constant dense<0.000000e+00> : vector<16x128xf32>
    %133 = tpu.matmul %132, %105, %cst_64 {dimension_numbers = #tpu.dot_dimension_numbers<[1], [0], [0], [1], [0, 0, 1, 1], [], []>} : vector<16x384xbf16>, vector<384x128xbf16>, vector<16x128xf32> -> vector<16x128xf32>
    %134 = vector.broadcast %106 : vector<1x128xf32> to vector<16x128xf32>
    %135 = arith.addf %133, %134 : vector<16x128xf32>
    %cst_65 = arith.constant 0.000000e+00 : f32
    %136 = vector.broadcast %cst_65 : f32 to vector<16x128xf32>
    %137 = arith.maximumf %135, %136 : vector<16x128xf32>
    %138 = arith.truncf %137 : vector<16x128xf32> to vector<16x128xbf16>
    %139 = tpu.iota {dimensions = array<i32: 0>} : vector<16x128xi32>
    %c3_i32_66 = arith.constant 3 : i32
    %140 = vector.broadcast %c3_i32_66 : i32 to vector<16x128xi32>
    %141 = arith.andi %139, %140 : vector<16x128xi32>
    %c0_i32_67 = arith.constant 0 : i32
    %142 = vector.broadcast %c0_i32_67 : i32 to vector<16x128xi32>
    %143 = arith.cmpi eq, %141, %142 : vector<16x128xi32>
    %c3_i32_68 = arith.constant 3 : i32
    %144 = vector.broadcast %c3_i32_68 : i32 to vector<16x128xi32>
    %145 = arith.cmpi eq, %141, %144 : vector<16x128xi32>
    %cst_69 = arith.constant 0.000000e+00 : bf16
    %146 = vector.broadcast %cst_69 : bf16 to vector<1x128xbf16>
    %147 = vector.extract_strided_slice %138 {offsets = [0, 0], sizes = [15, 128], strides = [1, 1]} : vector<16x128xbf16> to vector<15x128xbf16>
    %148 = tpu.concatenate %146, %147 in 0 : vector<1x128xbf16>, vector<15x128xbf16> -> vector<16x128xbf16>
    %cst_70 = arith.constant 0.000000e+00 : f32
    %149 = arith.truncf %cst_70 : f32 to bf16
    %150 = vector.broadcast %149 : bf16 to vector<16x128xbf16>
    %151 = arith.select %143, %150, %148 : vector<16x128xi1>, vector<16x128xbf16>
    %cst_71 = arith.constant 0.000000e+00 : bf16
    %152 = vector.broadcast %cst_71 : bf16 to vector<1x128xbf16>
    %153 = vector.extract_strided_slice %138 {offsets = [1, 0], sizes = [15, 128], strides = [1, 1]} : vector<16x128xbf16> to vector<15x128xbf16>
    %154 = tpu.concatenate %153, %152 in 0 : vector<15x128xbf16>, vector<1x128xbf16> -> vector<16x128xbf16>
    %cst_72 = arith.constant 0.000000e+00 : f32
    %155 = arith.truncf %cst_72 : f32 to bf16
    %156 = vector.broadcast %155 : bf16 to vector<16x128xbf16>
    %157 = arith.select %145, %156, %154 : vector<16x128xi1>, vector<16x128xbf16>
    %158 = tpu.concatenate %151, %138, %157 in 1 : vector<16x128xbf16>, vector<16x128xbf16>, vector<16x128xbf16> -> vector<16x384xbf16>
    %cst_73 = arith.constant dense<0.000000e+00> : vector<16x128xf32>
    %159 = tpu.matmul %158, %108, %cst_73 {dimension_numbers = #tpu.dot_dimension_numbers<[1], [0], [0], [1], [0, 0, 1, 1], [], []>} : vector<16x384xbf16>, vector<384x128xbf16>, vector<16x128xf32> -> vector<16x128xf32>
    %160 = vector.broadcast %109 : vector<1x128xf32> to vector<16x128xf32>
    %161 = arith.addf %159, %160 : vector<16x128xf32>
    %162 = arith.addf %161, %103 : vector<16x128xf32>
    %163 = tpu.iota {dimensions = array<i32: 0>} : vector<16x128xi32>
    %c3_i32_74 = arith.constant 3 : i32
    %164 = vector.broadcast %c3_i32_74 : i32 to vector<16x128xi32>
    %165 = arith.andi %163, %164 : vector<16x128xi32>
    %c0_i32_75 = arith.constant 0 : i32
    %166 = vector.broadcast %c0_i32_75 : i32 to vector<16x128xi32>
    %167 = arith.cmpi eq, %165, %166 : vector<16x128xi32>
    %c3_i32_76 = arith.constant 3 : i32
    %168 = vector.broadcast %c3_i32_76 : i32 to vector<16x128xi32>
    %169 = arith.cmpi eq, %165, %168 : vector<16x128xi32>
    %cst_77 = arith.constant 0.000000e+00 : f32
    %170 = vector.broadcast %cst_77 : f32 to vector<1x128xf32>
    %171 = vector.extract_strided_slice %162 {offsets = [0, 0], sizes = [15, 128], strides = [1, 1]} : vector<16x128xf32> to vector<15x128xf32>
    %172 = tpu.concatenate %170, %171 in 0 : vector<1x128xf32>, vector<15x128xf32> -> vector<16x128xf32>
    %cst_78 = arith.constant 0xFF800000 : f32
    %173 = vector.broadcast %cst_78 : f32 to vector<16x128xf32>
    %174 = arith.select %167, %173, %172 : vector<16x128xi1>, vector<16x128xf32>
    %cst_79 = arith.constant 0.000000e+00 : f32
    %175 = vector.broadcast %cst_79 : f32 to vector<1x128xf32>
    %176 = vector.extract_strided_slice %162 {offsets = [1, 0], sizes = [15, 128], strides = [1, 1]} : vector<16x128xf32> to vector<15x128xf32>
    %177 = tpu.concatenate %176, %175 in 0 : vector<15x128xf32>, vector<1x128xf32> -> vector<16x128xf32>
    %cst_80 = arith.constant 0xFF800000 : f32
    %178 = vector.broadcast %cst_80 : f32 to vector<16x128xf32>
    %179 = arith.select %169, %178, %177 : vector<16x128xi1>, vector<16x128xf32>
    %180 = arith.maximumf %174, %162 : vector<16x128xf32>
    %181 = arith.maximumf %180, %179 : vector<16x128xf32>
    %c0_81 = arith.constant 0 : index
    %c0_82 = arith.constant 0 : index
    %182 = vector.load %arg15[%c0_81, %c0_82] : memref<32x128xf32, #tpu.memory_space<vmem>>, vector<16x128xf32>
    tpu.vector_store %arg15[%c0_81, %c0_82], %181 {strides = array<i32>} : memref<32x128xf32, #tpu.memory_space<vmem>>, vector<16x128xf32>,
    %c0_83 = arith.constant 0 : index
    %c0_84 = arith.constant 0 : index
    %183 = tpu.strided_load %arg15[%c0_83, %c0_84] {strides = array<i32: 2, 1>} : memref<32x128xf32, #tpu.memory_space<vmem>>, vector<8x128xf32>
    %c1 = arith.constant 1 : index
    %c0_85 = arith.constant 0 : index
    %c0_86 = arith.constant 0 : index
    %184 = vector.load %arg8[%c1, %c0_85, %c0_86] : memref<3x384x128xbf16, #tpu.memory_space<vmem>>, vector<1x384x128xbf16>
    %185 = vector.shape_cast %184 : vector<1x384x128xbf16> to vector<384x128xbf16>
    %c1_87 = arith.constant 1 : index
    %c0_88 = arith.constant 0 : index
    %186 = vector.load %arg9[%c1_87, %c0_88] : memref<3x128xf32, #tpu.memory_space<vmem>>, vector<1x128xf32>
    %c1_89 = arith.constant 1 : index
    %c0_90 = arith.constant 0 : index
    %c0_91 = arith.constant 0 : index
    %187 = vector.load %arg10[%c1_89, %c0_90, %c0_91] : memref<3x384x128xbf16, #tpu.memory_space<vmem>>, vector<1x384x128xbf16>
    %188 = vector.shape_cast %187 : vector<1x384x128xbf16> to vector<384x128xbf16>
    %c1_92 = arith.constant 1 : index
    %c0_93 = arith.constant 0 : index
    %189 = vector.load %arg11[%c1_92, %c0_93] : memref<3x128xf32, #tpu.memory_space<vmem>>, vector<1x128xf32>
    %cst_94 = arith.constant 0.000000e+00 : f32
    %190 = vector.broadcast %cst_94 : f32 to vector<8x128xf32>
    %191 = arith.maximumf %183, %190 : vector<8x128xf32>
    %192 = arith.truncf %191 : vector<8x128xf32> to vector<8x128xbf16>
    %193 = tpu.iota {dimensions = array<i32: 0>} : vector<8x128xi32>
    %c1_i32 = arith.constant 1 : i32
    %194 = vector.broadcast %c1_i32 : i32 to vector<8x128xi32>
    %195 = arith.andi %193, %194 : vector<8x128xi32>
    %c0_i32_95 = arith.constant 0 : i32
    %196 = vector.broadcast %c0_i32_95 : i32 to vector<8x128xi32>
    %197 = arith.cmpi eq, %195, %196 : vector<8x128xi32>
    %c1_i32_96 = arith.constant 1 : i32
    %198 = vector.broadcast %c1_i32_96 : i32 to vector<8x128xi32>
    %199 = arith.cmpi eq, %195, %198 : vector<8x128xi32>
    %cst_97 = arith.constant 0.000000e+00 : bf16
    %200 = vector.broadcast %cst_97 : bf16 to vector<1x128xbf16>
    %201 = vector.extract_strided_slice %192 {offsets = [0, 0], sizes = [7, 128], strides = [1, 1]} : vector<8x128xbf16> to vector<7x128xbf16>
    %202 = tpu.concatenate %200, %201 in 0 : vector<1x128xbf16>, vector<7x128xbf16> -> vector<8x128xbf16>
    %cst_98 = arith.constant 0.000000e+00 : f32
    %203 = arith.truncf %cst_98 : f32 to bf16
    %204 = vector.broadcast %203 : bf16 to vector<8x128xbf16>
    %205 = arith.select %197, %204, %202 : vector<8x128xi1>, vector<8x128xbf16>
    %cst_99 = arith.constant 0.000000e+00 : bf16
    %206 = vector.broadcast %cst_99 : bf16 to vector<1x128xbf16>
    %207 = vector.extract_strided_slice %192 {offsets = [1, 0], sizes = [7, 128], strides = [1, 1]} : vector<8x128xbf16> to vector<7x128xbf16>
    %208 = tpu.concatenate %207, %206 in 0 : vector<7x128xbf16>, vector<1x128xbf16> -> vector<8x128xbf16>
    %cst_100 = arith.constant 0.000000e+00 : f32
    %209 = arith.truncf %cst_100 : f32 to bf16
    %210 = vector.broadcast %209 : bf16 to vector<8x128xbf16>
    %211 = arith.select %199, %210, %208 : vector<8x128xi1>, vector<8x128xbf16>
    %212 = tpu.concatenate %205, %192, %211 in 1 : vector<8x128xbf16>, vector<8x128xbf16>, vector<8x128xbf16> -> vector<8x384xbf16>
    %cst_101 = arith.constant dense<0.000000e+00> : vector<8x128xf32>
    %213 = tpu.matmul %212, %185, %cst_101 {dimension_numbers = #tpu.dot_dimension_numbers<[1], [0], [0], [1], [0, 0, 1, 1], [], []>} : vector<8x384xbf16>, vector<384x128xbf16>, vector<8x128xf32> -> vector<8x128xf32>
    %214 = vector.broadcast %186 : vector<1x128xf32> to vector<8x128xf32>
    %215 = arith.addf %213, %214 : vector<8x128xf32>
    %cst_102 = arith.constant 0.000000e+00 : f32
    %216 = vector.broadcast %cst_102 : f32 to vector<8x128xf32>
    %217 = arith.maximumf %215, %216 : vector<8x128xf32>
    %218 = arith.truncf %217 : vector<8x128xf32> to vector<8x128xbf16>
    %219 = tpu.iota {dimensions = array<i32: 0>} : vector<8x128xi32>
    %c1_i32_103 = arith.constant 1 : i32
    %220 = vector.broadcast %c1_i32_103 : i32 to vector<8x128xi32>
    %221 = arith.andi %219, %220 : vector<8x128xi32>
    %c0_i32_104 = arith.constant 0 : i32
    %222 = vector.broadcast %c0_i32_104 : i32 to vector<8x128xi32>
    %223 = arith.cmpi eq, %221, %222 : vector<8x128xi32>
    %c1_i32_105 = arith.constant 1 : i32
    %224 = vector.broadcast %c1_i32_105 : i32 to vector<8x128xi32>
    %225 = arith.cmpi eq, %221, %224 : vector<8x128xi32>
    %cst_106 = arith.constant 0.000000e+00 : bf16
    %226 = vector.broadcast %cst_106 : bf16 to vector<1x128xbf16>
    %227 = vector.extract_strided_slice %218 {offsets = [0, 0], sizes = [7, 128], strides = [1, 1]} : vector<8x128xbf16> to vector<7x128xbf16>
    %228 = tpu.concatenate %226, %227 in 0 : vector<1x128xbf16>, vector<7x128xbf16> -> vector<8x128xbf16>
    %cst_107 = arith.constant 0.000000e+00 : f32
    %229 = arith.truncf %cst_107 : f32 to bf16
    %230 = vector.broadcast %229 : bf16 to vector<8x128xbf16>
    %231 = arith.select %223, %230, %228 : vector<8x128xi1>, vector<8x128xbf16>
    %cst_108 = arith.constant 0.000000e+00 : bf16
    %232 = vector.broadcast %cst_108 : bf16 to vector<1x128xbf16>
    %233 = vector.extract_strided_slice %218 {offsets = [1, 0], sizes = [7, 128], strides = [1, 1]} : vector<8x128xbf16> to vector<7x128xbf16>
    %234 = tpu.concatenate %233, %232 in 0 : vector<7x128xbf16>, vector<1x128xbf16> -> vector<8x128xbf16>
    %cst_109 = arith.constant 0.000000e+00 : f32
    %235 = arith.truncf %cst_109 : f32 to bf16
    %236 = vector.broadcast %235 : bf16 to vector<8x128xbf16>
    %237 = arith.select %225, %236, %234 : vector<8x128xi1>, vector<8x128xbf16>
    %238 = tpu.concatenate %231, %218, %237 in 1 : vector<8x128xbf16>, vector<8x128xbf16>, vector<8x128xbf16> -> vector<8x384xbf16>
    %cst_110 = arith.constant dense<0.000000e+00> : vector<8x128xf32>
    %239 = tpu.matmul %238, %188, %cst_110 {dimension_numbers = #tpu.dot_dimension_numbers<[1], [0], [0], [1], [0, 0, 1, 1], [], []>} : vector<8x384xbf16>, vector<384x128xbf16>, vector<8x128xf32> -> vector<8x128xf32>
    %240 = vector.broadcast %189 : vector<1x128xf32> to vector<8x128xf32>
    %241 = arith.addf %239, %240 : vector<8x128xf32>
    %242 = arith.addf %241, %183 : vector<8x128xf32>
    %243 = tpu.iota {dimensions = array<i32: 0>} : vector<8x128xi32>
    %c1_i32_111 = arith.constant 1 : i32
    %244 = vector.broadcast %c1_i32_111 : i32 to vector<8x128xi32>
    %245 = arith.andi %243, %244 : vector<8x128xi32>
    %c0_i32_112 = arith.constant 0 : i32
    %246 = vector.broadcast %c0_i32_112 : i32 to vector<8x128xi32>
    %247 = arith.cmpi eq, %245, %246 : vector<8x128xi32>
    %c1_i32_113 = arith.constant 1 : i32
    %248 = vector.broadcast %c1_i32_113 : i32 to vector<8x128xi32>
    %249 = arith.cmpi eq, %245, %248 : vector<8x128xi32>
    %cst_114 = arith.constant 0.000000e+00 : f32
    %250 = vector.broadcast %cst_114 : f32 to vector<1x128xf32>
    %251 = vector.extract_strided_slice %242 {offsets = [0, 0], sizes = [7, 128], strides = [1, 1]} : vector<8x128xf32> to vector<7x128xf32>
    %252 = tpu.concatenate %250, %251 in 0 : vector<1x128xf32>, vector<7x128xf32> -> vector<8x128xf32>
    %cst_115 = arith.constant 0xFF800000 : f32
    %253 = vector.broadcast %cst_115 : f32 to vector<8x128xf32>
    %254 = arith.select %247, %253, %252 : vector<8x128xi1>, vector<8x128xf32>
    %cst_116 = arith.constant 0.000000e+00 : f32
    %255 = vector.broadcast %cst_116 : f32 to vector<1x128xf32>
    %256 = vector.extract_strided_slice %242 {offsets = [1, 0], sizes = [7, 128], strides = [1, 1]} : vector<8x128xf32> to vector<7x128xf32>
    %257 = tpu.concatenate %256, %255 in 0 : vector<7x128xf32>, vector<1x128xf32> -> vector<8x128xf32>
    %cst_117 = arith.constant 0xFF800000 : f32
    %258 = vector.broadcast %cst_117 : f32 to vector<8x128xf32>
    %259 = arith.select %249, %258, %257 : vector<8x128xi1>, vector<8x128xf32>
    %260 = arith.maximumf %254, %242 : vector<8x128xf32>
    %261 = arith.maximumf %260, %259 : vector<8x128xf32>
    %c0_118 = arith.constant 0 : index
    %c0_119 = arith.constant 0 : index
    %262 = vector.load %arg15[%c0_118, %c0_119] : memref<32x128xf32, #tpu.memory_space<vmem>>, vector<8x128xf32>
    tpu.vector_store %arg15[%c0_118, %c0_119], %261 {strides = array<i32>} : memref<32x128xf32, #tpu.memory_space<vmem>>, vector<8x128xf32>,
    %c0_120 = arith.constant 0 : index
    %c0_121 = arith.constant 0 : index
    %263 = tpu.strided_load %arg15[%c0_120, %c0_121] {strides = array<i32: 2, 1>} : memref<32x128xf32, #tpu.memory_space<vmem>>, vector<4x128xf32>
    %c2 = arith.constant 2 : index
    %c0_122 = arith.constant 0 : index
    %c0_123 = arith.constant 0 : index
    %264 = vector.load %arg8[%c2, %c0_122, %c0_123] : memref<3x384x128xbf16, #tpu.memory_space<vmem>>, vector<1x384x128xbf16>
    %265 = vector.shape_cast %264 : vector<1x384x128xbf16> to vector<384x128xbf16>
    %c2_124 = arith.constant 2 : index
    %c0_125 = arith.constant 0 : index
    %266 = vector.load %arg9[%c2_124, %c0_125] : memref<3x128xf32, #tpu.memory_space<vmem>>, vector<1x128xf32>
    %c2_126 = arith.constant 2 : index
    %c0_127 = arith.constant 0 : index
    %c0_128 = arith.constant 0 : index
    %267 = vector.load %arg10[%c2_126, %c0_127, %c0_128] : memref<3x384x128xbf16, #tpu.memory_space<vmem>>, vector<1x384x128xbf16>
    %268 = vector.shape_cast %267 : vector<1x384x128xbf16> to vector<384x128xbf16>
    %c2_129 = arith.constant 2 : index
    %c0_130 = arith.constant 0 : index
    %269 = vector.load %arg11[%c2_129, %c0_130] : memref<3x128xf32, #tpu.memory_space<vmem>>, vector<1x128xf32>
    %cst_131 = arith.constant 0.000000e+00 : f32
    %270 = vector.broadcast %cst_131 : f32 to vector<4x128xf32>
    %271 = arith.maximumf %263, %270 : vector<4x128xf32>
    %272 = arith.truncf %271 : vector<4x128xf32> to vector<4x128xbf16>
    %273 = tpu.iota {dimensions = array<i32: 0>} : vector<4x128xi32>
    %c0_i32_132 = arith.constant 0 : i32
    %274 = vector.broadcast %c0_i32_132 : i32 to vector<4x128xi32>
    %275 = arith.andi %273, %274 : vector<4x128xi32>
    %c0_i32_133 = arith.constant 0 : i32
    %276 = vector.broadcast %c0_i32_133 : i32 to vector<4x128xi32>
    %277 = arith.cmpi eq, %275, %276 : vector<4x128xi32>
    %c0_i32_134 = arith.constant 0 : i32
    %278 = vector.broadcast %c0_i32_134 : i32 to vector<4x128xi32>
    %279 = arith.cmpi eq, %275, %278 : vector<4x128xi32>
    %cst_135 = arith.constant 0.000000e+00 : bf16
    %280 = vector.broadcast %cst_135 : bf16 to vector<1x128xbf16>
    %281 = vector.extract_strided_slice %272 {offsets = [0, 0], sizes = [3, 128], strides = [1, 1]} : vector<4x128xbf16> to vector<3x128xbf16>
    %282 = tpu.concatenate %280, %281 in 0 : vector<1x128xbf16>, vector<3x128xbf16> -> vector<4x128xbf16>
    %cst_136 = arith.constant 0.000000e+00 : f32
    %283 = arith.truncf %cst_136 : f32 to bf16
    %284 = vector.broadcast %283 : bf16 to vector<4x128xbf16>
    %285 = arith.select %277, %284, %282 : vector<4x128xi1>, vector<4x128xbf16>
    %cst_137 = arith.constant 0.000000e+00 : bf16
    %286 = vector.broadcast %cst_137 : bf16 to vector<1x128xbf16>
    %287 = vector.extract_strided_slice %272 {offsets = [1, 0], sizes = [3, 128], strides = [1, 1]} : vector<4x128xbf16> to vector<3x128xbf16>
    %288 = tpu.concatenate %287, %286 in 0 : vector<3x128xbf16>, vector<1x128xbf16> -> vector<4x128xbf16>
    %cst_138 = arith.constant 0.000000e+00 : f32
    %289 = arith.truncf %cst_138 : f32 to bf16
    %290 = vector.broadcast %289 : bf16 to vector<4x128xbf16>
    %291 = arith.select %279, %290, %288 : vector<4x128xi1>, vector<4x128xbf16>
    %292 = tpu.concatenate %285, %272, %291 in 1 : vector<4x128xbf16>, vector<4x128xbf16>, vector<4x128xbf16> -> vector<4x384xbf16>
    %cst_139 = arith.constant dense<0.000000e+00> : vector<4x128xf32>
    %293 = tpu.matmul %292, %265, %cst_139 {dimension_numbers = #tpu.dot_dimension_numbers<[1], [0], [0], [1], [0, 0, 1, 1], [], []>} : vector<4x384xbf16>, vector<384x128xbf16>, vector<4x128xf32> -> vector<4x128xf32>
    %294 = vector.broadcast %266 : vector<1x128xf32> to vector<4x128xf32>
    %295 = arith.addf %293, %294 : vector<4x128xf32>
    %cst_140 = arith.constant 0.000000e+00 : f32
    %296 = vector.broadcast %cst_140 : f32 to vector<4x128xf32>
    %297 = arith.maximumf %295, %296 : vector<4x128xf32>
    %298 = arith.truncf %297 : vector<4x128xf32> to vector<4x128xbf16>
    %299 = tpu.iota {dimensions = array<i32: 0>} : vector<4x128xi32>
    %c0_i32_141 = arith.constant 0 : i32
    %300 = vector.broadcast %c0_i32_141 : i32 to vector<4x128xi32>
    %301 = arith.andi %299, %300 : vector<4x128xi32>
    %c0_i32_142 = arith.constant 0 : i32
    %302 = vector.broadcast %c0_i32_142 : i32 to vector<4x128xi32>
    %303 = arith.cmpi eq, %301, %302 : vector<4x128xi32>
    %c0_i32_143 = arith.constant 0 : i32
    %304 = vector.broadcast %c0_i32_143 : i32 to vector<4x128xi32>
    %305 = arith.cmpi eq, %301, %304 : vector<4x128xi32>
    %cst_144 = arith.constant 0.000000e+00 : bf16
    %306 = vector.broadcast %cst_144 : bf16 to vector<1x128xbf16>
    %307 = vector.extract_strided_slice %298 {offsets = [0, 0], sizes = [3, 128], strides = [1, 1]} : vector<4x128xbf16> to vector<3x128xbf16>
    %308 = tpu.concatenate %306, %307 in 0 : vector<1x128xbf16>, vector<3x128xbf16> -> vector<4x128xbf16>
    %cst_145 = arith.constant 0.000000e+00 : f32
    %309 = arith.truncf %cst_145 : f32 to bf16
    %310 = vector.broadcast %309 : bf16 to vector<4x128xbf16>
    %311 = arith.select %303, %310, %308 : vector<4x128xi1>, vector<4x128xbf16>
    %cst_146 = arith.constant 0.000000e+00 : bf16
    %312 = vector.broadcast %cst_146 : bf16 to vector<1x128xbf16>
    %313 = vector.extract_strided_slice %298 {offsets = [1, 0], sizes = [3, 128], strides = [1, 1]} : vector<4x128xbf16> to vector<3x128xbf16>
    %314 = tpu.concatenate %313, %312 in 0 : vector<3x128xbf16>, vector<1x128xbf16> -> vector<4x128xbf16>
    %cst_147 = arith.constant 0.000000e+00 : f32
    %315 = arith.truncf %cst_147 : f32 to bf16
    %316 = vector.broadcast %315 : bf16 to vector<4x128xbf16>
    %317 = arith.select %305, %316, %314 : vector<4x128xi1>, vector<4x128xbf16>
    %318 = tpu.concatenate %311, %298, %317 in 1 : vector<4x128xbf16>, vector<4x128xbf16>, vector<4x128xbf16> -> vector<4x384xbf16>
    %cst_148 = arith.constant dense<0.000000e+00> : vector<4x128xf32>
    %319 = tpu.matmul %318, %268, %cst_148 {dimension_numbers = #tpu.dot_dimension_numbers<[1], [0], [0], [1], [0, 0, 1, 1], [], []>} : vector<4x384xbf16>, vector<384x128xbf16>, vector<4x128xf32> -> vector<4x128xf32>
    %320 = vector.broadcast %269 : vector<1x128xf32> to vector<4x128xf32>
    %321 = arith.addf %319, %320 : vector<4x128xf32>
    %322 = arith.addf %321, %263 : vector<4x128xf32>
    %323 = arith.truncf %322 : vector<4x128xf32> to vector<4x128xbf16>
    %c0_149 = arith.constant 0 : index
    %c0_150 = arith.constant 0 : index
    %324 = vector.load %arg12[%c0_149, %c0_150] : memref<128x128xbf16, #tpu.memory_space<vmem>>, vector<128x128xbf16>
    %cst_151 = arith.constant dense<0.000000e+00> : vector<4x128xf32>
    %325 = tpu.matmul %323, %324, %cst_151 {dimension_numbers = #tpu.dot_dimension_numbers<[1], [0], [0], [1], [0, 0, 1, 1], [], []>} : vector<4x128xbf16>, vector<128x128xbf16>, vector<4x128xf32> -> vector<4x128xf32>
    %c0_152 = arith.constant 0 : index
    %c0_153 = arith.constant 0 : index
    %326 = vector.load %arg13[%c0_152, %c0_153] : memref<1x128xf32, #tpu.memory_space<vmem>>, vector<1x128xf32>
    %327 = vector.broadcast %326 : vector<1x128xf32> to vector<4x128xf32>
    %328 = arith.addf %325, %327 : vector<4x128xf32>
    %c0_154 = arith.constant 0 : index
    %c0_155 = arith.constant 0 : index
    %c0_156 = arith.constant 0 : index
    %329 = vector.load %arg14[%c0_154, %c0_155, %c0_156] : memref<4x1x128xf32, #tpu.memory_space<vmem>>, vector<4x1x128xf32>
    %330 = vector.shape_cast %329 : vector<4x1x128xf32> to vector<4x128xf32>
    %331 = vector.shape_cast %328 : vector<4x128xf32> to vector<4x1x128xf32>
    tpu.vector_store %arg14[%c0_154, %c0_155, %c0_156], %331 {strides = array<i32>} : memref<4x1x128xf32, #tpu.memory_space<vmem>>, vector<4x1x128xf32>,
    return
  }
  func.func @transform_0(%arg0: i32) -> (i32, i32) {
    %c0_i32 = arith.constant 0 : i32
    %c0_i32_0 = arith.constant 0 : i32
    return %arg0, %c0_i32 : i32, i32
  }
  func.func @transform_1(%arg0: i32) -> (i32, i32) {
    %c0_i32 = arith.constant 0 : i32
    %c0_i32_0 = arith.constant 0 : i32
    %c0_i32_1 = arith.constant 0 : i32
    return %c0_i32, %c0_i32_0 : i32, i32
  }
  func.func @transform_2(%arg0: i32) -> (i32, i32) {
    %c0_i32 = arith.constant 0 : i32
    %c0_i32_0 = arith.constant 0 : i32
    %c0_i32_1 = arith.constant 0 : i32
    return %c0_i32, %c0_i32_0 : i32, i32
  }
  func.func @transform_3(%arg0: i32) -> (i32, i32) {
    %c0_i32 = arith.constant 0 : i32
    %c0_i32_0 = arith.constant 0 : i32
    %c0_i32_1 = arith.constant 0 : i32
    return %c0_i32, %c0_i32_0 : i32, i32
  }
  func.func @transform_4(%arg0: i32) -> (i32, i32) {
    %c0_i32 = arith.constant 0 : i32
    %c0_i32_0 = arith.constant 0 : i32
    %c0_i32_1 = arith.constant 0 : i32
    return %c0_i32, %c0_i32_0 : i32, i32
  }
  func.func @transform_5(%arg0: i32) -> (i32, i32) {
    %c0_i32 = arith.constant 0 : i32
    %c0_i32_0 = arith.constant 0 : i32
    %c0_i32_1 = arith.constant 0 : i32
    return %c0_i32, %c0_i32_0 : i32, i32
  }
  func.func @transform_6(%arg0: i32) -> (i32, i32) {
    %c0_i32 = arith.constant 0 : i32
    %c0_i32_0 = arith.constant 0 : i32
    %c0_i32_1 = arith.constant 0 : i32
    return %c0_i32, %c0_i32_0 : i32, i32
  }
  func.func @transform_7(%arg0: i32) -> (i32, i32, i32) {
    %c0_i32 = arith.constant 0 : i32
    %c0_i32_0 = arith.constant 0 : i32
    %c0_i32_1 = arith.constant 0 : i32
    %c0_i32_2 = arith.constant 0 : i32
    return %c0_i32, %c0_i32_0, %c0_i32_1 : i32, i32, i32
  }
  func.func @transform_8(%arg0: i32) -> (i32, i32) {
    %c0_i32 = arith.constant 0 : i32
    %c0_i32_0 = arith.constant 0 : i32
    %c0_i32_1 = arith.constant 0 : i32
    return %c0_i32, %c0_i32_0 : i32, i32
  }
  func.func @transform_9(%arg0: i32) -> (i32, i32, i32) {
    %c0_i32 = arith.constant 0 : i32
    %c0_i32_0 = arith.constant 0 : i32
    %c0_i32_1 = arith.constant 0 : i32
    %c0_i32_2 = arith.constant 0 : i32
    return %c0_i32, %c0_i32_0, %c0_i32_1 : i32, i32, i32
  }
  func.func @transform_10(%arg0: i32) -> (i32, i32) {
    %c0_i32 = arith.constant 0 : i32
    %c0_i32_0 = arith.constant 0 : i32
    %c0_i32_1 = arith.constant 0 : i32
    return %c0_i32, %c0_i32_0 : i32, i32
  }
  func.func @transform_11(%arg0: i32) -> (i32, i32) {
    %c0_i32 = arith.constant 0 : i32
    %c0_i32_0 = arith.constant 0 : i32
    %c0_i32_1 = arith.constant 0 : i32
    return %c0_i32, %c0_i32_0 : i32, i32
  }
  func.func @transform_12(%arg0: i32) -> (i32, i32) {
    %c0_i32 = arith.constant 0 : i32
    %c0_i32_0 = arith.constant 0 : i32
    %c0_i32_1 = arith.constant 0 : i32
    return %c0_i32, %c0_i32_0 : i32, i32
  }
  func.func @transform_13(%arg0: i32) -> (i32, i32, i32) {
    %c0_i32 = arith.constant 0 : i32
    %c0_i32_0 = arith.constant 0 : i32
    %c0_i32_1 = arith.constant 0 : i32
    return %arg0, %c0_i32, %c0_i32_0 : i32, i32, i32
  }
}

</mosaic_0001>

<llo_original>
// kernel: tpu_custom_call.1
$region0: #{tpu_custom_call.1}
  #allocation0 [shape = 'u32[]', space=smem, size = 0x4, offset = 0x4, fixed_abs, tag = 'smem constant byte address 0x4 - core index']
  #allocation1 [shape = 'u32[144,128]{1,0:T(1,128)}', space=vmem, size = 0x12000, scoped, tag = 'internal scratch']
  #allocation2 [shape = 'f32[32,128]{1,0:T(8,128)}', space=vmem, size = 0x4000, scoped, tag = 'scratch operand']
  %s0 = inlined_call_operand.hbm [shape: bf16[64,128], index: 0, kind: input, shape index: {}]
  %s1 = inlined_call_operand.hbm [shape: bf16[384,128], index: 1, kind: input, shape index: {}]
  %s2 = inlined_call_operand.vmem [shape: f32[1,128], index: 2, kind: input, shape index: {}]
  %s3 = inlined_call_operand.hbm [shape: bf16[384,128], index: 3, kind: input, shape index: {}]
  %s4 = inlined_call_operand.hbm [shape: f32[1,128], index: 4, kind: input, shape index: {}]
  %s5 = inlined_call_operand.hbm [shape: bf16[384,128], index: 5, kind: input, shape index: {}]
  %s6 = inlined_call_operand.vmem [shape: f32[1,128], index: 6, kind: input, shape index: {}]
  %s7 = inlined_call_operand.hbm [shape: bf16[3,384,128], index: 7, kind: input, shape index: {}]
  %s8 = inlined_call_operand.vmem [shape: f32[3,128], index: 8, kind: input, shape index: {}]
  %s9 = inlined_call_operand.hbm [shape: bf16[3,384,128], index: 9, kind: input, shape index: {}]
  %s10 = inlined_call_operand.vmem [shape: f32[3,128], index: 10, kind: input, shape index: {}]
  %s11 = inlined_call_operand.hbm [shape: bf16[128,128], index: 11, kind: input, shape index: {}]
  %s12 = inlined_call_operand.vmem [shape: f32[1,128], index: 12, kind: input, shape index: {}]
  %s13 = inlined_call_operand.hbm [shape: f32[8,1,128], index: 13, kind: output, shape index: {}]
  %s14 = sld [smem:[#allocation0]]
  $region117: #{tpu_custom_call.1} parent=0
    _
  %s16 = ssub.s32 1, %s14
  %s17 = scalar_select 0, %s16, %s14
  $region1: #{tpu_custom_call.1} parent=0
    #allocation3 [shape = 'u8[16384]{0}', space=vmem, size = 0x4000, scoped, tag = 'input window, operand 0']
    #allocation4 [shape = 's32[2]{0}', space=sflag, size = 0x8, scoped, tag = 'scoped memory for tpu_custom_call.1']
    #allocation5 [shape = 's32[2]{0}', space=sflag, size = 0x8, scoped, tag = 'scoped memory for tpu_custom_call.1']
    #allocation6 [shape = 'u8[98304]{0}', space=vmem, size = 0x18000, scoped, tag = 'input window, operand 1, single buffered']
    #allocation7 [shape = 's32[1]{0}', space=sflag, size = 0x4, scoped, tag = 'scoped memory for tpu_custom_call.1']
    #allocation8 [shape = 'u8[98304]{0}', space=vmem, size = 0x18000, scoped, tag = 'input window, operand 3, single buffered']
    #allocation9 [shape = 'u8[512]{0}', space=vmem, size = 0x400, scoped, tag = 'input window, operand 4, single buffered']
    #allocation10 [shape = 's32[1]{0}', space=sflag, size = 0x4, scoped, tag = 'scoped memory for tpu_custom_call.1']
    #allocation11 [shape = 'u8[98304]{0}', space=vmem, size = 0x18000, scoped, tag = 'input window, operand 5, single buffered']
    #allocation12 [shape = 'u8[294912]{0}', space=vmem, size = 0x48000, scoped, tag = 'input window, operand 7, single buffered']
    #allocation13 [shape = 's32[1]{0}', space=sflag, size = 0x4, scoped, tag = 'scoped memory for tpu_custom_call.1']
    #allocation14 [shape = 'u8[294912]{0}', space=vmem, size = 0x48000, scoped, tag = 'input window, operand 9, single buffered']
    #allocation15 [shape = 'u8[32768]{0}', space=vmem, size = 0x8000, scoped, tag = 'input window, operand 11, single buffered']
    #allocation16 [shape = 's32[1]{0}', space=sflag, size = 0x4, scoped, tag = 'scoped memory for tpu_custom_call.1']
    #allocation17 [shape = 'u8[4096]{0}', space=vmem, size = 0x1000, scoped, tag = 'output window, operand 0']
    %18 = vsyncpa [#allocation4], 0
    %s19 = scalar_lea.sflag [#allocation4], 1
    %20 = vsyncpa %s19, 0
    %21 = vsyncpa [#allocation7], 0
    %22 = vsyncpa [#allocation10], 0
    %23 = vsyncpa [#allocation13], 0
    %24 = vsyncpa [#allocation16], 0
    %25 = vsyncpa [#allocation5], 0
    %s26 = scalar_lea.sflag [#allocation5], 1
    %27 = vsyncpa %s26, 0
    loop: start=0, step=1, limit=4
    $region2: #{tpu_custom_call.1} parent=1 // loop_pre_header
      _
    $region3: #{tpu_custom_call.1} parent=1 // loop_header
      %s29 = sphi 0, %s33
      %p30 = scmp.ge.s32.totalorder %s29, 4
      %s39 = sphi 0, %s41
      %s42 = sphi 0, %s39
      %s43 = sphi 0, %s42
      %s59 = sphi 0, %s43
      %s63 = sphi 0, %s63
      %s65 = sphi 0, %s63
      %s66 = sphi 0, %s65
      %s80 = sphi 0, %s66
      %s84 = sphi 0, %s84
      %s86 = sphi 0, %s84
      %s87 = sphi 0, %s86
      %s101 = sphi 0, %s87
      %s105 = sphi 0, %s105
      %s107 = sphi 0, %s105
      %s108 = sphi 0, %s107
      %s122 = sphi 0, %s108
      %s126 = sphi 0, %s126
      %s128 = sphi 0, %s126
      %s129 = sphi 0, %s128
      %s143 = sphi 0, %s129
      %s147 = sphi 0, %s147
      %s149 = sphi 0, %s147
      %s150 = sphi 0, %s149
      %s164 = sphi 0, %s150
      %s168 = sphi 0, %s168
      %s170 = sphi 0, %s168
      %s171 = sphi 0, %s170
      %s185 = sphi 0, %s171
      %s189 = sphi 0, %s189
      %s191 = sphi 0, %s189
      %s192 = sphi 0, %s191
      %s206 = sphi 0, %s192
      %s210 = sphi 0, %s210
      %s212 = sphi 0, %s210
      %s213 = sphi 0, %s212
      %s227 = sphi 0, %s213
      %s231 = sphi 0, %s231
      %s233 = sphi 0, %s231
      %s234 = sphi 0, %s233
      %s248 = sphi 0, %s234
      %s252 = sphi 0, %s252
      %s254 = sphi 0, %s252
      %s255 = sphi 0, %s254
      %s269 = sphi 0, %s255
      %s273 = sphi 0, %s273
      %s275 = sphi 0, %s273
      %s276 = sphi 0, %s275
      %s290 = sphi 0, %s276
      %s294 = sphi 0, %s294
      %s296 = sphi 0, %s294
      %s297 = sphi 0, %s296
      %s311 = sphi 0, %s297
      %s317 = sphi 0, %s319
      %s320 = sphi 0, %s317
      %s321 = sphi 0, %s320
      %s337 = sphi 0, %s321
    $region4: #{tpu_custom_call.1} parent=1 // loop_header_branch
      %32 = sbr.rel (%p30) target = $region8
    $region5: #{tpu_custom_call.1} parent=1 // loop_body
      %s34 = ssub.s32 %s29, 1
      %s35 = ssub.s32 %s29, 2
      %s36 = sadd.s32 %s29, 1
      %s37 = ssub.s32 %s29, %s36
      %p38 = scmp.eq.s32.totalorder %s37, 0
      %s40 = sadd.s32 %s39, 1
      %s41 = scalar_select %p38, %s39, %s40
      %p44 = pneg %p38
      %p45 = scmp.eq.s32.totalorder %s29, 1
      %p46 = por %p44, %p45
      %p47 = scmp.ne.s32.totalorder %s39, %s42
      %p48 = scmp.eq.s32.totalorder %s29, 0
      %p49 = por %p47, %p48
      %p50 = scmp.ne.s32.totalorder %s39, %s42
      %p51 = scmp.eq.s32.totalorder %s34, 1
      %p52 = por %p50, %p51
      %p53 = scmp.ne.s32.totalorder %s42, %s43
      %p54 = scmp.eq.s32.totalorder %s34, 0
      %p55 = por %p53, %p54
      %p56 = scmp.ne.s32.totalorder %s42, %s43
      %p57 = scmp.eq.s32.totalorder %s35, 1
      %p58 = por %p56, %p57
      %p60 = scmp.ne.s32.totalorder %s43, %s59
      %p61 = scmp.eq.s32.totalorder %s35, 0
      %p62 = por %p60, %p61
      %s64 = sadd.s32 %s63, 1
      %p67 = scmp.eq.s32.totalorder %s29, 1
      %p68 = scmp.ne.s32.totalorder %s63, %s65
      %p69 = scmp.eq.s32.totalorder %s29, 0
      %p70 = por %p68, %p69
      %p71 = scmp.ne.s32.totalorder %s63, %s65
      %p72 = scmp.eq.s32.totalorder %s34, 1
      %p73 = por %p71, %p72
      %p74 = scmp.ne.s32.totalorder %s65, %s66
      %p75 = scmp.eq.s32.totalorder %s34, 0
      %p76 = por %p74, %p75
      %p77 = scmp.ne.s32.totalorder %s65, %s66
      %p78 = scmp.eq.s32.totalorder %s35, 1
      %p79 = por %p77, %p78
      %p81 = scmp.ne.s32.totalorder %s66, %s80
      %p82 = scmp.eq.s32.totalorder %s35, 0
      %p83 = por %p81, %p82
      %s85 = sadd.s32 %s84, 1
      %p88 = scmp.eq.s32.totalorder %s29, 1
      %p89 = scmp.ne.s32.totalorder %s84, %s86
      %p90 = scmp.eq.s32.totalorder %s29, 0
      %p91 = por %p89, %p90
      %p92 = scmp.ne.s32.totalorder %s84, %s86
      %p93 = scmp.eq.s32.totalorder %s34, 1
      %p94 = por %p92, %p93
      %p95 = scmp.ne.s32.totalorder %s86, %s87
      %p96 = scmp.eq.s32.totalorder %s34, 0
      %p97 = por %p95, %p96
      %p98 = scmp.ne.s32.totalorder %s86, %s87
      %p99 = scmp.eq.s32.totalorder %s35, 1
      %p100 = por %p98, %p99
      %p102 = scmp.ne.s32.totalorder %s87, %s101
      %p103 = scmp.eq.s32.totalorder %s35, 0
      %p104 = por %p102, %p103
      %s106 = sadd.s32 %s105, 1
      %p109 = scmp.eq.s32.totalorder %s29, 1
      %p110 = scmp.ne.s32.totalorder %s105, %s107
      %p111 = scmp.eq.s32.totalorder %s29, 0
      %p112 = por %p110, %p111
      %p113 = scmp.ne.s32.totalorder %s105, %s107
      %p114 = scmp.eq.s32.totalorder %s34, 1
      %p115 = por %p113, %p114
      %p116 = scmp.ne.s32.totalorder %s107, %s108
      %p117 = scmp.eq.s32.totalorder %s34, 0
      %p118 = por %p116, %p117
      %p119 = scmp.ne.s32.totalorder %s107, %s108
      %p120 = scmp.eq.s32.totalorder %s35, 1
      %p121 = por %p119, %p120
      %p123 = scmp.ne.s32.totalorder %s108, %s122
      %p124 = scmp.eq.s32.totalorder %s35, 0
      %p125 = por %p123, %p124
      %s127 = sadd.s32 %s126, 1
      %p130 = scmp.eq.s32.totalorder %s29, 1
      %p131 = scmp.ne.s32.totalorder %s126, %s128
      %p132 = scmp.eq.s32.totalorder %s29, 0
      %p133 = por %p131, %p132
      %p134 = scmp.ne.s32.totalorder %s126, %s128
      %p135 = scmp.eq.s32.totalorder %s34, 1
      %p136 = por %p134, %p135
      %p137 = scmp.ne.s32.totalorder %s128, %s129
      %p138 = scmp.eq.s32.totalorder %s34, 0
      %p139 = por %p137, %p138
      %p140 = scmp.ne.s32.totalorder %s128, %s129
      %p141 = scmp.eq.s32.totalorder %s35, 1
      %p142 = por %p140, %p141
      %p144 = scmp.ne.s32.totalorder %s129, %s143
      %p145 = scmp.eq.s32.totalorder %s35, 0
      %p146 = por %p144, %p145
      %s148 = sadd.s32 %s147, 1
      %p151 = scmp.eq.s32.totalorder %s29, 1
      %p152 = scmp.ne.s32.totalorder %s147, %s149
      %p153 = scmp.eq.s32.totalorder %s29, 0
      %p154 = por %p152, %p153
      %p155 = scmp.ne.s32.totalorder %s147, %s149
      %p156 = scmp.eq.s32.totalorder %s34, 1
      %p157 = por %p155, %p156
      %p158 = scmp.ne.s32.totalorder %s149, %s150
      %p159 = scmp.eq.s32.totalorder %s34, 0
      %p160 = por %p158, %p159
      %p161 = scmp.ne.s32.totalorder %s149, %s150
      %p162 = scmp.eq.s32.totalorder %s35, 1
      %p163 = por %p161, %p162
      %p165 = scmp.ne.s32.totalorder %s150, %s164
      %p166 = scmp.eq.s32.totalorder %s35, 0
      %p167 = por %p165, %p166
      %s169 = sadd.s32 %s168, 1
      %p172 = scmp.eq.s32.totalorder %s29, 1
      %p173 = scmp.ne.s32.totalorder %s168, %s170
      %p174 = scmp.eq.s32.totalorder %s29, 0
      %p175 = por %p173, %p174
      %p176 = scmp.ne.s32.totalorder %s168, %s170
      %p177 = scmp.eq.s32.totalorder %s34, 1
      %p178 = por %p176, %p177
      %p179 = scmp.ne.s32.totalorder %s170, %s171
      %p180 = scmp.eq.s32.totalorder %s34, 0
      %p181 = por %p179, %p180
      %p182 = scmp.ne.s32.totalorder %s170, %s171
      %p183 = scmp.eq.s32.totalorder %s35, 1
      %p184 = por %p182, %p183
      %p186 = scmp.ne.s32.totalorder %s171, %s185
      %p187 = scmp.eq.s32.totalorder %s35, 0
      %p188 = por %p186, %p187
      %s190 = sadd.s32 %s189, 1
      %p193 = scmp.eq.s32.totalorder %s29, 1
      %p194 = scmp.ne.s32.totalorder %s189, %s191
      %p195 = scmp.eq.s32.totalorder %s29, 0
      %p196 = por %p194, %p195
      %p197 = scmp.ne.s32.totalorder %s189, %s191
      %p198 = scmp.eq.s32.totalorder %s34, 1
      %p199 = por %p197, %p198
      %p200 = scmp.ne.s32.totalorder %s191, %s192
      %p201 = scmp.eq.s32.totalorder %s34, 0
      %p202 = por %p200, %p201
      %p203 = scmp.ne.s32.totalorder %s191, %s192
      %p204 = scmp.eq.s32.totalorder %s35, 1
      %p205 = por %p203, %p204
      %p207 = scmp.ne.s32.totalorder %s192, %s206
      %p208 = scmp.eq.s32.totalorder %s35, 0
      %p209 = por %p207, %p208
      %s211 = sadd.s32 %s210, 1
      %p214 = scmp.eq.s32.totalorder %s29, 1
      %p215 = scmp.ne.s32.totalorder %s210, %s212
      %p216 = scmp.eq.s32.totalorder %s29, 0
      %p217 = por %p215, %p216
      %p218 = scmp.ne.s32.totalorder %s210, %s212
      %p219 = scmp.eq.s32.totalorder %s34, 1
      %p220 = por %p218, %p219
      %p221 = scmp.ne.s32.totalorder %s212, %s213
      %p222 = scmp.eq.s32.totalorder %s34, 0
      %p223 = por %p221, %p222
      %p224 = scmp.ne.s32.totalorder %s212, %s213
      %p225 = scmp.eq.s32.totalorder %s35, 1
      %p226 = por %p224, %p225
      %p228 = scmp.ne.s32.totalorder %s213, %s227
      %p229 = scmp.eq.s32.totalorder %s35, 0
      %p230 = por %p228, %p229
      %s232 = sadd.s32 %s231, 1
      %p235 = scmp.eq.s32.totalorder %s29, 1
      %p236 = scmp.ne.s32.totalorder %s231, %s233
      %p237 = scmp.eq.s32.totalorder %s29, 0
      %p238 = por %p236, %p237
      %p239 = scmp.ne.s32.totalorder %s231, %s233
      %p240 = scmp.eq.s32.totalorder %s34, 1
      %p241 = por %p239, %p240
      %p242 = scmp.ne.s32.totalorder %s233, %s234
      %p243 = scmp.eq.s32.totalorder %s34, 0
      %p244 = por %p242, %p243
      %p245 = scmp.ne.s32.totalorder %s233, %s234
      %p246 = scmp.eq.s32.totalorder %s35, 1
      %p247 = por %p245, %p246
      %p249 = scmp.ne.s32.totalorder %s234, %s248
      %p250 = scmp.eq.s32.totalorder %s35, 0
      %p251 = por %p249, %p250
      %s253 = sadd.s32 %s252, 1
      %p256 = scmp.eq.s32.totalorder %s29, 1
      %p257 = scmp.ne.s32.totalorder %s252, %s254
      %p258 = scmp.eq.s32.totalorder %s29, 0
      %p259 = por %p257, %p258
      %p260 = scmp.ne.s32.totalorder %s252, %s254
      %p261 = scmp.eq.s32.totalorder %s34, 1
      %p262 = por %p260, %p261
      %p263 = scmp.ne.s32.totalorder %s254, %s255
      %p264 = scmp.eq.s32.totalorder %s34, 0
      %p265 = por %p263, %p264
      %p266 = scmp.ne.s32.totalorder %s254, %s255
      %p267 = scmp.eq.s32.totalorder %s35, 1
      %p268 = por %p266, %p267
      %p270 = scmp.ne.s32.totalorder %s255, %s269
      %p271 = scmp.eq.s32.totalorder %s35, 0
      %p272 = por %p270, %p271
      %s274 = sadd.s32 %s273, 1
      %p277 = scmp.eq.s32.totalorder %s29, 1
      %p278 = scmp.ne.s32.totalorder %s273, %s275
      %p279 = scmp.eq.s32.totalorder %s29, 0
      %p280 = por %p278, %p279
      %p281 = scmp.ne.s32.totalorder %s273, %s275
      %p282 = scmp.eq.s32.totalorder %s34, 1
      %p283 = por %p281, %p282
      %p284 = scmp.ne.s32.totalorder %s275, %s276
      %p285 = scmp.eq.s32.totalorder %s34, 0
      %p286 = por %p284, %p285
      %p287 = scmp.ne.s32.totalorder %s275, %s276
      %p288 = scmp.eq.s32.totalorder %s35, 1
      %p289 = por %p287, %p288
      %p291 = scmp.ne.s32.totalorder %s276, %s290
      %p292 = scmp.eq.s32.totalorder %s35, 0
      %p293 = por %p291, %p292
      %s295 = sadd.s32 %s294, 1
      %p298 = scmp.eq.s32.totalorder %s29, 1
      %p299 = scmp.ne.s32.totalorder %s294, %s296
      %p300 = scmp.eq.s32.totalorder %s29, 0
      %p301 = por %p299, %p300
      %p302 = scmp.ne.s32.totalorder %s294, %s296
      %p303 = scmp.eq.s32.totalorder %s34, 1
      %p304 = por %p302, %p303
      %p305 = scmp.ne.s32.totalorder %s296, %s297
      %p306 = scmp.eq.s32.totalorder %s34, 0
      %p307 = por %p305, %p306
      %p308 = scmp.ne.s32.totalorder %s296, %s297
      %p309 = scmp.eq.s32.totalorder %s35, 1
      %p310 = por %p308, %p309
      %p312 = scmp.ne.s32.totalorder %s297, %s311
      %p313 = scmp.eq.s32.totalorder %s35, 0
      %p314 = por %p312, %p313
      %s315 = ssub.s32 %s29, %s36
      %p316 = scmp.eq.s32.totalorder %s315, 0
      %s318 = sadd.s32 %s317, 1
      %s319 = scalar_select %p316, %s317, %s318
      %p322 = pneg %p316
      %p323 = scmp.eq.s32.totalorder %s29, 1
      %p324 = por %p322, %p323
      %p325 = scmp.ne.s32.totalorder %s317, %s320
      %p326 = scmp.eq.s32.totalorder %s29, 0
      %p327 = por %p325, %p326
      %p328 = scmp.ne.s32.totalorder %s317, %s320
      %p329 = scmp.eq.s32.totalorder %s34, 1
      %p330 = por %p328, %p329
      %p331 = scmp.ne.s32.totalorder %s320, %s321
      %p332 = scmp.eq.s32.totalorder %s34, 0
      %p333 = por %p331, %p332
      %p334 = scmp.ne.s32.totalorder %s320, %s321
      %p335 = scmp.eq.s32.totalorder %s35, 1
      %p336 = por %p334, %p335
      %p338 = scmp.ne.s32.totalorder %s321, %s337
      %p339 = scmp.eq.s32.totalorder %s35, 0
      %p340 = por %p338, %p339
      %p341 = scmp.le.s32.totalorder 1, %s29
      %p342 = scmp.lt.s32.totalorder %s29, 3
      %p343 = pnand %p341, %p342
      %p344 = pneg %p343
      // Predicated region
      $region9: #{tpu_custom_call.1} parent=5 // pred_check
        _
      $region10: #{tpu_custom_call.1} parent=5 // pred_check_branch
        %346 = sbr.rel (%p343) target = $region12
      $region11: #{tpu_custom_call.1} parent=5 // pred_region
        %s347 = ssub.s32 %s29, 1
        // Predicated region
        $region13: #{tpu_custom_call.1} parent=11 // pred_check
          %p348 = pneg %p76
        $region14: #{tpu_custom_call.1} parent=11 // pred_check_branch
          %350 = sbr.rel (%p348) target = $region16
        $region15: #{tpu_custom_call.1} parent=11 // pred_region
          %s352 = ssub.s32 3072, 3072
          %353 = vsyncadd [#allocation7], %s352
          %s354 = sshll.u32 [#allocation6], 4
          %s355 = int_to_ptr.vmem [resolvable:$true] %s354
          %360 = dma.hbm_to_vmem [thread:$0]  %s1, 3072, %s355, [#allocation7], 64, 64, 4
        $region16: #{tpu_custom_call.1} parent=11 // pred_fallthru
          _
        // Predicated region
        $region17: #{tpu_custom_call.1} parent=11 // pred_check
          %p361 = pneg %p97
        $region18: #{tpu_custom_call.1} parent=11 // pred_check_branch
          %363 = sbr.rel (%p361) target = $region20
        $region19: #{tpu_custom_call.1} parent=11 // pred_region
          _
        $region20: #{tpu_custom_call.1} parent=11 // pred_fallthru
          _
        // Predicated region
        $region21: #{tpu_custom_call.1} parent=11 // pred_check
          %p364 = pneg %p118
        $region22: #{tpu_custom_call.1} parent=11 // pred_check_branch
          %366 = sbr.rel (%p364) target = $region24
        $region23: #{tpu_custom_call.1} parent=11 // pred_region
          %s368 = ssub.s32 3072, 3072
          %369 = vsyncadd [#allocation7], %s368
          %s370 = sshll.u32 [#allocation8], 4
          %s371 = int_to_ptr.vmem [resolvable:$true] %s370
          %376 = dma.hbm_to_vmem [thread:$0]  %s3, 3072, %s371, [#allocation7], 64, 64, 4
        $region24: #{tpu_custom_call.1} parent=11 // pred_fallthru
          _
        // Predicated region
        $region25: #{tpu_custom_call.1} parent=11 // pred_check
          %p377 = pneg %p139
        $region26: #{tpu_custom_call.1} parent=11 // pred_check_branch
          %379 = sbr.rel (%p377) target = $region28
        $region27: #{tpu_custom_call.1} parent=11 // pred_region
          %s381 = ssub.s32 16, 16
          %382 = vsyncadd [#allocation10], %s381
          %s384 = sshll.u32 [#allocation9], 4
          %s385 = int_to_ptr.vmem [resolvable:$true] %s384
          %387 = dma.hbm_to_vmem [thread:$0]  %s4, 16, %s385, [#allocation10]
        $region28: #{tpu_custom_call.1} parent=11 // pred_fallthru
          _
        // Predicated region
        $region29: #{tpu_custom_call.1} parent=11 // pred_check
          %p388 = pneg %p160
        $region30: #{tpu_custom_call.1} parent=11 // pred_check_branch
          %390 = sbr.rel (%p388) target = $region32
        $region31: #{tpu_custom_call.1} parent=11 // pred_region
          %s392 = ssub.s32 3072, 3072
          %393 = vsyncadd [#allocation10], %s392
          %s394 = sshll.u32 [#allocation11], 4
          %s395 = int_to_ptr.vmem [resolvable:$true] %s394
          %400 = dma.hbm_to_vmem [thread:$0]  %s5, 3072, %s395, [#allocation10], 64, 64, 4
        $region32: #{tpu_custom_call.1} parent=11 // pred_fallthru
          _
        // Predicated region
        $region33: #{tpu_custom_call.1} parent=11 // pred_check
          %p401 = pneg %p181
        $region34: #{tpu_custom_call.1} parent=11 // pred_check_branch
          %403 = sbr.rel (%p401) target = $region36
        $region35: #{tpu_custom_call.1} parent=11 // pred_region
          _
        $region36: #{tpu_custom_call.1} parent=11 // pred_fallthru
          _
        // Predicated region
        $region37: #{tpu_custom_call.1} parent=11 // pred_check
          %p404 = pneg %p202
        $region38: #{tpu_custom_call.1} parent=11 // pred_check_branch
          %406 = sbr.rel (%p404) target = $region40
        $region39: #{tpu_custom_call.1} parent=11 // pred_region
          %s408 = ssub.s32 9216, 9216
          %409 = vsyncadd [#allocation13], %s408
          %s410 = sshll.u32 [#allocation12], 4
          %s411 = int_to_ptr.vmem [resolvable:$true] %s410
          %416 = dma.hbm_to_vmem [thread:$0]  %s7, 9216, %s411, [#allocation13], 64, 64, 4
        $region40: #{tpu_custom_call.1} parent=11 // pred_fallthru
          _
        // Predicated region
        $region41: #{tpu_custom_call.1} parent=11 // pred_check
          %p417 = pneg %p223
        $region42: #{tpu_custom_call.1} parent=11 // pred_check_branch
          %419 = sbr.rel (%p417) target = $region44
        $region43: #{tpu_custom_call.1} parent=11 // pred_region
          _
        $region44: #{tpu_custom_call.1} parent=11 // pred_fallthru
          _
        // Predicated region
        $region45: #{tpu_custom_call.1} parent=11 // pred_check
          %p420 = pneg %p244
        $region46: #{tpu_custom_call.1} parent=11 // pred_check_branch
          %422 = sbr.rel (%p420) target = $region48
        $region47: #{tpu_custom_call.1} parent=11 // pred_region
          %s424 = ssub.s32 9216, 9216
          %425 = vsyncadd [#allocation13], %s424
          %s426 = sshll.u32 [#allocation14], 4
          %s427 = int_to_ptr.vmem [resolvable:$true] %s426
          %432 = dma.hbm_to_vmem [thread:$0]  %s9, 9216, %s427, [#allocation13], 64, 64, 4
        $region48: #{tpu_custom_call.1} parent=11 // pred_fallthru
          _
        // Predicated region
        $region49: #{tpu_custom_call.1} parent=11 // pred_check
          %p433 = pneg %p265
        $region50: #{tpu_custom_call.1} parent=11 // pred_check_branch
          %435 = sbr.rel (%p433) target = $region52
        $region51: #{tpu_custom_call.1} parent=11 // pred_region
          _
        $region52: #{tpu_custom_call.1} parent=11 // pred_fallthru
          _
        // Predicated region
        $region53: #{tpu_custom_call.1} parent=11 // pred_check
          %p436 = pneg %p286
        $region54: #{tpu_custom_call.1} parent=11 // pred_check_branch
          %438 = sbr.rel (%p436) target = $region56
        $region55: #{tpu_custom_call.1} parent=11 // pred_region
          %s440 = ssub.s32 1024, 1024
          %441 = vsyncadd [#allocation16], %s440
          %s442 = sshll.u32 [#allocation15], 4
          %s443 = int_to_ptr.vmem [resolvable:$true] %s442
          %448 = dma.hbm_to_vmem [thread:$0]  %s11, 1024, %s443, [#allocation16], 64, 64, 4
        $region56: #{tpu_custom_call.1} parent=11 // pred_fallthru
          _
        // Predicated region
        $region57: #{tpu_custom_call.1} parent=11 // pred_check
          %p449 = pneg %p307
        $region58: #{tpu_custom_call.1} parent=11 // pred_check_branch
          %451 = sbr.rel (%p449) target = $region60
        $region59: #{tpu_custom_call.1} parent=11 // pred_region
          _
        $region60: #{tpu_custom_call.1} parent=11 // pred_fallthru
          _
      $region12: #{tpu_custom_call.1} parent=5 // pred_fallthru
        _
      %p452 = scmp.lt.s32.totalorder %s29, 2
      // Predicated region
      $region61: #{tpu_custom_call.1} parent=5 // pred_check
        %p453 = pneg %p452
      $region62: #{tpu_custom_call.1} parent=5 // pred_check_branch
        %455 = sbr.rel (%p453) target = $region64
      $region63: #{tpu_custom_call.1} parent=5 // pred_region
        // Predicated region
        $region65: #{tpu_custom_call.1} parent=63 // pred_check
          %p456 = pneg %p49
        $region66: #{tpu_custom_call.1} parent=63 // pred_check_branch
          %458 = sbr.rel (%p456) target = $region68
        $region67: #{tpu_custom_call.1} parent=63 // pred_region
          %s459 = sand.u32 %s39, 1
          %s460 = scalar_lea.sflag [#allocation4], %s459
          %s461 = sand.u32 %s39, 1
          %s462 = smul.addr %s461, 16
          %s463 = scalar_lea.vmem [#allocation3], %s462
          %s464 = smul.u32 4, %s29
          %s466 = ssub.s32 256, 256
          %467 = vsyncadd %s460, %s466
          %s468 = smul.addr %s464, 64
          %s469 = scalar_lea.hbm %s0, %s468
          %s470 = sshll.u32 %s463, 4
          %s471 = int_to_ptr.vmem [resolvable:$true] %s470
          %476 = dma.hbm_to_vmem [thread:$0]  %s469, 256, %s471, %s460, 64, 64, 4
        $region68: #{tpu_custom_call.1} parent=63 // pred_fallthru
          _
      $region64: #{tpu_custom_call.1} parent=5 // pred_fallthru
        _
      %p477 = scmp.le.s32.totalorder 1, %s29
      %p478 = scmp.lt.s32.totalorder %s29, 3
      %p479 = pnand %p477, %p478
      %p480 = pneg %p479
      // Predicated region
      $region69: #{tpu_custom_call.1} parent=5 // pred_check
        _
      $region70: #{tpu_custom_call.1} parent=5 // pred_check_branch
        %482 = sbr.rel (%p479) target = $region72
      $region71: #{tpu_custom_call.1} parent=5 // pred_region
        %s483 = ssub.s32 %s29, 1
        %s484 = sand.u32 %s42, 1
        %s485 = scalar_lea.sflag [#allocation4], %s484
        %s486 = sand.u32 %s42, 1
        %s487 = smul.addr %s486, 16
        %s488 = scalar_lea.vmem [#allocation3], %s487
        // Predicated region
        $region73: #{tpu_custom_call.1} parent=71 // pred_check
          %p489 = pneg %p55
        $region74: #{tpu_custom_call.1} parent=71 // pred_check_branch
          %491 = sbr.rel (%p489) target = $region76
        $region75: #{tpu_custom_call.1} parent=71 // pred_region
          %492 = dma.done %s485, 256
        $region76: #{tpu_custom_call.1} parent=71 // pred_fallthru
          _
        // Predicated region
        $region77: #{tpu_custom_call.1} parent=71 // pred_check
          %p493 = pneg %p76
        $region78: #{tpu_custom_call.1} parent=71 // pred_check_branch
          %495 = sbr.rel (%p493) target = $region80
        $region79: #{tpu_custom_call.1} parent=71 // pred_region
          %496 = dma.done [#allocation7], 3072
        $region80: #{tpu_custom_call.1} parent=71 // pred_fallthru
          _
        // Predicated region
        $region81: #{tpu_custom_call.1} parent=71 // pred_check
          %p497 = pneg %p118
        $region82: #{tpu_custom_call.1} parent=71 // pred_check_branch
          %499 = sbr.rel (%p497) target = $region84
        $region83: #{tpu_custom_call.1} parent=71 // pred_region
          %500 = dma.done [#allocation7], 3072
        $region84: #{tpu_custom_call.1} parent=71 // pred_fallthru
          _
        // Predicated region
        $region85: #{tpu_custom_call.1} parent=71 // pred_check
          %p501 = pneg %p139
        $region86: #{tpu_custom_call.1} parent=71 // pred_check_branch
          %503 = sbr.rel (%p501) target = $region88
        $region87: #{tpu_custom_call.1} parent=71 // pred_region
          %504 = dma.done [#allocation10], 16
        $region88: #{tpu_custom_call.1} parent=71 // pred_fallthru
          _
        // Predicated region
        $region89: #{tpu_custom_call.1} parent=71 // pred_check
          %p505 = pneg %p160
        $region90: #{tpu_custom_call.1} parent=71 // pred_check_branch
          %507 = sbr.rel (%p505) target = $region92
        $region91: #{tpu_custom_call.1} parent=71 // pred_region
          %508 = dma.done [#allocation10], 3072
        $region92: #{tpu_custom_call.1} parent=71 // pred_fallthru
          _
        // Predicated region
        $region93: #{tpu_custom_call.1} parent=71 // pred_check
          %p509 = pneg %p202
        $region94: #{tpu_custom_call.1} parent=71 // pred_check_branch
          %511 = sbr.rel (%p509) target = $region96
        $region95: #{tpu_custom_call.1} parent=71 // pred_region
          %512 = dma.done [#allocation13], 9216
        $region96: #{tpu_custom_call.1} parent=71 // pred_fallthru
          _
        // Predicated region
        $region97: #{tpu_custom_call.1} parent=71 // pred_check
          %p513 = pneg %p244
        $region98: #{tpu_custom_call.1} parent=71 // pred_check_branch
          %515 = sbr.rel (%p513) target = $region100
        $region99: #{tpu_custom_call.1} parent=71 // pred_region
          %516 = dma.done [#allocation13], 9216
        $region100: #{tpu_custom_call.1} parent=71 // pred_fallthru
          _
        // Predicated region
        $region101: #{tpu_custom_call.1} parent=71 // pred_check
          %p517 = pneg %p286
        $region102: #{tpu_custom_call.1} parent=71 // pred_check_branch
          %519 = sbr.rel (%p517) target = $region104
        $region103: #{tpu_custom_call.1} parent=71 // pred_region
          %520 = dma.done [#allocation16], 1024
        $region104: #{tpu_custom_call.1} parent=71 // pred_fallthru
          _
        %s521 = sand.u32 %s42, 1
        %s522 = scalar_lea.sflag [#allocation4], %s521
        %s523 = sand.u32 %s42, 1
        %s524 = smul.addr %s523, 16
        %s525 = scalar_lea.vmem [#allocation3], %s524
        %p526 = pneg %p55
        %p527 = pneg %p52
        %p528 = pneg %p76
        %p529 = pneg %p73
        %p530 = pneg %p97
        %p531 = pneg %p94
        %p532 = pneg %p118
        %p533 = pneg %p115
        %p534 = pneg %p139
        %p535 = pneg %p136
        %p536 = pneg %p160
        %p537 = pneg %p157
        %p538 = pneg %p181
        %p539 = pneg %p178
        %p540 = pneg %p202
        %p541 = pneg %p199
        %p542 = pneg %p223
        %p543 = pneg %p220
        %p544 = pneg %p244
        %p545 = pneg %p241
        %p546 = pneg %p265
        %p547 = pneg %p262
        %p548 = pneg %p286
        %p549 = pneg %p283
        %p550 = pneg %p307
        %p551 = pneg %p304
        %p552 = pneg %p333
        %p553 = pneg %p330
        %s554 = sand.u32 %s320, 1
        %s555 = scalar_lea.sflag [#allocation5], %s554
        %s556 = sand.u32 %s320, 1
        %s557 = smul.addr %s556, 4
        %s558 = scalar_lea.vmem [#allocation17], %s557
        %s559 = smul.u32 4, %s34
        %s560 = smul.u32 4, %s34
        %v564 = vld [vmem:[%s488] sm:$0xf]
        %v565 = vld [vmem:[%s488 + $0x4] sm:$0xf]
        %v566 = vld [vmem:[%s488 + $0x8] sm:$0xf]
        %v567 = vld [vmem:[%s488 + $0xc] sm:$0xf]
        %v568 = vld [vmem:[#allocation6] sm:$0xf]
        %v569 = vld [vmem:[#allocation6 + $0x4] sm:$0xf]
        %v570 = vld [vmem:[#allocation6 + $0x8] sm:$0xf]
        %v571 = vld [vmem:[#allocation6 + $0xc] sm:$0xf]
        %v572 = vld [vmem:[#allocation6 + $0x10] sm:$0xf]
        %v573 = vld [vmem:[#allocation6 + $0x14] sm:$0xf]
        %v574 = vld [vmem:[#allocation6 + $0x18] sm:$0xf]
        %v575 = vld [vmem:[#allocation6 + $0x1c] sm:$0xf]
        %v576 = vld [vmem:[#allocation6 + $0x20] sm:$0xf]
        %v577 = vld [vmem:[#allocation6 + $0x24] sm:$0xf]
        %v578 = vld [vmem:[#allocation6 + $0x28] sm:$0xf]
        %v579 = vld [vmem:[#allocation6 + $0x2c] sm:$0xf]
        %v580 = vld [vmem:[#allocation6 + $0x30] sm:$0xf]
        %v581 = vld [vmem:[#allocation6 + $0x34] sm:$0xf]
        %v582 = vld [vmem:[#allocation6 + $0x38] sm:$0xf]
        %v583 = vld [vmem:[#allocation6 + $0x3c] sm:$0xf]
        %v584 = vld [vmem:[#allocation6 + $0x40] sm:$0xf]
        %v585 = vld [vmem:[#allocation6 + $0x44] sm:$0xf]
        %v586 = vld [vmem:[#allocation6 + $0x48] sm:$0xf]
        %v587 = vld [vmem:[#allocation6 + $0x4c] sm:$0xf]
        %v588 = vld [vmem:[#allocation6 + $0x50] sm:$0xf]
        %v589 = vld [vmem:[#allocation6 + $0x54] sm:$0xf]
        %v590 = vld [vmem:[#allocation6 + $0x58] sm:$0xf]
        %v591 = vld [vmem:[#allocation6 + $0x5c] sm:$0xf]
        %v592 = vld [vmem:[#allocation6 + $0x60] sm:$0xf]
        %v593 = vld [vmem:[#allocation6 + $0x64] sm:$0xf]
        %v594 = vld [vmem:[#allocation6 + $0x68] sm:$0xf]
        %v595 = vld [vmem:[#allocation6 + $0x6c] sm:$0xf]
        %v596 = vld [vmem:[#allocation6 + $0x70] sm:$0xf]
        %v597 = vld [vmem:[#allocation6 + $0x74] sm:$0xf]
        %v598 = vld [vmem:[#allocation6 + $0x78] sm:$0xf]
        %v599 = vld [vmem:[#allocation6 + $0x7c] sm:$0xf]
        %v600 = vld [vmem:[#allocation6 + $0x80] sm:$0xf]
        %v601 = vld [vmem:[#allocation6 + $0x84] sm:$0xf]
        %v602 = vld [vmem:[#allocation6 + $0x88] sm:$0xf]
        %v603 = vld [vmem:[#allocation6 + $0x8c] sm:$0xf]
        %v604 = vld [vmem:[#allocation6 + $0x90] sm:$0xf]
        %v605 = vld [vmem:[#allocation6 + $0x94] sm:$0xf]
        %v606 = vld [vmem:[#allocation6 + $0x98] sm:$0xf]
        %v607 = vld [vmem:[#allocation6 + $0x9c] sm:$0xf]
        %v608 = vld [vmem:[#allocation6 + $0xa0] sm:$0xf]
        %v609 = vld [vmem:[#allocation6 + $0xa4] sm:$0xf]
        %v610 = vld [vmem:[#allocation6 + $0xa8] sm:$0xf]
        %v611 = vld [vmem:[#allocation6 + $0xac] sm:$0xf]
        %v612 = vld [vmem:[#allocation6 + $0xb0] sm:$0xf]
        %v613 = vld [vmem:[#allocation6 + $0xb4] sm:$0xf]
        %v614 = vld [vmem:[#allocation6 + $0xb8] sm:$0xf]
        %v615 = vld [vmem:[#allocation6 + $0xbc] sm:$0xf]
        %v616 = vld [vmem:[%s2] sm:$0x1]
        %v617 = vlaneseq
        %v618 = vshrl.u32 %v617, 7
        %v619 = vadd.s32 %v618, 8
        %v620 = vadd.s32 %v618, 16
        %v621 = vadd.s32 %v618, 24
        %v622 = vand.u32 %v618, 7
        %v623 = vand.u32 %v619, 7
        %v624 = vand.u32 %v620, 7
        %v625 = vand.u32 %v621, 7
        %vm626 = vcmp.eq.s32.totalorder %v622, 0
        %vm627 = vcmp.eq.s32.totalorder %v623, 0
        %vm628 = vcmp.eq.s32.totalorder %v624, 0
        %vm629 = vcmp.eq.s32.totalorder %v625, 0
        %vm630 = vcmp.eq.s32.totalorder %v622, 7
        %vm631 = vcmp.eq.s32.totalorder %v623, 7
        %vm632 = vcmp.eq.s32.totalorder %v624, 7
        %vm633 = vcmp.eq.s32.totalorder %v625, 7
        %v638 = vunpack.c.l.b16 %v564
        %v639 = vunpack.c.l.b16 %v565
        %v640 = vunpack.c.l.b16 %v566
        %v641 = vunpack.c.l.b16 %v567
        %v642 = vpack.c.b16 %v639, %v638
        %v643 = vpack.c.b16 %v641, %v640
        %vm644 = vsmask.f32 256
        %v646 = vshrl.u32 %v642, 16
        %v648 = vrot.slane %v646, 7
        %v649 = vshll.u32 %v642, 16
        %v651 = vor.u32 %v648, %v649
        %v653 = vshrl.u32 %v643, 16
        %v655 = vrot.slane %v653, 7
        %v656 = vshll.u32 %v643, 16
        %v658 = vor.u32 %v655, %v656
        %v659 = vsel %vm644, %v648, %v658
        %vm662 = vcmask 1040384
        %vm663 = vmand %vm662, %vm644
        %v664 = vsel %vm663, 0, %v651
        %vm665 = vmpackc.low %vm626, %vm626
        %vm666 = vmpackc.low %vm627, %vm627
        %vm667 = vmpackc.low %vm628, %vm628
        %vm668 = vmpackc.low %vm629, %vm629
        %v669 = vsel %vm665, 65537, 0
        %v670 = vsel %vm666, 65537, 0
        %v671 = vsel %vm667, 65537, 0
        %v672 = vsel %vm668, 65537, 0
        %v673 = vunpack.c.l.b16 %v669
        %v674 = vunpack.c.l.b16 %v670
        %v675 = vunpack.c.l.b16 %v671
        %v676 = vunpack.c.l.b16 %v672
        %v677 = vpack.c.b16 %v674, %v673
        %v678 = vpack.c.b16 %v676, %v675
        %vm679 = vcmp.ne.s16.totalorder %v677, 0
        %vm680 = vcmp.ne.s16.totalorder %v678, 0
        %v681 = vsel %vm679, 0, %v664
        %v682 = vsel %vm680, 0, %v659
        %vm683 = vsmask.f32 7424
        %v684 = vrot.slane %v649, 1
        %v685 = vor.u32 %v646, %v684
        %v686 = vrot.slane %v656, 1
        %v687 = vsel %vm683, %v685, %v686
        %v688 = vor.u32 %v653, %v686
        %vm691 = vcmask 1047552
        %vm692 = vmand %vm691, %vm683
        %v693 = vsel %vm692, %v688, 0
        %vm694 = vmpackc.low %vm630, %vm630
        %vm695 = vmpackc.low %vm631, %vm631
        %vm696 = vmpackc.low %vm632, %vm632
        %vm697 = vmpackc.low %vm633, %vm633
        %v698 = vsel %vm694, 65537, 0
        %v699 = vsel %vm695, 65537, 0
        %v700 = vsel %vm696, 65537, 0
        %v701 = vsel %vm697, 65537, 0
        %v702 = vunpack.c.l.b16 %v698
        %v703 = vunpack.c.l.b16 %v699
        %v704 = vunpack.c.l.b16 %v700
        %v705 = vunpack.c.l.b16 %v701
        %v706 = vpack.c.b16 %v703, %v702
        %v707 = vpack.c.b16 %v705, %v704
        %vm708 = vcmp.ne.s16.totalorder %v706, 0
        %vm709 = vcmp.ne.s16.totalorder %v707, 0
        %v710 = vsel %vm708, 0, %v687
        %v711 = vsel %vm709, 0, %v693
        %v715 = vlaneseq
        %v716 = vshrl.u32 %v715, 7
        %v717 = vsub.s32 0, %v716
        %v718 = vrot.slane %v616, %v717
        %v768 = vunpack.c.l.b16 %v568
        %v769 = vunpack.c.l.b16 %v569
        %v770 = vunpack.c.l.b16 %v570
        %v771 = vunpack.c.l.b16 %v571
        %v772 = vunpack.c.l.b16 %v572
        %v773 = vunpack.c.l.b16 %v573
        %v774 = vunpack.c.l.b16 %v574
        %v775 = vunpack.c.l.b16 %v575
        %v776 = vunpack.c.l.b16 %v576
        %v777 = vunpack.c.l.b16 %v577
        %v778 = vunpack.c.l.b16 %v578
        %v779 = vunpack.c.l.b16 %v579
        %v780 = vunpack.c.l.b16 %v580
        %v781 = vunpack.c.l.b16 %v581
        %v782 = vunpack.c.l.b16 %v582
        %v783 = vunpack.c.l.b16 %v583
        %v784 = vunpack.c.l.b16 %v584
        %v785 = vunpack.c.l.b16 %v585
        %v786 = vunpack.c.l.b16 %v586
        %v787 = vunpack.c.l.b16 %v587
        %v788 = vunpack.c.l.b16 %v588
        %v789 = vunpack.c.l.b16 %v589
        %v790 = vunpack.c.l.b16 %v590
        %v791 = vunpack.c.l.b16 %v591
        %v792 = vunpack.c.l.b16 %v592
        %v793 = vunpack.c.l.b16 %v593
        %v794 = vunpack.c.l.b16 %v594
        %v795 = vunpack.c.l.b16 %v595
        %v796 = vunpack.c.l.b16 %v596
        %v797 = vunpack.c.l.b16 %v597
        %v798 = vunpack.c.l.b16 %v598
        %v799 = vunpack.c.l.b16 %v599
        %v800 = vunpack.c.l.b16 %v600
        %v801 = vunpack.c.l.b16 %v601
        %v802 = vunpack.c.l.b16 %v602
        %v803 = vunpack.c.l.b16 %v603
        %v804 = vunpack.c.l.b16 %v604
        %v805 = vunpack.c.l.b16 %v605
        %v806 = vunpack.c.l.b16 %v606
        %v807 = vunpack.c.l.b16 %v607
        %v808 = vunpack.c.l.b16 %v608
        %v809 = vunpack.c.l.b16 %v609
        %v810 = vunpack.c.l.b16 %v610
        %v811 = vunpack.c.l.b16 %v611
        %v812 = vunpack.c.l.b16 %v612
        %v813 = vunpack.c.l.b16 %v613
        %v814 = vunpack.c.l.b16 %v614
        %v815 = vunpack.c.l.b16 %v615
        %v816 = vpack.c.b16 %v769, %v768
        %v817 = vpack.c.b16 %v771, %v770
        %v818 = vpack.c.b16 %v773, %v772
        %v819 = vpack.c.b16 %v775, %v774
        %v820 = vpack.c.b16 %v777, %v776
        %v821 = vpack.c.b16 %v779, %v778
        %v822 = vpack.c.b16 %v781, %v780
        %v823 = vpack.c.b16 %v783, %v782
        %v824 = vpack.c.b16 %v785, %v784
        %v825 = vpack.c.b16 %v787, %v786
        %v826 = vpack.c.b16 %v789, %v788
        %v827 = vpack.c.b16 %v791, %v790
        %v828 = vpack.c.b16 %v793, %v792
        %v829 = vpack.c.b16 %v795, %v794
        %v830 = vpack.c.b16 %v797, %v796
        %v831 = vpack.c.b16 %v799, %v798
        %v832 = vpack.c.b16 %v801, %v800
        %v833 = vpack.c.b16 %v803, %v802
        %v834 = vpack.c.b16 %v805, %v804
        %v835 = vpack.c.b16 %v807, %v806
        %v836 = vpack.c.b16 %v809, %v808
        %v837 = vpack.c.b16 %v811, %v810
        %v838 = vpack.c.b16 %v813, %v812
        %v839 = vpack.c.b16 %v815, %v814
        %864 = vmatprep.subr.bf16.mxu0 0
        %865 = vmatpush1.bf16.msra.mxu0 %v823
        %866 = vmatprep.subr.bf16.mxu0 0
        %867 = vmatpush1.bf16.msra.mxu0 %v822
        %868 = vmatprep.subr.bf16.mxu0 0
        %869 = vmatpush1.bf16.msra.mxu0 %v821
        %870 = vmatprep.subr.bf16.mxu0 0
        %871 = vmatpush1.bf16.msra.mxu0 %v820
        %872 = vmatprep.subr.bf16.mxu0 0
        %873 = vmatpush1.bf16.msra.mxu0 %v819
        %874 = vmatprep.subr.bf16.mxu0 0
        %875 = vmatpush1.bf16.msra.mxu0 %v818
        %876 = vmatprep.subr.bf16.mxu0 0
        %877 = vmatpush1.bf16.msra.mxu0 %v817
        %878 = vmatprep.subr.bf16.mxu0 0
        %879 = vmatpush1.bf16.msra.mxu0 %v816
        %880 = vmatprep.subr.bf16.mxu0 0
        %881 = vmatpush2.bf16.msra.mxu0 %v831
        %882 = vmatprep.subr.bf16.mxu0 0
        %883 = vmatpush2.bf16.msra.mxu0 %v830
        %884 = vmatprep.subr.bf16.mxu0 0
        %885 = vmatpush2.bf16.msra.mxu0 %v829
        %886 = vmatprep.subr.bf16.mxu0 0
        %887 = vmatpush2.bf16.msra.mxu0 %v828
        %888 = vmatprep.subr.bf16.mxu0 0
        %889 = vmatpush2.bf16.msra.mxu0 %v827
        %890 = vmatprep.subr.bf16.mxu0 0
        %891 = vmatpush2.bf16.msra.mxu0 %v826
        %892 = vmatprep.subr.bf16.mxu0 0
        %893 = vmatpush2.bf16.msra.mxu0 %v825
        %894 = vmatprep.subr.bf16.mxu0 0
        %895 = vmatpush2.bf16.msra.mxu0 %v824
        %896 = vmatprep.mubr.bf16.mxu0 %v642
        %897 = vmatmul.mubr.bf16.gmra.mxu0 %v681
        %v898 = vpop.f32.mrf.mxu0
        %v899 = vadd.f32 %v718, %v898
        %v900 = vpop.f32.mrf.mxu0
        %v901 = vpop.f32.mrf.mxu0
        %v902 = vadd.f32 %v718, %v901
        %v903 = vpop.f32.mrf.mxu0
        %904 = vmatprep.mubr.bf16.mxu0 %v643
        %905 = vmatmul.mubr.bf16.gmra.mxu0 %v682
        %v906 = vpop.f32.mrf.mxu0
        %v907 = vadd.f32 %v718, %v906
        %v908 = vpop.f32.mrf.mxu0
        %v909 = vpop.f32.mrf.mxu0
        %v910 = vadd.f32 %v718, %v909
        %v911 = vpop.f32.mrf.mxu0
        %912 = vdwg.mxu0
        %913 = vmatprep.subr.bf16.mxu0 0
        %914 = vmatpush1.bf16.msra.mxu0 %v839
        %915 = vmatprep.subr.bf16.mxu0 0
        %916 = vmatpush1.bf16.msra.mxu0 %v838
        %917 = vmatprep.subr.bf16.mxu0 0
        %918 = vmatpush1.bf16.msra.mxu0 %v837
        %919 = vmatprep.subr.bf16.mxu0 0
        %920 = vmatpush1.bf16.msra.mxu0 %v836
        %921 = vmatprep.subr.bf16.mxu0 0
        %922 = vmatpush1.bf16.msra.mxu0 %v835
        %923 = vmatprep.subr.bf16.mxu0 0
        %924 = vmatpush1.bf16.msra.mxu0 %v834
        %925 = vmatprep.subr.bf16.mxu0 0
        %926 = vmatpush1.bf16.msra.mxu0 %v833
        %927 = vmatprep.subr.bf16.mxu0 0
        %928 = vmatpush1.bf16.msra.mxu0 %v832
        %929 = vmatprep.subr.bf16.mxu0 0
        %930 = vmatpush2.bf16.msra.mxu0 0
        %931 = vmatprep.subr.bf16.mxu0 0
        %932 = vmatpush2.bf16.msra.mxu0 0
        %933 = vmatprep.subr.bf16.mxu0 0
        %934 = vmatpush2.bf16.msra.mxu0 0
        %935 = vmatprep.subr.bf16.mxu0 0
        %936 = vmatpush2.bf16.msra.mxu0 0
        %937 = vmatprep.subr.bf16.mxu0 0
        %938 = vmatpush2.bf16.msra.mxu0 0
        %939 = vmatprep.subr.bf16.mxu0 0
        %940 = vmatpush2.bf16.msra.mxu0 0
        %941 = vmatprep.subr.bf16.mxu0 0
        %942 = vmatpush2.bf16.msra.mxu0 0
        %943 = vmatprep.subr.bf16.mxu0 0
        %944 = vmatpush2.bf16.msra.mxu0 0
        %945 = vmatprep.mubr.bf16.mxu0 0
        %946 = vmatmul.mubr.bf16.gmra.mxu0 %v710
        %v947 = vpop.f32.mrf.mxu0
        %v948 = vadd.f32 %v899, %v947
        %v949 = vpop.f32.mrf.mxu0
        %v950 = vpop.f32.mrf.mxu0
        %v951 = vadd.f32 %v902, %v950
        %v952 = vpop.f32.mrf.mxu0
        %953 = vmatprep.mubr.bf16.mxu0 0
        %954 = vmatmul.mubr.bf16.gmra.mxu0 %v711
        %v955 = vpop.f32.mrf.mxu0
        %v956 = vadd.f32 %v907, %v955
        %v957 = vpop.f32.mrf.mxu0
        %v958 = vpop.f32.mrf.mxu0
        %v959 = vadd.f32 %v910, %v958
        %v960 = vpop.f32.mrf.mxu0
        %961 = vdwg.mxu0
        %v962 = vld [vmem:[#allocation8] sm:$0xf]
        %v963 = vld [vmem:[#allocation8 + $0x4] sm:$0xf]
        %v964 = vld [vmem:[#allocation8 + $0x8] sm:$0xf]
        %v965 = vld [vmem:[#allocation8 + $0xc] sm:$0xf]
        %v966 = vld [vmem:[#allocation8 + $0x10] sm:$0xf]
        %v967 = vld [vmem:[#allocation8 + $0x14] sm:$0xf]
        %v968 = vld [vmem:[#allocation8 + $0x18] sm:$0xf]
        %v969 = vld [vmem:[#allocation8 + $0x1c] sm:$0xf]
        %v970 = vld [vmem:[#allocation8 + $0x20] sm:$0xf]
        %v971 = vld [vmem:[#allocation8 + $0x24] sm:$0xf]
        %v972 = vld [vmem:[#allocation8 + $0x28] sm:$0xf]
        %v973 = vld [vmem:[#allocation8 + $0x2c] sm:$0xf]
        %v974 = vld [vmem:[#allocation8 + $0x30] sm:$0xf]
        %v975 = vld [vmem:[#allocation8 + $0x34] sm:$0xf]
        %v976 = vld [vmem:[#allocation8 + $0x38] sm:$0xf]
        %v977 = vld [vmem:[#allocation8 + $0x3c] sm:$0xf]
        %v978 = vld [vmem:[#allocation8 + $0x40] sm:$0xf]
        %v979 = vld [vmem:[#allocation8 + $0x44] sm:$0xf]
        %v980 = vld [vmem:[#allocation8 + $0x48] sm:$0xf]
        %v981 = vld [vmem:[#allocation8 + $0x4c] sm:$0xf]
        %v982 = vld [vmem:[#allocation8 + $0x50] sm:$0xf]
        %v983 = vld [vmem:[#allocation8 + $0x54] sm:$0xf]
        %v984 = vld [vmem:[#allocation8 + $0x58] sm:$0xf]
        %v985 = vld [vmem:[#allocation8 + $0x5c] sm:$0xf]
        %v986 = vld [vmem:[#allocation8 + $0x60] sm:$0xf]
        %v987 = vld [vmem:[#allocation8 + $0x64] sm:$0xf]
        %v988 = vld [vmem:[#allocation8 + $0x68] sm:$0xf]
        %v989 = vld [vmem:[#allocation8 + $0x6c] sm:$0xf]
        %v990 = vld [vmem:[#allocation8 + $0x70] sm:$0xf]
        %v991 = vld [vmem:[#allocation8 + $0x74] sm:$0xf]
        %v992 = vld [vmem:[#allocation8 + $0x78] sm:$0xf]
        %v993 = vld [vmem:[#allocation8 + $0x7c] sm:$0xf]
        %v994 = vld [vmem:[#allocation8 + $0x80] sm:$0xf]
        %v995 = vld [vmem:[#allocation8 + $0x84] sm:$0xf]
        %v996 = vld [vmem:[#allocation8 + $0x88] sm:$0xf]
        %v997 = vld [vmem:[#allocation8 + $0x8c] sm:$0xf]
        %v998 = vld [vmem:[#allocation8 + $0x90] sm:$0xf]
        %v999 = vld [vmem:[#allocation8 + $0x94] sm:$0xf]
        %v1000 = vld [vmem:[#allocation8 + $0x98] sm:$0xf]
        %v1001 = vld [vmem:[#allocation8 + $0x9c] sm:$0xf]
        %v1002 = vld [vmem:[#allocation8 + $0xa0] sm:$0xf]
        %v1003 = vld [vmem:[#allocation8 + $0xa4] sm:$0xf]
        %v1004 = vld [vmem:[#allocation8 + $0xa8] sm:$0xf]
        %v1005 = vld [vmem:[#allocation8 + $0xac] sm:$0xf]
        %v1006 = vld [vmem:[#allocation8 + $0xb0] sm:$0xf]
        %v1007 = vld [vmem:[#allocation8 + $0xb4] sm:$0xf]
        %v1008 = vld [vmem:[#allocation8 + $0xb8] sm:$0xf]
        %v1009 = vld [vmem:[#allocation8 + $0xbc] sm:$0xf]
        %v1010 = vld [vmem:[#allocation9] sm:$0x1]
        %v1011 = vld [vmem:[#allocation11] sm:$0xf]
        %v1012 = vld [vmem:[#allocation11 + $0x4] sm:$0xf]
        %v1013 = vld [vmem:[#allocation11 + $0x8] sm:$0xf]
        %v1014 = vld [vmem:[#allocation11 + $0xc] sm:$0xf]
        %v1015 = vld [vmem:[#allocation11 + $0x10] sm:$0xf]
        %v1016 = vld [vmem:[#allocation11 + $0x14] sm:$0xf]
        %v1017 = vld [vmem:[#allocation11 + $0x18] sm:$0xf]
        %v1018 = vld [vmem:[#allocation11 + $0x1c] sm:$0xf]
        %v1019 = vld [vmem:[#allocation11 + $0x20] sm:$0xf]
        %v1020 = vld [vmem:[#allocation11 + $0x24] sm:$0xf]
        %v1021 = vld [vmem:[#allocation11 + $0x28] sm:$0xf]
        %v1022 = vld [vmem:[#allocation11 + $0x2c] sm:$0xf]
        %v1023 = vld [vmem:[#allocation11 + $0x30] sm:$0xf]
        %v1024 = vld [vmem:[#allocation11 + $0x34] sm:$0xf]
        %v1025 = vld [vmem:[#allocation11 + $0x38] sm:$0xf]
        %v1026 = vld [vmem:[#allocation11 + $0x3c] sm:$0xf]
        %v1027 = vld [vmem:[#allocation11 + $0x40] sm:$0xf]
        %v1028 = vld [vmem:[#allocation11 + $0x44] sm:$0xf]
        %v1029 = vld [vmem:[#allocation11 + $0x48] sm:$0xf]
        %v1030 = vld [vmem:[#allocation11 + $0x4c] sm:$0xf]
        %v1031 = vld [vmem:[#allocation11 + $0x50] sm:$0xf]
        %v1032 = vld [vmem:[#allocation11 + $0x54] sm:$0xf]
        %v1033 = vld [vmem:[#allocation11 + $0x58] sm:$0xf]
        %v1034 = vld [vmem:[#allocation11 + $0x5c] sm:$0xf]
        %v1035 = vld [vmem:[#allocation11 + $0x60] sm:$0xf]
        %v1036 = vld [vmem:[#allocation11 + $0x64] sm:$0xf]
        %v1037 = vld [vmem:[#allocation11 + $0x68] sm:$0xf]
        %v1038 = vld [vmem:[#allocation11 + $0x6c] sm:$0xf]
        %v1039 = vld [vmem:[#allocation11 + $0x70] sm:$0xf]
        %v1040 = vld [vmem:[#allocation11 + $0x74] sm:$0xf]
        %v1041 = vld [vmem:[#allocation11 + $0x78] sm:$0xf]
        %v1042 = vld [vmem:[#allocation11 + $0x7c] sm:$0xf]
        %v1043 = vld [vmem:[#allocation11 + $0x80] sm:$0xf]
        %v1044 = vld [vmem:[#allocation11 + $0x84] sm:$0xf]
        %v1045 = vld [vmem:[#allocation11 + $0x88] sm:$0xf]
        %v1046 = vld [vmem:[#allocation11 + $0x8c] sm:$0xf]
        %v1047 = vld [vmem:[#allocation11 + $0x90] sm:$0xf]
        %v1048 = vld [vmem:[#allocation11 + $0x94] sm:$0xf]
        %v1049 = vld [vmem:[#allocation11 + $0x98] sm:$0xf]
        %v1050 = vld [vmem:[#allocation11 + $0x9c] sm:$0xf]
        %v1051 = vld [vmem:[#allocation11 + $0xa0] sm:$0xf]
        %v1052 = vld [vmem:[#allocation11 + $0xa4] sm:$0xf]
        %v1053 = vld [vmem:[#allocation11 + $0xa8] sm:$0xf]
        %v1054 = vld [vmem:[#allocation11 + $0xac] sm:$0xf]
        %v1055 = vld [vmem:[#allocation11 + $0xb0] sm:$0xf]
        %v1056 = vld [vmem:[#allocation11 + $0xb4] sm:$0xf]
        %v1057 = vld [vmem:[#allocation11 + $0xb8] sm:$0xf]
        %v1058 = vld [vmem:[#allocation11 + $0xbc] sm:$0xf]
        %v1059 = vld [vmem:[%s6] sm:$0x1]
        %v1060 = vmax.f32 %v948, 0.0
        %v1061 = vmax.f32 %v951, 0.0
        %v1062 = vmax.f32 %v956, 0.0
        %v1063 = vmax.f32 %v959, 0.0
        %v1064 = vpack.c.bf16 %v1061, %v1060
        %v1065 = vpack.c.bf16 %v1063, %v1062
        %v1067 = vshrl.u32 %v1064, 16
        %v1069 = vrot.slane %v1067, 7
        %v1070 = vshll.u32 %v1064, 16
        %v1072 = vor.u32 %v1069, %v1070
        %v1074 = vshrl.u32 %v1065, 16
        %v1076 = vrot.slane %v1074, 7
        %v1077 = vshll.u32 %v1065, 16
        %v1079 = vor.u32 %v1076, %v1077
        %v1080 = vsel %vm644, %v1069, %v1079
        %v1083 = vsel %vm663, 0, %v1072
        %v1084 = vsel %vm679, 0, %v1083
        %v1085 = vsel %vm680, 0, %v1080
        %v1086 = vrot.slane %v1070, 1
        %v1087 = vor.u32 %v1067, %v1086
        %v1088 = vrot.slane %v1077, 1
        %v1089 = vsel %vm683, %v1087, %v1088
        %v1090 = vor.u32 %v1074, %v1088
        %v1093 = vsel %vm692, %v1090, 0
        %v1094 = vsel %vm708, 0, %v1089
        %v1095 = vsel %vm709, 0, %v1093
        %v1097 = vlaneseq
        %v1098 = vshrl.u32 %v1097, 7
        %v1099 = vsub.s32 0, %v1098
        %v1100 = vrot.slane %v1010, %v1099
        %v1150 = vunpack.c.l.b16 %v962
        %v1151 = vunpack.c.l.b16 %v963
        %v1152 = vunpack.c.l.b16 %v964
        %v1153 = vunpack.c.l.b16 %v965
        %v1154 = vunpack.c.l.b16 %v966
        %v1155 = vunpack.c.l.b16 %v967
        %v1156 = vunpack.c.l.b16 %v968
        %v1157 = vunpack.c.l.b16 %v969
        %v1158 = vunpack.c.l.b16 %v970
        %v1159 = vunpack.c.l.b16 %v971
        %v1160 = vunpack.c.l.b16 %v972
        %v1161 = vunpack.c.l.b16 %v973
        %v1162 = vunpack.c.l.b16 %v974
        %v1163 = vunpack.c.l.b16 %v975
        %v1164 = vunpack.c.l.b16 %v976
        %v1165 = vunpack.c.l.b16 %v977
        %v1166 = vunpack.c.l.b16 %v978
        %v1167 = vunpack.c.l.b16 %v979
        %v1168 = vunpack.c.l.b16 %v980
        %v1169 = vunpack.c.l.b16 %v981
        %v1170 = vunpack.c.l.b16 %v982
        %v1171 = vunpack.c.l.b16 %v983
        %v1172 = vunpack.c.l.b16 %v984
        %v1173 = vunpack.c.l.b16 %v985
        %v1174 = vunpack.c.l.b16 %v986
        %v1175 = vunpack.c.l.b16 %v987
        %v1176 = vunpack.c.l.b16 %v988
        %v1177 = vunpack.c.l.b16 %v989
        %v1178 = vunpack.c.l.b16 %v990
        %v1179 = vunpack.c.l.b16 %v991
        %v1180 = vunpack.c.l.b16 %v992
        %v1181 = vunpack.c.l.b16 %v993
        %v1182 = vunpack.c.l.b16 %v994
        %v1183 = vunpack.c.l.b16 %v995
        %v1184 = vunpack.c.l.b16 %v996
        %v1185 = vunpack.c.l.b16 %v997
        %v1186 = vunpack.c.l.b16 %v998
        %v1187 = vunpack.c.l.b16 %v999
        %v1188 = vunpack.c.l.b16 %v1000
        %v1189 = vunpack.c.l.b16 %v1001
        %v1190 = vunpack.c.l.b16 %v1002
        %v1191 = vunpack.c.l.b16 %v1003
        %v1192 = vunpack.c.l.b16 %v1004
        %v1193 = vunpack.c.l.b16 %v1005
        %v1194 = vunpack.c.l.b16 %v1006
        %v1195 = vunpack.c.l.b16 %v1007
        %v1196 = vunpack.c.l.b16 %v1008
        %v1197 = vunpack.c.l.b16 %v1009
        %v1198 = vpack.c.b16 %v1151, %v1150
        %v1199 = vpack.c.b16 %v1153, %v1152
        %v1200 = vpack.c.b16 %v1155, %v1154
        %v1201 = vpack.c.b16 %v1157, %v1156
        %v1202 = vpack.c.b16 %v1159, %v1158
        %v1203 = vpack.c.b16 %v1161, %v1160
        %v1204 = vpack.c.b16 %v1163, %v1162
        %v1205 = vpack.c.b16 %v1165, %v1164
        %v1206 = vpack.c.b16 %v1167, %v1166
        %v1207 = vpack.c.b16 %v1169, %v1168
        %v1208 = vpack.c.b16 %v1171, %v1170
        %v1209 = vpack.c.b16 %v1173, %v1172
        %v1210 = vpack.c.b16 %v1175, %v1174
        %v1211 = vpack.c.b16 %v1177, %v1176
        %v1212 = vpack.c.b16 %v1179, %v1178
        %v1213 = vpack.c.b16 %v1181, %v1180
        %v1214 = vpack.c.b16 %v1183, %v1182
        %v1215 = vpack.c.b16 %v1185, %v1184
        %v1216 = vpack.c.b16 %v1187, %v1186
        %v1217 = vpack.c.b16 %v1189, %v1188
        %v1218 = vpack.c.b16 %v1191, %v1190
        %v1219 = vpack.c.b16 %v1193, %v1192
        %v1220 = vpack.c.b16 %v1195, %v1194
        %v1221 = vpack.c.b16 %v1197, %v1196
        %1246 = vmatprep.subr.bf16.mxu0 0
        %1247 = vmatpush1.bf16.msra.mxu0 %v1205
        %1248 = vmatprep.subr.bf16.mxu0 0
        %1249 = vmatpush1.bf16.msra.mxu0 %v1204
        %1250 = vmatprep.subr.bf16.mxu0 0
        %1251 = vmatpush1.bf16.msra.mxu0 %v1203
        %1252 = vmatprep.subr.bf16.mxu0 0
        %1253 = vmatpush1.bf16.msra.mxu0 %v1202
        %1254 = vmatprep.subr.bf16.mxu0 0
        %1255 = vmatpush1.bf16.msra.mxu0 %v1201
        %1256 = vmatprep.subr.bf16.mxu0 0
        %1257 = vmatpush1.bf16.msra.mxu0 %v1200
        %1258 = vmatprep.subr.bf16.mxu0 0
        %1259 = vmatpush1.bf16.msra.mxu0 %v1199
        %1260 = vmatprep.subr.bf16.mxu0 0
        %1261 = vmatpush1.bf16.msra.mxu0 %v1198
        %1262 = vmatprep.subr.bf16.mxu0 0
        %1263 = vmatpush2.bf16.msra.mxu0 %v1213
        %1264 = vmatprep.subr.bf16.mxu0 0
        %1265 = vmatpush2.bf16.msra.mxu0 %v1212
        %1266 = vmatprep.subr.bf16.mxu0 0
        %1267 = vmatpush2.bf16.msra.mxu0 %v1211
        %1268 = vmatprep.subr.bf16.mxu0 0
        %1269 = vmatpush2.bf16.msra.mxu0 %v1210
        %1270 = vmatprep.subr.bf16.mxu0 0
        %1271 = vmatpush2.bf16.msra.mxu0 %v1209
        %1272 = vmatprep.subr.bf16.mxu0 0
        %1273 = vmatpush2.bf16.msra.mxu0 %v1208
        %1274 = vmatprep.subr.bf16.mxu0 0
        %1275 = vmatpush2.bf16.msra.mxu0 %v1207
        %1276 = vmatprep.subr.bf16.mxu0 0
        %1277 = vmatpush2.bf16.msra.mxu0 %v1206
        %1278 = vmatprep.mubr.bf16.mxu0 %v1064
        %1279 = vmatmul.mubr.bf16.gmra.mxu0 %v1084
        %v1280 = vpop.f32.mrf.mxu0
        %v1281 = vadd.f32 %v1100, %v1280
        %v1282 = vpop.f32.mrf.mxu0
        %v1283 = vpop.f32.mrf.mxu0
        %v1284 = vadd.f32 %v1100, %v1283
        %v1285 = vpop.f32.mrf.mxu0
        %1286 = vmatprep.mubr.bf16.mxu0 %v1065
        %1287 = vmatmul.mubr.bf16.gmra.mxu0 %v1085
        %v1288 = vpop.f32.mrf.mxu0
        %v1289 = vadd.f32 %v1100, %v1288
        %v1290 = vpop.f32.mrf.mxu0
        %v1291 = vpop.f32.mrf.mxu0
        %v1292 = vadd.f32 %v1100, %v1291
        %v1293 = vpop.f32.mrf.mxu0
        %1294 = vdwg.mxu0
        %1295 = vmatprep.subr.bf16.mxu0 0
        %1296 = vmatpush1.bf16.msra.mxu0 %v1221
        %1297 = vmatprep.subr.bf16.mxu0 0
        %1298 = vmatpush1.bf16.msra.mxu0 %v1220
        %1299 = vmatprep.subr.bf16.mxu0 0
        %1300 = vmatpush1.bf16.msra.mxu0 %v1219
        %1301 = vmatprep.subr.bf16.mxu0 0
        %1302 = vmatpush1.bf16.msra.mxu0 %v1218
        %1303 = vmatprep.subr.bf16.mxu0 0
        %1304 = vmatpush1.bf16.msra.mxu0 %v1217
        %1305 = vmatprep.subr.bf16.mxu0 0
        %1306 = vmatpush1.bf16.msra.mxu0 %v1216
        %1307 = vmatprep.subr.bf16.mxu0 0
        %1308 = vmatpush1.bf16.msra.mxu0 %v1215
        %1309 = vmatprep.subr.bf16.mxu0 0
        %1310 = vmatpush1.bf16.msra.mxu0 %v1214
        %1311 = vmatprep.subr.bf16.mxu0 0
        %1312 = vmatpush2.bf16.msra.mxu0 0
        %1313 = vmatprep.subr.bf16.mxu0 0
        %1314 = vmatpush2.bf16.msra.mxu0 0
        %1315 = vmatprep.subr.bf16.mxu0 0
        %1316 = vmatpush2.bf16.msra.mxu0 0
        %1317 = vmatprep.subr.bf16.mxu0 0
        %1318 = vmatpush2.bf16.msra.mxu0 0
        %1319 = vmatprep.subr.bf16.mxu0 0
        %1320 = vmatpush2.bf16.msra.mxu0 0
        %1321 = vmatprep.subr.bf16.mxu0 0
        %1322 = vmatpush2.bf16.msra.mxu0 0
        %1323 = vmatprep.subr.bf16.mxu0 0
        %1324 = vmatpush2.bf16.msra.mxu0 0
        %1325 = vmatprep.subr.bf16.mxu0 0
        %1326 = vmatpush2.bf16.msra.mxu0 0
        %1327 = vmatprep.mubr.bf16.mxu0 0
        %1328 = vmatmul.mubr.bf16.gmra.mxu0 %v1094
        %v1329 = vpop.f32.mrf.mxu0
        %v1330 = vadd.f32 %v1281, %v1329
        %v1331 = vpop.f32.mrf.mxu0
        %v1332 = vpop.f32.mrf.mxu0
        %v1333 = vadd.f32 %v1284, %v1332
        %v1334 = vpop.f32.mrf.mxu0
        %1335 = vmatprep.mubr.bf16.mxu0 0
        %1336 = vmatmul.mubr.bf16.gmra.mxu0 %v1095
        %v1337 = vpop.f32.mrf.mxu0
        %v1338 = vadd.f32 %v1289, %v1337
        %v1339 = vpop.f32.mrf.mxu0
        %v1340 = vpop.f32.mrf.mxu0
        %v1341 = vadd.f32 %v1292, %v1340
        %v1342 = vpop.f32.mrf.mxu0
        %1343 = vdwg.mxu0
        %v1344 = vmax.f32 %v1330, 0.0
        %v1345 = vmax.f32 %v1333, 0.0
        %v1346 = vmax.f32 %v1338, 0.0
        %v1347 = vmax.f32 %v1341, 0.0
        %v1348 = vpack.c.bf16 %v1345, %v1344
        %v1349 = vpack.c.bf16 %v1347, %v1346
        %v1351 = vshrl.u32 %v1348, 16
        %v1353 = vrot.slane %v1351, 7
        %v1354 = vshll.u32 %v1348, 16
        %v1356 = vor.u32 %v1353, %v1354
        %v1358 = vshrl.u32 %v1349, 16
        %v1360 = vrot.slane %v1358, 7
        %v1361 = vshll.u32 %v1349, 16
        %v1363 = vor.u32 %v1360, %v1361
        %v1364 = vsel %vm644, %v1353, %v1363
        %v1367 = vsel %vm663, 0, %v1356
        %v1368 = vsel %vm679, 0, %v1367
        %v1369 = vsel %vm680, 0, %v1364
        %v1370 = vrot.slane %v1354, 1
        %v1371 = vor.u32 %v1351, %v1370
        %v1372 = vrot.slane %v1361, 1
        %v1373 = vsel %vm683, %v1371, %v1372
        %v1374 = vor.u32 %v1358, %v1372
        %v1377 = vsel %vm692, %v1374, 0
        %v1378 = vsel %vm708, 0, %v1373
        %v1379 = vsel %vm709, 0, %v1377
        %v1381 = vlaneseq
        %v1382 = vshrl.u32 %v1381, 7
        %v1383 = vsub.s32 0, %v1382
        %v1384 = vrot.slane %v1059, %v1383
        %v1434 = vunpack.c.l.b16 %v1011
        %v1435 = vunpack.c.l.b16 %v1012
        %v1436 = vunpack.c.l.b16 %v1013
        %v1437 = vunpack.c.l.b16 %v1014
        %v1438 = vunpack.c.l.b16 %v1015
        %v1439 = vunpack.c.l.b16 %v1016
        %v1440 = vunpack.c.l.b16 %v1017
        %v1441 = vunpack.c.l.b16 %v1018
        %v1442 = vunpack.c.l.b16 %v1019
        %v1443 = vunpack.c.l.b16 %v1020
        %v1444 = vunpack.c.l.b16 %v1021
        %v1445 = vunpack.c.l.b16 %v1022
        %v1446 = vunpack.c.l.b16 %v1023
        %v1447 = vunpack.c.l.b16 %v1024
        %v1448 = vunpack.c.l.b16 %v1025
        %v1449 = vunpack.c.l.b16 %v1026
        %v1450 = vunpack.c.l.b16 %v1027
        %v1451 = vunpack.c.l.b16 %v1028
        %v1452 = vunpack.c.l.b16 %v1029
        %v1453 = vunpack.c.l.b16 %v1030
        %v1454 = vunpack.c.l.b16 %v1031
        %v1455 = vunpack.c.l.b16 %v1032
        %v1456 = vunpack.c.l.b16 %v1033
        %v1457 = vunpack.c.l.b16 %v1034
        %v1458 = vunpack.c.l.b16 %v1035
        %v1459 = vunpack.c.l.b16 %v1036
        %v1460 = vunpack.c.l.b16 %v1037
        %v1461 = vunpack.c.l.b16 %v1038
        %v1462 = vunpack.c.l.b16 %v1039
        %v1463 = vunpack.c.l.b16 %v1040
        %v1464 = vunpack.c.l.b16 %v1041
        %v1465 = vunpack.c.l.b16 %v1042
        %v1466 = vunpack.c.l.b16 %v1043
        %v1467 = vunpack.c.l.b16 %v1044
        %v1468 = vunpack.c.l.b16 %v1045
        %v1469 = vunpack.c.l.b16 %v1046
        %v1470 = vunpack.c.l.b16 %v1047
        %v1471 = vunpack.c.l.b16 %v1048
        %v1472 = vunpack.c.l.b16 %v1049
        %v1473 = vunpack.c.l.b16 %v1050
        %v1474 = vunpack.c.l.b16 %v1051
        %v1475 = vunpack.c.l.b16 %v1052
        %v1476 = vunpack.c.l.b16 %v1053
        %v1477 = vunpack.c.l.b16 %v1054
        %v1478 = vunpack.c.l.b16 %v1055
        %v1479 = vunpack.c.l.b16 %v1056
        %v1480 = vunpack.c.l.b16 %v1057
        %v1481 = vunpack.c.l.b16 %v1058
        %v1482 = vpack.c.b16 %v1435, %v1434
        %v1483 = vpack.c.b16 %v1437, %v1436
        %v1484 = vpack.c.b16 %v1439, %v1438
        %v1485 = vpack.c.b16 %v1441, %v1440
        %v1486 = vpack.c.b16 %v1443, %v1442
        %v1487 = vpack.c.b16 %v1445, %v1444
        %v1488 = vpack.c.b16 %v1447, %v1446
        %v1489 = vpack.c.b16 %v1449, %v1448
        %v1490 = vpack.c.b16 %v1451, %v1450
        %v1491 = vpack.c.b16 %v1453, %v1452
        %v1492 = vpack.c.b16 %v1455, %v1454
        %v1493 = vpack.c.b16 %v1457, %v1456
        %v1494 = vpack.c.b16 %v1459, %v1458
        %v1495 = vpack.c.b16 %v1461, %v1460
        %v1496 = vpack.c.b16 %v1463, %v1462
        %v1497 = vpack.c.b16 %v1465, %v1464
        %v1498 = vpack.c.b16 %v1467, %v1466
        %v1499 = vpack.c.b16 %v1469, %v1468
        %v1500 = vpack.c.b16 %v1471, %v1470
        %v1501 = vpack.c.b16 %v1473, %v1472
        %v1502 = vpack.c.b16 %v1475, %v1474
        %v1503 = vpack.c.b16 %v1477, %v1476
        %v1504 = vpack.c.b16 %v1479, %v1478
        %v1505 = vpack.c.b16 %v1481, %v1480
        %1530 = vmatprep.subr.bf16.mxu0 0
        %1531 = vmatpush1.bf16.msra.mxu0 %v1489
        %1532 = vmatprep.subr.bf16.mxu0 0
        %1533 = vmatpush1.bf16.msra.mxu0 %v1488
        %1534 = vmatprep.subr.bf16.mxu0 0
        %1535 = vmatpush1.bf16.msra.mxu0 %v1487
        %1536 = vmatprep.subr.bf16.mxu0 0
        %1537 = vmatpush1.bf16.msra.mxu0 %v1486
        %1538 = vmatprep.subr.bf16.mxu0 0
        %1539 = vmatpush1.bf16.msra.mxu0 %v1485
        %1540 = vmatprep.subr.bf16.mxu0 0
        %1541 = vmatpush1.bf16.msra.mxu0 %v1484
        %1542 = vmatprep.subr.bf16.mxu0 0
        %1543 = vmatpush1.bf16.msra.mxu0 %v1483
        %1544 = vmatprep.subr.bf16.mxu0 0
        %1545 = vmatpush1.bf16.msra.mxu0 %v1482
        %1546 = vmatprep.subr.bf16.mxu0 0
        %1547 = vmatpush2.bf16.msra.mxu0 %v1497
        %1548 = vmatprep.subr.bf16.mxu0 0
        %1549 = vmatpush2.bf16.msra.mxu0 %v1496
        %1550 = vmatprep.subr.bf16.mxu0 0
        %1551 = vmatpush2.bf16.msra.mxu0 %v1495
        %1552 = vmatprep.subr.bf16.mxu0 0
        %1553 = vmatpush2.bf16.msra.mxu0 %v1494
        %1554 = vmatprep.subr.bf16.mxu0 0
        %1555 = vmatpush2.bf16.msra.mxu0 %v1493
        %1556 = vmatprep.subr.bf16.mxu0 0
        %1557 = vmatpush2.bf16.msra.mxu0 %v1492
        %1558 = vmatprep.subr.bf16.mxu0 0
        %1559 = vmatpush2.bf16.msra.mxu0 %v1491
        %1560 = vmatprep.subr.bf16.mxu0 0
        %1561 = vmatpush2.bf16.msra.mxu0 %v1490
        %1562 = vmatprep.mubr.bf16.mxu0 %v1348
        %1563 = vmatmul.mubr.bf16.gmra.mxu0 %v1368
        %v1564 = vpop.f32.mrf.mxu0
        %v1565 = vadd.f32 %v1384, %v1564
        %v1566 = vpop.f32.mrf.mxu0
        %v1567 = vpop.f32.mrf.mxu0
        %v1568 = vadd.f32 %v1384, %v1567
        %v1569 = vpop.f32.mrf.mxu0
        %1570 = vmatprep.mubr.bf16.mxu0 %v1349
        %1571 = vmatmul.mubr.bf16.gmra.mxu0 %v1369
        %v1572 = vpop.f32.mrf.mxu0
        %v1573 = vadd.f32 %v1384, %v1572
        %v1574 = vpop.f32.mrf.mxu0
        %v1575 = vpop.f32.mrf.mxu0
        %v1576 = vadd.f32 %v1384, %v1575
        %v1577 = vpop.f32.mrf.mxu0
        %1578 = vdwg.mxu0
        %1579 = vmatprep.subr.bf16.mxu0 0
        %1580 = vmatpush1.bf16.msra.mxu0 %v1505
        %1581 = vmatprep.subr.bf16.mxu0 0
        %1582 = vmatpush1.bf16.msra.mxu0 %v1504
        %1583 = vmatprep.subr.bf16.mxu0 0
        %1584 = vmatpush1.bf16.msra.mxu0 %v1503
        %1585 = vmatprep.subr.bf16.mxu0 0
        %1586 = vmatpush1.bf16.msra.mxu0 %v1502
        %1587 = vmatprep.subr.bf16.mxu0 0
        %1588 = vmatpush1.bf16.msra.mxu0 %v1501
        %1589 = vmatprep.subr.bf16.mxu0 0
        %1590 = vmatpush1.bf16.msra.mxu0 %v1500
        %1591 = vmatprep.subr.bf16.mxu0 0
        %1592 = vmatpush1.bf16.msra.mxu0 %v1499
        %1593 = vmatprep.subr.bf16.mxu0 0
        %1594 = vmatpush1.bf16.msra.mxu0 %v1498
        %1595 = vmatprep.subr.bf16.mxu0 0
        %1596 = vmatpush2.bf16.msra.mxu0 0
        %1597 = vmatprep.subr.bf16.mxu0 0
        %1598 = vmatpush2.bf16.msra.mxu0 0
        %1599 = vmatprep.subr.bf16.mxu0 0
        %1600 = vmatpush2.bf16.msra.mxu0 0
        %1601 = vmatprep.subr.bf16.mxu0 0
        %1602 = vmatpush2.bf16.msra.mxu0 0
        %1603 = vmatprep.subr.bf16.mxu0 0
        %1604 = vmatpush2.bf16.msra.mxu0 0
        %1605 = vmatprep.subr.bf16.mxu0 0
        %1606 = vmatpush2.bf16.msra.mxu0 0
        %1607 = vmatprep.subr.bf16.mxu0 0
        %1608 = vmatpush2.bf16.msra.mxu0 0
        %1609 = vmatprep.subr.bf16.mxu0 0
        %1610 = vmatpush2.bf16.msra.mxu0 0
        %1611 = vmatprep.mubr.bf16.mxu0 0
        %1612 = vmatmul.mubr.bf16.gmra.mxu0 %v1378
        %v1613 = vpop.f32.mrf.mxu0
        %v1614 = vadd.f32 %v1565, %v1613
        %v1615 = vpop.f32.mrf.mxu0
        %v1616 = vpop.f32.mrf.mxu0
        %v1617 = vadd.f32 %v1568, %v1616
        %v1618 = vpop.f32.mrf.mxu0
        %1619 = vmatprep.mubr.bf16.mxu0 0
        %1620 = vmatmul.mubr.bf16.gmra.mxu0 %v1379
        %v1621 = vpop.f32.mrf.mxu0
        %v1622 = vadd.f32 %v1573, %v1621
        %v1623 = vpop.f32.mrf.mxu0
        %v1624 = vpop.f32.mrf.mxu0
        %v1625 = vadd.f32 %v1576, %v1624
        %v1626 = vpop.f32.mrf.mxu0
        %1627 = vdwg.mxu0
        %v1628 = vadd.f32 %v1614, %v948
        %v1629 = vadd.f32 %v1617, %v951
        %v1630 = vadd.f32 %v1622, %v956
        %v1631 = vadd.f32 %v1625, %v959
        %vm1636 = vcmask 1040384
        %v1637 = vrot.slane %v1628, 7
        %v1638 = vrot.slane %v1629, 7
        %v1639 = vsel %vm1636, %v1637, %v1638
        %v1640 = vrot.slane %v1630, 7
        %v1641 = vsel %vm1636, %v1638, %v1640
        %v1642 = vrot.slane %v1631, 7
        %v1643 = vsel %vm1636, %v1640, %v1642
        %v1648 = vsel %vm1636, 0.0, %v1637
        %v1649 = vsel %vm626, -inf, %v1648
        %v1650 = vsel %vm627, -inf, %v1639
        %v1651 = vsel %vm628, -inf, %v1641
        %v1652 = vsel %vm629, -inf, %v1643
        %vm1653 = vcmask 1046528
        %v1654 = vrot.slane %v1628, 1
        %v1655 = vrot.slane %v1629, 1
        %v1656 = vsel %vm1653, %v1654, %v1655
        %v1657 = vrot.slane %v1630, 1
        %v1658 = vsel %vm1653, %v1655, %v1657
        %v1659 = vrot.slane %v1631, 1
        %v1660 = vsel %vm1653, %v1657, %v1659
        %v1665 = vsel %vm1653, %v1659, 0.0
        %v1666 = vsel %vm630, -inf, %v1656
        %v1667 = vsel %vm631, -inf, %v1658
        %v1668 = vsel %vm632, -inf, %v1660
        %v1669 = vsel %vm633, -inf, %v1665
        %v1670 = vmax.f32 %v1649, %v1628
        %v1671 = vmax.f32 %v1650, %v1629
        %v1672 = vmax.f32 %v1651, %v1630
        %v1673 = vmax.f32 %v1652, %v1631
        %v1674 = vmax.f32 %v1670, %v1666
        %v1675 = vmax.f32 %v1671, %v1667
        %v1676 = vmax.f32 %v1672, %v1668
        %v1677 = vmax.f32 %v1673, %v1669
        %1678 = vst [vmem:[#allocation2] sm:$0xff] %v1674
        %1679 = vst [vmem:[#allocation2 + $0x8] sm:$0xff] %v1675
        %1680 = vst [vmem:[#allocation2 + $0x10] sm:$0xff] %v1676
        %1681 = vst [vmem:[#allocation2 + $0x18] sm:$0xff] %v1677
        %v1682 = vld [vmem:[#allocation2] ss:$2 sm:$0xff]
        %s1683 = scalar_lea.vmem [#allocation2], 16
        %v1684 = vld [vmem:[%s1683] ss:$2 sm:$0xff]
        %v1685 = vld [vmem:[#allocation12] sm:$0xf]
        %v1686 = vld [vmem:[#allocation12 + $0x4] sm:$0xf]
        %v1687 = vld [vmem:[#allocation12 + $0x8] sm:$0xf]
        %v1688 = vld [vmem:[#allocation12 + $0xc] sm:$0xf]
        %v1689 = vld [vmem:[#allocation12 + $0x10] sm:$0xf]
        %v1690 = vld [vmem:[#allocation12 + $0x14] sm:$0xf]
        %v1691 = vld [vmem:[#allocation12 + $0x18] sm:$0xf]
        %v1692 = vld [vmem:[#allocation12 + $0x1c] sm:$0xf]
        %v1693 = vld [vmem:[#allocation12 + $0x20] sm:$0xf]
        %v1694 = vld [vmem:[#allocation12 + $0x24] sm:$0xf]
        %v1695 = vld [vmem:[#allocation12 + $0x28] sm:$0xf]
        %v1696 = vld [vmem:[#allocation12 + $0x2c] sm:$0xf]
        %v1697 = vld [vmem:[#allocation12 + $0x30] sm:$0xf]
        %v1698 = vld [vmem:[#allocation12 + $0x34] sm:$0xf]
        %v1699 = vld [vmem:[#allocation12 + $0x38] sm:$0xf]
        %v1700 = vld [vmem:[#allocation12 + $0x3c] sm:$0xf]
        %v1701 = vld [vmem:[#allocation12 + $0x40] sm:$0xf]
        %v1702 = vld [vmem:[#allocation12 + $0x44] sm:$0xf]
        %v1703 = vld [vmem:[#allocation12 + $0x48] sm:$0xf]
        %v1704 = vld [vmem:[#allocation12 + $0x4c] sm:$0xf]
        %v1705 = vld [vmem:[#allocation12 + $0x50] sm:$0xf]
        %v1706 = vld [vmem:[#allocation12 + $0x54] sm:$0xf]
        %v1707 = vld [vmem:[#allocation12 + $0x58] sm:$0xf]
        %v1708 = vld [vmem:[#allocation12 + $0x5c] sm:$0xf]
        %v1709 = vld [vmem:[#allocation12 + $0x60] sm:$0xf]
        %v1710 = vld [vmem:[#allocation12 + $0x64] sm:$0xf]
        %v1711 = vld [vmem:[#allocation12 + $0x68] sm:$0xf]
        %v1712 = vld [vmem:[#allocation12 + $0x6c] sm:$0xf]
        %v1713 = vld [vmem:[#allocation12 + $0x70] sm:$0xf]
        %v1714 = vld [vmem:[#allocation12 + $0x74] sm:$0xf]
        %v1715 = vld [vmem:[#allocation12 + $0x78] sm:$0xf]
        %v1716 = vld [vmem:[#allocation12 + $0x7c] sm:$0xf]
        %v1717 = vld [vmem:[#allocation12 + $0x80] sm:$0xf]
        %v1718 = vld [vmem:[#allocation12 + $0x84] sm:$0xf]
        %v1719 = vld [vmem:[#allocation12 + $0x88] sm:$0xf]
        %v1720 = vld [vmem:[#allocation12 + $0x8c] sm:$0xf]
        %v1721 = vld [vmem:[#allocation12 + $0x90] sm:$0xf]
        %v1722 = vld [vmem:[#allocation12 + $0x94] sm:$0xf]
        %v1723 = vld [vmem:[#allocation12 + $0x98] sm:$0xf]
        %v1724 = vld [vmem:[#allocation12 + $0x9c] sm:$0xf]
        %v1725 = vld [vmem:[#allocation12 + $0xa0] sm:$0xf]
        %v1726 = vld [vmem:[#allocation12 + $0xa4] sm:$0xf]
        %v1727 = vld [vmem:[#allocation12 + $0xa8] sm:$0xf]
        %v1728 = vld [vmem:[#allocation12 + $0xac] sm:$0xf]
        %v1729 = vld [vmem:[#allocation12 + $0xb0] sm:$0xf]
        %v1730 = vld [vmem:[#allocation12 + $0xb4] sm:$0xf]
        %v1731 = vld [vmem:[#allocation12 + $0xb8] sm:$0xf]
        %v1732 = vld [vmem:[#allocation12 + $0xbc] sm:$0xf]
        %v1733 = vld [vmem:[%s8] sm:$0x1]
        %v1734 = vld [vmem:[#allocation14] sm:$0xf]
        %v1735 = vld [vmem:[#allocation14 + $0x4] sm:$0xf]
        %v1736 = vld [vmem:[#allocation14 + $0x8] sm:$0xf]
        %v1737 = vld [vmem:[#allocation14 + $0xc] sm:$0xf]
        %v1738 = vld [vmem:[#allocation14 + $0x10] sm:$0xf]
        %v1739 = vld [vmem:[#allocation14 + $0x14] sm:$0xf]
        %v1740 = vld [vmem:[#allocation14 + $0x18] sm:$0xf]
        %v1741 = vld [vmem:[#allocation14 + $0x1c] sm:$0xf]
        %v1742 = vld [vmem:[#allocation14 + $0x20] sm:$0xf]
        %v1743 = vld [vmem:[#allocation14 + $0x24] sm:$0xf]
        %v1744 = vld [vmem:[#allocation14 + $0x28] sm:$0xf]
        %v1745 = vld [vmem:[#allocation14 + $0x2c] sm:$0xf]
        %v1746 = vld [vmem:[#allocation14 + $0x30] sm:$0xf]
        %v1747 = vld [vmem:[#allocation14 + $0x34] sm:$0xf]
        %v1748 = vld [vmem:[#allocation14 + $0x38] sm:$0xf]
        %v1749 = vld [vmem:[#allocation14 + $0x3c] sm:$0xf]
        %v1750 = vld [vmem:[#allocation14 + $0x40] sm:$0xf]
        %v1751 = vld [vmem:[#allocation14 + $0x44] sm:$0xf]
        %v1752 = vld [vmem:[#allocation14 + $0x48] sm:$0xf]
        %v1753 = vld [vmem:[#allocation14 + $0x4c] sm:$0xf]
        %v1754 = vld [vmem:[#allocation14 + $0x50] sm:$0xf]
        %v1755 = vld [vmem:[#allocation14 + $0x54] sm:$0xf]
        %v1756 = vld [vmem:[#allocation14 + $0x58] sm:$0xf]
        %v1757 = vld [vmem:[#allocation14 + $0x5c] sm:$0xf]
        %v1758 = vld [vmem:[#allocation14 + $0x60] sm:$0xf]
        %v1759 = vld [vmem:[#allocation14 + $0x64] sm:$0xf]
        %v1760 = vld [vmem:[#allocation14 + $0x68] sm:$0xf]
        %v1761 = vld [vmem:[#allocation14 + $0x6c] sm:$0xf]
        %v1762 = vld [vmem:[#allocation14 + $0x70] sm:$0xf]
        %v1763 = vld [vmem:[#allocation14 + $0x74] sm:$0xf]
        %v1764 = vld [vmem:[#allocation14 + $0x78] sm:$0xf]
        %v1765 = vld [vmem:[#allocation14 + $0x7c] sm:$0xf]
        %v1766 = vld [vmem:[#allocation14 + $0x80] sm:$0xf]
        %v1767 = vld [vmem:[#allocation14 + $0x84] sm:$0xf]
        %v1768 = vld [vmem:[#allocation14 + $0x88] sm:$0xf]
        %v1769 = vld [vmem:[#allocation14 + $0x8c] sm:$0xf]
        %v1770 = vld [vmem:[#allocation14 + $0x90] sm:$0xf]
        %v1771 = vld [vmem:[#allocation14 + $0x94] sm:$0xf]
        %v1772 = vld [vmem:[#allocation14 + $0x98] sm:$0xf]
        %v1773 = vld [vmem:[#allocation14 + $0x9c] sm:$0xf]
        %v1774 = vld [vmem:[#allocation14 + $0xa0] sm:$0xf]
        %v1775 = vld [vmem:[#allocation14 + $0xa4] sm:$0xf]
        %v1776 = vld [vmem:[#allocation14 + $0xa8] sm:$0xf]
        %v1777 = vld [vmem:[#allocation14 + $0xac] sm:$0xf]
        %v1778 = vld [vmem:[#allocation14 + $0xb0] sm:$0xf]
        %v1779 = vld [vmem:[#allocation14 + $0xb4] sm:$0xf]
        %v1780 = vld [vmem:[#allocation14 + $0xb8] sm:$0xf]
        %v1781 = vld [vmem:[#allocation14 + $0xbc] sm:$0xf]
        %v1782 = vld [vmem:[%s10] sm:$0x1]
        %v1783 = vmax.f32 %v1682, 0.0
        %v1784 = vmax.f32 %v1684, 0.0
        %v1785 = vpack.c.bf16 %v1784, %v1783
        %v1786 = vand.u32 %v618, 3
        %v1787 = vand.u32 %v619, 3
        %vm1788 = vcmp.eq.s32.totalorder %v1786, 0
        %vm1789 = vcmp.eq.s32.totalorder %v1787, 0
        %vm1790 = vcmp.eq.s32.totalorder %v1786, 3
        %vm1791 = vcmp.eq.s32.totalorder %v1787, 3
        %v1793 = vshrl.u32 %v1785, 16
        %v1795 = vrot.slane %v1793, 7
        %v1796 = vshll.u32 %v1785, 16
        %v1798 = vor.u32 %v1795, %v1796
        %v1800 = vsel %vm663, 0, %v1798
        %vm1801 = vmpackc.low %vm1788, %vm1788
        %vm1802 = vmpackc.low %vm1789, %vm1789
        %v1803 = vsel %vm1801, 65537, 0
        %v1804 = vsel %vm1802, 65537, 0
        %v1805 = vunpack.c.l.b16 %v1803
        %v1806 = vunpack.c.l.b16 %v1804
        %v1807 = vpack.c.b16 %v1806, %v1805
        %vm1808 = vcmp.ne.s16.totalorder %v1807, 0
        %v1809 = vsel %vm1808, 0, %v1800
        %v1810 = vrot.slane %v1796, 1
        %v1811 = vor.u32 %v1793, %v1810
        %v1813 = vsel %vm692, %v1811, 0
        %vm1814 = vmpackc.low %vm1790, %vm1790
        %vm1815 = vmpackc.low %vm1791, %vm1791
        %v1816 = vsel %vm1814, 65537, 0
        %v1817 = vsel %vm1815, 65537, 0
        %v1818 = vunpack.c.l.b16 %v1816
        %v1819 = vunpack.c.l.b16 %v1817
        %v1820 = vpack.c.b16 %v1819, %v1818
        %vm1821 = vcmp.ne.s16.totalorder %v1820, 0
        %v1822 = vsel %vm1821, 0, %v1813
        %v1823 = vlaneseq
        %v1824 = vshrl.u32 %v1823, 7
        %v1825 = vsub.s32 0, %v1824
        %v1826 = vrot.slane %v1733, %v1825
        %v1875 = vunpack.c.l.b16 %v1685
        %v1876 = vunpack.c.l.b16 %v1686
        %v1877 = vunpack.c.l.b16 %v1687
        %v1878 = vunpack.c.l.b16 %v1688
        %v1879 = vunpack.c.l.b16 %v1689
        %v1880 = vunpack.c.l.b16 %v1690
        %v1881 = vunpack.c.l.b16 %v1691
        %v1882 = vunpack.c.l.b16 %v1692
        %v1883 = vunpack.c.l.b16 %v1693
        %v1884 = vunpack.c.l.b16 %v1694
        %v1885 = vunpack.c.l.b16 %v1695
        %v1886 = vunpack.c.l.b16 %v1696
        %v1887 = vunpack.c.l.b16 %v1697
        %v1888 = vunpack.c.l.b16 %v1698
        %v1889 = vunpack.c.l.b16 %v1699
        %v1890 = vunpack.c.l.b16 %v1700
        %v1891 = vunpack.c.l.b16 %v1701
        %v1892 = vunpack.c.l.b16 %v1702
        %v1893 = vunpack.c.l.b16 %v1703
        %v1894 = vunpack.c.l.b16 %v1704
        %v1895 = vunpack.c.l.b16 %v1705
        %v1896 = vunpack.c.l.b16 %v1706
        %v1897 = vunpack.c.l.b16 %v1707
        %v1898 = vunpack.c.l.b16 %v1708
        %v1899 = vunpack.c.l.b16 %v1709
        %v1900 = vunpack.c.l.b16 %v1710
        %v1901 = vunpack.c.l.b16 %v1711
        %v1902 = vunpack.c.l.b16 %v1712
        %v1903 = vunpack.c.l.b16 %v1713
        %v1904 = vunpack.c.l.b16 %v1714
        %v1905 = vunpack.c.l.b16 %v1715
        %v1906 = vunpack.c.l.b16 %v1716
        %v1907 = vunpack.c.l.b16 %v1717
        %v1908 = vunpack.c.l.b16 %v1718
        %v1909 = vunpack.c.l.b16 %v1719
        %v1910 = vunpack.c.l.b16 %v1720
        %v1911 = vunpack.c.l.b16 %v1721
        %v1912 = vunpack.c.l.b16 %v1722
        %v1913 = vunpack.c.l.b16 %v1723
        %v1914 = vunpack.c.l.b16 %v1724
        %v1915 = vunpack.c.l.b16 %v1725
        %v1916 = vunpack.c.l.b16 %v1726
        %v1917 = vunpack.c.l.b16 %v1727
        %v1918 = vunpack.c.l.b16 %v1728
        %v1919 = vunpack.c.l.b16 %v1729
        %v1920 = vunpack.c.l.b16 %v1730
        %v1921 = vunpack.c.l.b16 %v1731
        %v1922 = vunpack.c.l.b16 %v1732
        %v1923 = vpack.c.b16 %v1876, %v1875
        %v1924 = vpack.c.b16 %v1878, %v1877
        %v1925 = vpack.c.b16 %v1880, %v1879
        %v1926 = vpack.c.b16 %v1882, %v1881
        %v1927 = vpack.c.b16 %v1884, %v1883
        %v1928 = vpack.c.b16 %v1886, %v1885
        %v1929 = vpack.c.b16 %v1888, %v1887
        %v1930 = vpack.c.b16 %v1890, %v1889
        %v1931 = vpack.c.b16 %v1892, %v1891
        %v1932 = vpack.c.b16 %v1894, %v1893
        %v1933 = vpack.c.b16 %v1896, %v1895
        %v1934 = vpack.c.b16 %v1898, %v1897
        %v1935 = vpack.c.b16 %v1900, %v1899
        %v1936 = vpack.c.b16 %v1902, %v1901
        %v1937 = vpack.c.b16 %v1904, %v1903
        %v1938 = vpack.c.b16 %v1906, %v1905
        %v1939 = vpack.c.b16 %v1908, %v1907
        %v1940 = vpack.c.b16 %v1910, %v1909
        %v1941 = vpack.c.b16 %v1912, %v1911
        %v1942 = vpack.c.b16 %v1914, %v1913
        %v1943 = vpack.c.b16 %v1916, %v1915
        %v1944 = vpack.c.b16 %v1918, %v1917
        %v1945 = vpack.c.b16 %v1920, %v1919
        %v1946 = vpack.c.b16 %v1922, %v1921
        %1971 = vmatprep.subr.bf16.mxu0 0
        %1972 = vmatpush1.bf16.msra.mxu0 %v1930
        %1973 = vmatprep.subr.bf16.mxu0 0
        %1974 = vmatpush1.bf16.msra.mxu0 %v1929
        %1975 = vmatprep.subr.bf16.mxu0 0
        %1976 = vmatpush1.bf16.msra.mxu0 %v1928
        %1977 = vmatprep.subr.bf16.mxu0 0
        %1978 = vmatpush1.bf16.msra.mxu0 %v1927
        %1979 = vmatprep.subr.bf16.mxu0 0
        %1980 = vmatpush1.bf16.msra.mxu0 %v1926
        %1981 = vmatprep.subr.bf16.mxu0 0
        %1982 = vmatpush1.bf16.msra.mxu0 %v1925
        %1983 = vmatprep.subr.bf16.mxu0 0
        %1984 = vmatpush1.bf16.msra.mxu0 %v1924
        %1985 = vmatprep.subr.bf16.mxu0 0
        %1986 = vmatpush1.bf16.msra.mxu0 %v1923
        %1987 = vmatprep.subr.bf16.mxu0 0
        %1988 = vmatpush2.bf16.msra.mxu0 %v1938
        %1989 = vmatprep.subr.bf16.mxu0 0
        %1990 = vmatpush2.bf16.msra.mxu0 %v1937
        %1991 = vmatprep.subr.bf16.mxu0 0
        %1992 = vmatpush2.bf16.msra.mxu0 %v1936
        %1993 = vmatprep.subr.bf16.mxu0 0
        %1994 = vmatpush2.bf16.msra.mxu0 %v1935
        %1995 = vmatprep.subr.bf16.mxu0 0
        %1996 = vmatpush2.bf16.msra.mxu0 %v1934
        %1997 = vmatprep.subr.bf16.mxu0 0
        %1998 = vmatpush2.bf16.msra.mxu0 %v1933
        %1999 = vmatprep.subr.bf16.mxu0 0
        %2000 = vmatpush2.bf16.msra.mxu0 %v1932
        %2001 = vmatprep.subr.bf16.mxu0 0
        %2002 = vmatpush2.bf16.msra.mxu0 %v1931
        %2003 = vmatprep.mubr.bf16.mxu0 %v1785
        %2004 = vmatmul.mubr.bf16.gmra.mxu0 %v1809
        %v2005 = vpop.f32.mrf.mxu0
        %v2006 = vadd.f32 %v1826, %v2005
        %v2007 = vpop.f32.mrf.mxu0
        %v2008 = vpop.f32.mrf.mxu0
        %v2009 = vadd.f32 %v1826, %v2008
        %v2010 = vpop.f32.mrf.mxu0
        %2011 = vdwg.mxu0
        %2012 = vmatprep.subr.bf16.mxu0 0
        %2013 = vmatpush1.bf16.msra.mxu0 %v1946
        %2014 = vmatprep.subr.bf16.mxu0 0
        %2015 = vmatpush1.bf16.msra.mxu0 %v1945
        %2016 = vmatprep.subr.bf16.mxu0 0
        %2017 = vmatpush1.bf16.msra.mxu0 %v1944
        %2018 = vmatprep.subr.bf16.mxu0 0
        %2019 = vmatpush1.bf16.msra.mxu0 %v1943
        %2020 = vmatprep.subr.bf16.mxu0 0
        %2021 = vmatpush1.bf16.msra.mxu0 %v1942
        %2022 = vmatprep.subr.bf16.mxu0 0
        %2023 = vmatpush1.bf16.msra.mxu0 %v1941
        %2024 = vmatprep.subr.bf16.mxu0 0
        %2025 = vmatpush1.bf16.msra.mxu0 %v1940
        %2026 = vmatprep.subr.bf16.mxu0 0
        %2027 = vmatpush1.bf16.msra.mxu0 %v1939
        %2028 = vmatprep.subr.bf16.mxu0 0
        %2029 = vmatpush2.bf16.msra.mxu0 0
        %2030 = vmatprep.subr.bf16.mxu0 0
        %2031 = vmatpush2.bf16.msra.mxu0 0
        %2032 = vmatprep.subr.bf16.mxu0 0
        %2033 = vmatpush2.bf16.msra.mxu0 0
        %2034 = vmatprep.subr.bf16.mxu0 0
        %2035 = vmatpush2.bf16.msra.mxu0 0
        %2036 = vmatprep.subr.bf16.mxu0 0
        %2037 = vmatpush2.bf16.msra.mxu0 0
        %2038 = vmatprep.subr.bf16.mxu0 0
        %2039 = vmatpush2.bf16.msra.mxu0 0
        %2040 = vmatprep.subr.bf16.mxu0 0
        %2041 = vmatpush2.bf16.msra.mxu0 0
        %2042 = vmatprep.subr.bf16.mxu0 0
        %2043 = vmatpush2.bf16.msra.mxu0 0
        %2044 = vmatprep.mubr.bf16.mxu0 0
        %2045 = vmatmul.mubr.bf16.gmra.mxu0 %v1822
        %v2046 = vpop.f32.mrf.mxu0
        %v2047 = vadd.f32 %v2006, %v2046
        %v2048 = vpop.f32.mrf.mxu0
        %v2049 = vpop.f32.mrf.mxu0
        %v2050 = vadd.f32 %v2009, %v2049
        %v2051 = vpop.f32.mrf.mxu0
        %2052 = vdwg.mxu0
        %v2053 = vmax.f32 %v2047, 0.0
        %v2054 = vmax.f32 %v2050, 0.0
        %v2055 = vpack.c.bf16 %v2054, %v2053
        %v2057 = vshrl.u32 %v2055, 16
        %v2059 = vrot.slane %v2057, 7
        %v2060 = vshll.u32 %v2055, 16
        %v2062 = vor.u32 %v2059, %v2060
        %v2064 = vsel %vm663, 0, %v2062
        %v2065 = vsel %vm1808, 0, %v2064
        %v2066 = vrot.slane %v2060, 1
        %v2067 = vor.u32 %v2057, %v2066
        %v2069 = vsel %vm692, %v2067, 0
        %v2070 = vsel %vm1821, 0, %v2069
        %v2071 = vlaneseq
        %v2072 = vshrl.u32 %v2071, 7
        %v2073 = vsub.s32 0, %v2072
        %v2074 = vrot.slane %v1782, %v2073
        %v2123 = vunpack.c.l.b16 %v1734
        %v2124 = vunpack.c.l.b16 %v1735
        %v2125 = vunpack.c.l.b16 %v1736
        %v2126 = vunpack.c.l.b16 %v1737
        %v2127 = vunpack.c.l.b16 %v1738
        %v2128 = vunpack.c.l.b16 %v1739
        %v2129 = vunpack.c.l.b16 %v1740
        %v2130 = vunpack.c.l.b16 %v1741
        %v2131 = vunpack.c.l.b16 %v1742
        %v2132 = vunpack.c.l.b16 %v1743
        %v2133 = vunpack.c.l.b16 %v1744
        %v2134 = vunpack.c.l.b16 %v1745
        %v2135 = vunpack.c.l.b16 %v1746
        %v2136 = vunpack.c.l.b16 %v1747
        %v2137 = vunpack.c.l.b16 %v1748
        %v2138 = vunpack.c.l.b16 %v1749
        %v2139 = vunpack.c.l.b16 %v1750
        %v2140 = vunpack.c.l.b16 %v1751
        %v2141 = vunpack.c.l.b16 %v1752
        %v2142 = vunpack.c.l.b16 %v1753
        %v2143 = vunpack.c.l.b16 %v1754
        %v2144 = vunpack.c.l.b16 %v1755
        %v2145 = vunpack.c.l.b16 %v1756
        %v2146 = vunpack.c.l.b16 %v1757
        %v2147 = vunpack.c.l.b16 %v1758
        %v2148 = vunpack.c.l.b16 %v1759
        %v2149 = vunpack.c.l.b16 %v1760
        %v2150 = vunpack.c.l.b16 %v1761
        %v2151 = vunpack.c.l.b16 %v1762
        %v2152 = vunpack.c.l.b16 %v1763
        %v2153 = vunpack.c.l.b16 %v1764
        %v2154 = vunpack.c.l.b16 %v1765
        %v2155 = vunpack.c.l.b16 %v1766
        %v2156 = vunpack.c.l.b16 %v1767
        %v2157 = vunpack.c.l.b16 %v1768
        %v2158 = vunpack.c.l.b16 %v1769
        %v2159 = vunpack.c.l.b16 %v1770
        %v2160 = vunpack.c.l.b16 %v1771
        %v2161 = vunpack.c.l.b16 %v1772
        %v2162 = vunpack.c.l.b16 %v1773
        %v2163 = vunpack.c.l.b16 %v1774
        %v2164 = vunpack.c.l.b16 %v1775
        %v2165 = vunpack.c.l.b16 %v1776
        %v2166 = vunpack.c.l.b16 %v1777
        %v2167 = vunpack.c.l.b16 %v1778
        %v2168 = vunpack.c.l.b16 %v1779
        %v2169 = vunpack.c.l.b16 %v1780
        %v2170 = vunpack.c.l.b16 %v1781
        %v2171 = vpack.c.b16 %v2124, %v2123
        %v2172 = vpack.c.b16 %v2126, %v2125
        %v2173 = vpack.c.b16 %v2128, %v2127
        %v2174 = vpack.c.b16 %v2130, %v2129
        %v2175 = vpack.c.b16 %v2132, %v2131
        %v2176 = vpack.c.b16 %v2134, %v2133
        %v2177 = vpack.c.b16 %v2136, %v2135
        %v2178 = vpack.c.b16 %v2138, %v2137
        %v2179 = vpack.c.b16 %v2140, %v2139
        %v2180 = vpack.c.b16 %v2142, %v2141
        %v2181 = vpack.c.b16 %v2144, %v2143
        %v2182 = vpack.c.b16 %v2146, %v2145
        %v2183 = vpack.c.b16 %v2148, %v2147
        %v2184 = vpack.c.b16 %v2150, %v2149
        %v2185 = vpack.c.b16 %v2152, %v2151
        %v2186 = vpack.c.b16 %v2154, %v2153
        %v2187 = vpack.c.b16 %v2156, %v2155
        %v2188 = vpack.c.b16 %v2158, %v2157
        %v2189 = vpack.c.b16 %v2160, %v2159
        %v2190 = vpack.c.b16 %v2162, %v2161
        %v2191 = vpack.c.b16 %v2164, %v2163
        %v2192 = vpack.c.b16 %v2166, %v2165
        %v2193 = vpack.c.b16 %v2168, %v2167
        %v2194 = vpack.c.b16 %v2170, %v2169
        %2219 = vmatprep.subr.bf16.mxu0 0
        %2220 = vmatpush1.bf16.msra.mxu0 %v2178
        %2221 = vmatprep.subr.bf16.mxu0 0
        %2222 = vmatpush1.bf16.msra.mxu0 %v2177
        %2223 = vmatprep.subr.bf16.mxu0 0
        %2224 = vmatpush1.bf16.msra.mxu0 %v2176
        %2225 = vmatprep.subr.bf16.mxu0 0
        %2226 = vmatpush1.bf16.msra.mxu0 %v2175
        %2227 = vmatprep.subr.bf16.mxu0 0
        %2228 = vmatpush1.bf16.msra.mxu0 %v2174
        %2229 = vmatprep.subr.bf16.mxu0 0
        %2230 = vmatpush1.bf16.msra.mxu0 %v2173
        %2231 = vmatprep.subr.bf16.mxu0 0
        %2232 = vmatpush1.bf16.msra.mxu0 %v2172
        %2233 = vmatprep.subr.bf16.mxu0 0
        %2234 = vmatpush1.bf16.msra.mxu0 %v2171
        %2235 = vmatprep.subr.bf16.mxu0 0
        %2236 = vmatpush2.bf16.msra.mxu0 %v2186
        %2237 = vmatprep.subr.bf16.mxu0 0
        %2238 = vmatpush2.bf16.msra.mxu0 %v2185
        %2239 = vmatprep.subr.bf16.mxu0 0
        %2240 = vmatpush2.bf16.msra.mxu0 %v2184
        %2241 = vmatprep.subr.bf16.mxu0 0
        %2242 = vmatpush2.bf16.msra.mxu0 %v2183
        %2243 = vmatprep.subr.bf16.mxu0 0
        %2244 = vmatpush2.bf16.msra.mxu0 %v2182
        %2245 = vmatprep.subr.bf16.mxu0 0
        %2246 = vmatpush2.bf16.msra.mxu0 %v2181
        %2247 = vmatprep.subr.bf16.mxu0 0
        %2248 = vmatpush2.bf16.msra.mxu0 %v2180
        %2249 = vmatprep.subr.bf16.mxu0 0
        %2250 = vmatpush2.bf16.msra.mxu0 %v2179
        %2251 = vmatprep.mubr.bf16.mxu0 %v2055
        %2252 = vmatmul.mubr.bf16.gmra.mxu0 %v2065
        %v2253 = vpop.f32.mrf.mxu0
        %v2254 = vadd.f32 %v2074, %v2253
        %v2255 = vpop.f32.mrf.mxu0
        %v2256 = vpop.f32.mrf.mxu0
        %v2257 = vadd.f32 %v2074, %v2256
        %v2258 = vpop.f32.mrf.mxu0
        %2259 = vdwg.mxu0
        %2260 = vmatprep.subr.bf16.mxu0 0
        %2261 = vmatpush1.bf16.msra.mxu0 %v2194
        %2262 = vmatprep.subr.bf16.mxu0 0
        %2263 = vmatpush1.bf16.msra.mxu0 %v2193
        %2264 = vmatprep.subr.bf16.mxu0 0
        %2265 = vmatpush1.bf16.msra.mxu0 %v2192
        %2266 = vmatprep.subr.bf16.mxu0 0
        %2267 = vmatpush1.bf16.msra.mxu0 %v2191
        %2268 = vmatprep.subr.bf16.mxu0 0
        %2269 = vmatpush1.bf16.msra.mxu0 %v2190
        %2270 = vmatprep.subr.bf16.mxu0 0
        %2271 = vmatpush1.bf16.msra.mxu0 %v2189
        %2272 = vmatprep.subr.bf16.mxu0 0
        %2273 = vmatpush1.bf16.msra.mxu0 %v2188
        %2274 = vmatprep.subr.bf16.mxu0 0
        %2275 = vmatpush1.bf16.msra.mxu0 %v2187
        %2276 = vmatprep.subr.bf16.mxu0 0
        %2277 = vmatpush2.bf16.msra.mxu0 0
        %2278 = vmatprep.subr.bf16.mxu0 0
        %2279 = vmatpush2.bf16.msra.mxu0 0
        %2280 = vmatprep.subr.bf16.mxu0 0
        %2281 = vmatpush2.bf16.msra.mxu0 0
        %2282 = vmatprep.subr.bf16.mxu0 0
        %2283 = vmatpush2.bf16.msra.mxu0 0
        %2284 = vmatprep.subr.bf16.mxu0 0
        %2285 = vmatpush2.bf16.msra.mxu0 0
        %2286 = vmatprep.subr.bf16.mxu0 0
        %2287 = vmatpush2.bf16.msra.mxu0 0
        %2288 = vmatprep.subr.bf16.mxu0 0
        %2289 = vmatpush2.bf16.msra.mxu0 0
        %2290 = vmatprep.subr.bf16.mxu0 0
        %2291 = vmatpush2.bf16.msra.mxu0 0
        %2292 = vmatprep.mubr.bf16.mxu0 0
        %2293 = vmatmul.mubr.bf16.gmra.mxu0 %v2070
        %v2294 = vpop.f32.mrf.mxu0
        %v2295 = vadd.f32 %v2254, %v2294
        %v2296 = vpop.f32.mrf.mxu0
        %v2297 = vpop.f32.mrf.mxu0
        %v2298 = vadd.f32 %v2257, %v2297
        %v2299 = vpop.f32.mrf.mxu0
        %2300 = vdwg.mxu0
        %v2301 = vadd.f32 %v2295, %v1682
        %v2302 = vadd.f32 %v2298, %v1684
        %v2305 = vrot.slane %v2301, 7
        %v2306 = vrot.slane %v2302, 7
        %v2307 = vsel %vm1636, %v2305, %v2306
        %v2310 = vsel %vm1636, 0.0, %v2305
        %v2311 = vsel %vm1788, -inf, %v2310
        %v2312 = vsel %vm1789, -inf, %v2307
        %v2313 = vrot.slane %v2301, 1
        %v2314 = vrot.slane %v2302, 1
        %v2315 = vsel %vm1653, %v2313, %v2314
        %v2318 = vsel %vm1653, %v2314, 0.0
        %v2319 = vsel %vm1790, -inf, %v2315
        %v2320 = vsel %vm1791, -inf, %v2318
        %v2321 = vmax.f32 %v2311, %v2301
        %v2322 = vmax.f32 %v2312, %v2302
        %v2323 = vmax.f32 %v2321, %v2319
        %v2324 = vmax.f32 %v2322, %v2320
        %2325 = vst [vmem:[#allocation2] sm:$0xff] %v2323
        %2326 = vst [vmem:[#allocation2 + $0x8] sm:$0xff] %v2324
        %v2327 = vld [vmem:[#allocation2] ss:$2 sm:$0xff]
        %s2328 = scalar_lea.vmem [#allocation12], 192
        %v2329 = vld [vmem:[%s2328] sm:$0xf]
        %v2330 = vld [vmem:[%s2328 + $0x4] sm:$0xf]
        %v2331 = vld [vmem:[%s2328 + $0x8] sm:$0xf]
        %v2332 = vld [vmem:[%s2328 + $0xc] sm:$0xf]
        %v2333 = vld [vmem:[%s2328 + $0x10] sm:$0xf]
        %v2334 = vld [vmem:[%s2328 + $0x14] sm:$0xf]
        %v2335 = vld [vmem:[%s2328 + $0x18] sm:$0xf]
        %v2336 = vld [vmem:[%s2328 + $0x1c] sm:$0xf]
        %v2337 = vld [vmem:[%s2328 + $0x20] sm:$0xf]
        %v2338 = vld [vmem:[%s2328 + $0x24] sm:$0xf]
        %v2339 = vld [vmem:[%s2328 + $0x28] sm:$0xf]
        %v2340 = vld [vmem:[%s2328 + $0x2c] sm:$0xf]
        %v2341 = vld [vmem:[%s2328 + $0x30] sm:$0xf]
        %v2342 = vld [vmem:[%s2328 + $0x34] sm:$0xf]
        %v2343 = vld [vmem:[%s2328 + $0x38] sm:$0xf]
        %v2344 = vld [vmem:[%s2328 + $0x3c] sm:$0xf]
        %v2345 = vld [vmem:[%s2328 + $0x40] sm:$0xf]
        %v2346 = vld [vmem:[%s2328 + $0x44] sm:$0xf]
        %v2347 = vld [vmem:[%s2328 + $0x48] sm:$0xf]
        %v2348 = vld [vmem:[%s2328 + $0x4c] sm:$0xf]
        %v2349 = vld [vmem:[%s2328 + $0x50] sm:$0xf]
        %v2350 = vld [vmem:[%s2328 + $0x54] sm:$0xf]
        %v2351 = vld [vmem:[%s2328 + $0x58] sm:$0xf]
        %v2352 = vld [vmem:[%s2328 + $0x5c] sm:$0xf]
        %v2353 = vld [vmem:[%s2328 + $0x60] sm:$0xf]
        %v2354 = vld [vmem:[%s2328 + $0x64] sm:$0xf]
        %v2355 = vld [vmem:[%s2328 + $0x68] sm:$0xf]
        %v2356 = vld [vmem:[%s2328 + $0x6c] sm:$0xf]
        %v2357 = vld [vmem:[%s2328 + $0x70] sm:$0xf]
        %v2358 = vld [vmem:[%s2328 + $0x74] sm:$0xf]
        %v2359 = vld [vmem:[%s2328 + $0x78] sm:$0xf]
        %v2360 = vld [vmem:[%s2328 + $0x7c] sm:$0xf]
        %v2361 = vld [vmem:[%s2328 + $0x80] sm:$0xf]
        %v2362 = vld [vmem:[%s2328 + $0x84] sm:$0xf]
        %v2363 = vld [vmem:[%s2328 + $0x88] sm:$0xf]
        %v2364 = vld [vmem:[%s2328 + $0x8c] sm:$0xf]
        %v2365 = vld [vmem:[%s2328 + $0x90] sm:$0xf]
        %v2366 = vld [vmem:[%s2328 + $0x94] sm:$0xf]
        %v2367 = vld [vmem:[%s2328 + $0x98] sm:$0xf]
        %v2368 = vld [vmem:[%s2328 + $0x9c] sm:$0xf]
        %v2369 = vld [vmem:[%s2328 + $0xa0] sm:$0xf]
        %v2370 = vld [vmem:[%s2328 + $0xa4] sm:$0xf]
        %v2371 = vld [vmem:[%s2328 + $0xa8] sm:$0xf]
        %v2372 = vld [vmem:[%s2328 + $0xac] sm:$0xf]
        %v2373 = vld [vmem:[%s2328 + $0xb0] sm:$0xf]
        %v2374 = vld [vmem:[%s2328 + $0xb4] sm:$0xf]
        %v2375 = vld [vmem:[%s2328 + $0xb8] sm:$0xf]
        %v2376 = vld [vmem:[%s2328 + $0xbc] sm:$0xf]
        %v2377 = vld [vmem:[%s8 + $0x1] sm:$0x1]
        %s2378 = scalar_lea.vmem [#allocation14], 192
        %v2379 = vld [vmem:[%s2378] sm:$0xf]
        %v2380 = vld [vmem:[%s2378 + $0x4] sm:$0xf]
        %v2381 = vld [vmem:[%s2378 + $0x8] sm:$0xf]
        %v2382 = vld [vmem:[%s2378 + $0xc] sm:$0xf]
        %v2383 = vld [vmem:[%s2378 + $0x10] sm:$0xf]
        %v2384 = vld [vmem:[%s2378 + $0x14] sm:$0xf]
        %v2385 = vld [vmem:[%s2378 + $0x18] sm:$0xf]
        %v2386 = vld [vmem:[%s2378 + $0x1c] sm:$0xf]
        %v2387 = vld [vmem:[%s2378 + $0x20] sm:$0xf]
        %v2388 = vld [vmem:[%s2378 + $0x24] sm:$0xf]
        %v2389 = vld [vmem:[%s2378 + $0x28] sm:$0xf]
        %v2390 = vld [vmem:[%s2378 + $0x2c] sm:$0xf]
        %v2391 = vld [vmem:[%s2378 + $0x30] sm:$0xf]
        %v2392 = vld [vmem:[%s2378 + $0x34] sm:$0xf]
        %v2393 = vld [vmem:[%s2378 + $0x38] sm:$0xf]
        %v2394 = vld [vmem:[%s2378 + $0x3c] sm:$0xf]
        %v2395 = vld [vmem:[%s2378 + $0x40] sm:$0xf]
        %v2396 = vld [vmem:[%s2378 + $0x44] sm:$0xf]
        %v2397 = vld [vmem:[%s2378 + $0x48] sm:$0xf]
        %v2398 = vld [vmem:[%s2378 + $0x4c] sm:$0xf]
        %v2399 = vld [vmem:[%s2378 + $0x50] sm:$0xf]
        %v2400 = vld [vmem:[%s2378 + $0x54] sm:$0xf]
        %v2401 = vld [vmem:[%s2378 + $0x58] sm:$0xf]
        %v2402 = vld [vmem:[%s2378 + $0x5c] sm:$0xf]
        %v2403 = vld [vmem:[%s2378 + $0x60] sm:$0xf]
        %v2404 = vld [vmem:[%s2378 + $0x64] sm:$0xf]
        %v2405 = vld [vmem:[%s2378 + $0x68] sm:$0xf]
        %v2406 = vld [vmem:[%s2378 + $0x6c] sm:$0xf]
        %v2407 = vld [vmem:[%s2378 + $0x70] sm:$0xf]
        %v2408 = vld [vmem:[%s2378 + $0x74] sm:$0xf]
        %v2409 = vld [vmem:[%s2378 + $0x78] sm:$0xf]
        %v2410 = vld [vmem:[%s2378 + $0x7c] sm:$0xf]
        %v2411 = vld [vmem:[%s2378 + $0x80] sm:$0xf]
        %v2412 = vld [vmem:[%s2378 + $0x84] sm:$0xf]
        %v2413 = vld [vmem:[%s2378 + $0x88] sm:$0xf]
        %v2414 = vld [vmem:[%s2378 + $0x8c] sm:$0xf]
        %v2415 = vld [vmem:[%s2378 + $0x90] sm:$0xf]
        %v2416 = vld [vmem:[%s2378 + $0x94] sm:$0xf]
        %v2417 = vld [vmem:[%s2378 + $0x98] sm:$0xf]
        %v2418 = vld [vmem:[%s2378 + $0x9c] sm:$0xf]
        %v2419 = vld [vmem:[%s2378 + $0xa0] sm:$0xf]
        %v2420 = vld [vmem:[%s2378 + $0xa4] sm:$0xf]
        %v2421 = vld [vmem:[%s2378 + $0xa8] sm:$0xf]
        %v2422 = vld [vmem:[%s2378 + $0xac] sm:$0xf]
        %v2423 = vld [vmem:[%s2378 + $0xb0] sm:$0xf]
        %v2424 = vld [vmem:[%s2378 + $0xb4] sm:$0xf]
        %v2425 = vld [vmem:[%s2378 + $0xb8] sm:$0xf]
        %v2426 = vld [vmem:[%s2378 + $0xbc] sm:$0xf]
        %v2427 = vld [vmem:[%s10 + $0x1] sm:$0x1]
        %v2428 = vmax.f32 %v2327, 0.0
        %v2429 = vpack.c.bf16 %v2428, %v2428
        %v2430 = vand.u32 %v618, 1
        %vm2431 = vcmp.eq.s32.totalorder %v2430, 0
        %vm2432 = vcmp.eq.s32.totalorder %v2430, 1
        %v2434 = vshrl.u32 %v2429, 16
        %v2436 = vrot.slane %v2434, 7
        %v2437 = vshll.u32 %v2429, 16
        %v2439 = vor.u32 %v2436, %v2437
        %v2441 = vsel %vm663, 0, %v2439
        %vm2442 = vmpackc.low %vm2431, %vm2431
        %v2443 = vsel %vm2442, 0, %v2441
        %v2444 = vrot.slane %v2437, 1
        %v2445 = vor.u32 %v2434, %v2444
        %vm2447 = vcmask 1043456
        %vm2448 = vsmask.f32 3328
        %vm2449 = vmand %vm2447, %vm2448
        %v2450 = vsel %vm2449, %v2445, 0
        %vm2451 = vmpackc.low %vm2432, %vm2432
        %v2452 = vsel %vm2451, 0, %v2450
        %v2453 = vlaneseq
        %v2454 = vshrl.u32 %v2453, 7
        %v2455 = vsub.s32 0, %v2454
        %v2456 = vrot.slane %v2377, %v2455
        %v2505 = vunpack.c.l.b16 %v2329
        %v2506 = vunpack.c.l.b16 %v2330
        %v2507 = vunpack.c.l.b16 %v2331
        %v2508 = vunpack.c.l.b16 %v2332
        %v2509 = vunpack.c.l.b16 %v2333
        %v2510 = vunpack.c.l.b16 %v2334
        %v2511 = vunpack.c.l.b16 %v2335
        %v2512 = vunpack.c.l.b16 %v2336
        %v2513 = vunpack.c.l.b16 %v2337
        %v2514 = vunpack.c.l.b16 %v2338
        %v2515 = vunpack.c.l.b16 %v2339
        %v2516 = vunpack.c.l.b16 %v2340
        %v2517 = vunpack.c.l.b16 %v2341
        %v2518 = vunpack.c.l.b16 %v2342
        %v2519 = vunpack.c.l.b16 %v2343
        %v2520 = vunpack.c.l.b16 %v2344
        %v2521 = vunpack.c.l.b16 %v2345
        %v2522 = vunpack.c.l.b16 %v2346
        %v2523 = vunpack.c.l.b16 %v2347
        %v2524 = vunpack.c.l.b16 %v2348
        %v2525 = vunpack.c.l.b16 %v2349
        %v2526 = vunpack.c.l.b16 %v2350
        %v2527 = vunpack.c.l.b16 %v2351
        %v2528 = vunpack.c.l.b16 %v2352
        %v2529 = vunpack.c.l.b16 %v2353
        %v2530 = vunpack.c.l.b16 %v2354
        %v2531 = vunpack.c.l.b16 %v2355
        %v2532 = vunpack.c.l.b16 %v2356
        %v2533 = vunpack.c.l.b16 %v2357
        %v2534 = vunpack.c.l.b16 %v2358
        %v2535 = vunpack.c.l.b16 %v2359
        %v2536 = vunpack.c.l.b16 %v2360
        %v2537 = vunpack.c.l.b16 %v2361
        %v2538 = vunpack.c.l.b16 %v2362
        %v2539 = vunpack.c.l.b16 %v2363
        %v2540 = vunpack.c.l.b16 %v2364
        %v2541 = vunpack.c.l.b16 %v2365
        %v2542 = vunpack.c.l.b16 %v2366
        %v2543 = vunpack.c.l.b16 %v2367
        %v2544 = vunpack.c.l.b16 %v2368
        %v2545 = vunpack.c.l.b16 %v2369
        %v2546 = vunpack.c.l.b16 %v2370
        %v2547 = vunpack.c.l.b16 %v2371
        %v2548 = vunpack.c.l.b16 %v2372
        %v2549 = vunpack.c.l.b16 %v2373
        %v2550 = vunpack.c.l.b16 %v2374
        %v2551 = vunpack.c.l.b16 %v2375
        %v2552 = vunpack.c.l.b16 %v2376
        %v2553 = vpack.c.b16 %v2506, %v2505
        %v2554 = vpack.c.b16 %v2508, %v2507
        %v2555 = vpack.c.b16 %v2510, %v2509
        %v2556 = vpack.c.b16 %v2512, %v2511
        %v2557 = vpack.c.b16 %v2514, %v2513
        %v2558 = vpack.c.b16 %v2516, %v2515
        %v2559 = vpack.c.b16 %v2518, %v2517
        %v2560 = vpack.c.b16 %v2520, %v2519
        %v2561 = vpack.c.b16 %v2522, %v2521
        %v2562 = vpack.c.b16 %v2524, %v2523
        %v2563 = vpack.c.b16 %v2526, %v2525
        %v2564 = vpack.c.b16 %v2528, %v2527
        %v2565 = vpack.c.b16 %v2530, %v2529
        %v2566 = vpack.c.b16 %v2532, %v2531
        %v2567 = vpack.c.b16 %v2534, %v2533
        %v2568 = vpack.c.b16 %v2536, %v2535
        %v2569 = vpack.c.b16 %v2538, %v2537
        %v2570 = vpack.c.b16 %v2540, %v2539
        %v2571 = vpack.c.b16 %v2542, %v2541
        %v2572 = vpack.c.b16 %v2544, %v2543
        %v2573 = vpack.c.b16 %v2546, %v2545
        %v2574 = vpack.c.b16 %v2548, %v2547
        %v2575 = vpack.c.b16 %v2550, %v2549
        %v2576 = vpack.c.b16 %v2552, %v2551
        %2601 = vmatprep.subr.bf16.mxu0 0
        %2602 = vmatpush1.bf16.msra.mxu0 %v2560
        %2603 = vmatprep.subr.bf16.mxu0 0
        %2604 = vmatpush1.bf16.msra.mxu0 %v2559
        %2605 = vmatprep.subr.bf16.mxu0 0
        %2606 = vmatpush1.bf16.msra.mxu0 %v2558
        %2607 = vmatprep.subr.bf16.mxu0 0
        %2608 = vmatpush1.bf16.msra.mxu0 %v2557
        %2609 = vmatprep.subr.bf16.mxu0 0
        %2610 = vmatpush1.bf16.msra.mxu0 %v2556
        %2611 = vmatprep.subr.bf16.mxu0 0
        %2612 = vmatpush1.bf16.msra.mxu0 %v2555
        %2613 = vmatprep.subr.bf16.mxu0 0
        %2614 = vmatpush1.bf16.msra.mxu0 %v2554
        %2615 = vmatprep.subr.bf16.mxu0 0
        %2616 = vmatpush1.bf16.msra.mxu0 %v2553
        %2617 = vmatprep.subr.bf16.mxu0 0
        %2618 = vmatpush2.bf16.msra.mxu0 %v2568
        %2619 = vmatprep.subr.bf16.mxu0 0
        %2620 = vmatpush2.bf16.msra.mxu0 %v2567
        %2621 = vmatprep.subr.bf16.mxu0 0
        %2622 = vmatpush2.bf16.msra.mxu0 %v2566
        %2623 = vmatprep.subr.bf16.mxu0 0
        %2624 = vmatpush2.bf16.msra.mxu0 %v2565
        %2625 = vmatprep.subr.bf16.mxu0 0
        %2626 = vmatpush2.bf16.msra.mxu0 %v2564
        %2627 = vmatprep.subr.bf16.mxu0 0
        %2628 = vmatpush2.bf16.msra.mxu0 %v2563
        %2629 = vmatprep.subr.bf16.mxu0 0
        %2630 = vmatpush2.bf16.msra.mxu0 %v2562
        %2631 = vmatprep.subr.bf16.mxu0 0
        %2632 = vmatpush2.bf16.msra.mxu0 %v2561
        %2633 = vmatprep.mubr.bf16.mxu0 %v2429
        %2634 = vmatmul.mubr.bf16.gmra.mxu0 %v2443
        %v2635 = vpop.f32.mrf.mxu0
        %v2636 = vadd.f32 %v2456, %v2635
        %v2637 = vpop.f32.mrf.mxu0
        %v2638 = vpop.f32.mrf.mxu0
        %v2639 = vpop.f32.mrf.mxu0
        %2640 = vdwg.mxu0
        %2641 = vmatprep.subr.bf16.mxu0 0
        %2642 = vmatpush1.bf16.msra.mxu0 %v2576
        %2643 = vmatprep.subr.bf16.mxu0 0
        %2644 = vmatpush1.bf16.msra.mxu0 %v2575
        %2645 = vmatprep.subr.bf16.mxu0 0
        %2646 = vmatpush1.bf16.msra.mxu0 %v2574
        %2647 = vmatprep.subr.bf16.mxu0 0
        %2648 = vmatpush1.bf16.msra.mxu0 %v2573
        %2649 = vmatprep.subr.bf16.mxu0 0
        %2650 = vmatpush1.bf16.msra.mxu0 %v2572
        %2651 = vmatprep.subr.bf16.mxu0 0
        %2652 = vmatpush1.bf16.msra.mxu0 %v2571
        %2653 = vmatprep.subr.bf16.mxu0 0
        %2654 = vmatpush1.bf16.msra.mxu0 %v2570
        %2655 = vmatprep.subr.bf16.mxu0 0
        %2656 = vmatpush1.bf16.msra.mxu0 %v2569
        %2657 = vmatprep.subr.bf16.mxu0 0
        %2658 = vmatpush2.bf16.msra.mxu0 0
        %2659 = vmatprep.subr.bf16.mxu0 0
        %2660 = vmatpush2.bf16.msra.mxu0 0
        %2661 = vmatprep.subr.bf16.mxu0 0
        %2662 = vmatpush2.bf16.msra.mxu0 0
        %2663 = vmatprep.subr.bf16.mxu0 0
        %2664 = vmatpush2.bf16.msra.mxu0 0
        %2665 = vmatprep.subr.bf16.mxu0 0
        %2666 = vmatpush2.bf16.msra.mxu0 0
        %2667 = vmatprep.subr.bf16.mxu0 0
        %2668 = vmatpush2.bf16.msra.mxu0 0
        %2669 = vmatprep.subr.bf16.mxu0 0
        %2670 = vmatpush2.bf16.msra.mxu0 0
        %2671 = vmatprep.subr.bf16.mxu0 0
        %2672 = vmatpush2.bf16.msra.mxu0 0
        %2673 = vmatprep.mubr.bf16.mxu0 0
        %2674 = vmatmul.mubr.bf16.gmra.mxu0 %v2452
        %v2675 = vpop.f32.mrf.mxu0
        %v2676 = vadd.f32 %v2636, %v2675
        %v2677 = vpop.f32.mrf.mxu0
        %v2678 = vpop.f32.mrf.mxu0
        %v2679 = vpop.f32.mrf.mxu0
        %2680 = vdwg.mxu0
        %v2681 = vmax.f32 %v2676, 0.0
        %v2682 = vpack.c.bf16 %v2681, %v2681
        %v2684 = vshrl.u32 %v2682, 16
        %v2686 = vrot.slane %v2684, 7
        %v2687 = vshll.u32 %v2682, 16
        %v2689 = vor.u32 %v2686, %v2687
        %v2691 = vsel %vm663, 0, %v2689
        %v2692 = vsel %vm2442, 0, %v2691
        %v2693 = vrot.slane %v2687, 1
        %v2694 = vor.u32 %v2684, %v2693
        %v2696 = vsel %vm2449, %v2694, 0
        %v2697 = vsel %vm2451, 0, %v2696
        %v2698 = vlaneseq
        %v2699 = vshrl.u32 %v2698, 7
        %v2700 = vsub.s32 0, %v2699
        %v2701 = vrot.slane %v2427, %v2700
        %v2750 = vunpack.c.l.b16 %v2379
        %v2751 = vunpack.c.l.b16 %v2380
        %v2752 = vunpack.c.l.b16 %v2381
        %v2753 = vunpack.c.l.b16 %v2382
        %v2754 = vunpack.c.l.b16 %v2383
        %v2755 = vunpack.c.l.b16 %v2384
        %v2756 = vunpack.c.l.b16 %v2385
        %v2757 = vunpack.c.l.b16 %v2386
        %v2758 = vunpack.c.l.b16 %v2387
        %v2759 = vunpack.c.l.b16 %v2388
        %v2760 = vunpack.c.l.b16 %v2389
        %v2761 = vunpack.c.l.b16 %v2390
        %v2762 = vunpack.c.l.b16 %v2391
        %v2763 = vunpack.c.l.b16 %v2392
        %v2764 = vunpack.c.l.b16 %v2393
        %v2765 = vunpack.c.l.b16 %v2394
        %v2766 = vunpack.c.l.b16 %v2395
        %v2767 = vunpack.c.l.b16 %v2396
        %v2768 = vunpack.c.l.b16 %v2397
        %v2769 = vunpack.c.l.b16 %v2398
        %v2770 = vunpack.c.l.b16 %v2399
        %v2771 = vunpack.c.l.b16 %v2400
        %v2772 = vunpack.c.l.b16 %v2401
        %v2773 = vunpack.c.l.b16 %v2402
        %v2774 = vunpack.c.l.b16 %v2403
        %v2775 = vunpack.c.l.b16 %v2404
        %v2776 = vunpack.c.l.b16 %v2405
        %v2777 = vunpack.c.l.b16 %v2406
        %v2778 = vunpack.c.l.b16 %v2407
        %v2779 = vunpack.c.l.b16 %v2408
        %v2780 = vunpack.c.l.b16 %v2409
        %v2781 = vunpack.c.l.b16 %v2410
        %v2782 = vunpack.c.l.b16 %v2411
        %v2783 = vunpack.c.l.b16 %v2412
        %v2784 = vunpack.c.l.b16 %v2413
        %v2785 = vunpack.c.l.b16 %v2414
        %v2786 = vunpack.c.l.b16 %v2415
        %v2787 = vunpack.c.l.b16 %v2416
        %v2788 = vunpack.c.l.b16 %v2417
        %v2789 = vunpack.c.l.b16 %v2418
        %v2790 = vunpack.c.l.b16 %v2419
        %v2791 = vunpack.c.l.b16 %v2420
        %v2792 = vunpack.c.l.b16 %v2421
        %v2793 = vunpack.c.l.b16 %v2422
        %v2794 = vunpack.c.l.b16 %v2423
        %v2795 = vunpack.c.l.b16 %v2424
        %v2796 = vunpack.c.l.b16 %v2425
        %v2797 = vunpack.c.l.b16 %v2426
        %v2798 = vpack.c.b16 %v2751, %v2750
        %v2799 = vpack.c.b16 %v2753, %v2752
        %v2800 = vpack.c.b16 %v2755, %v2754
        %v2801 = vpack.c.b16 %v2757, %v2756
        %v2802 = vpack.c.b16 %v2759, %v2758
        %v2803 = vpack.c.b16 %v2761, %v2760
        %v2804 = vpack.c.b16 %v2763, %v2762
        %v2805 = vpack.c.b16 %v2765, %v2764
        %v2806 = vpack.c.b16 %v2767, %v2766
        %v2807 = vpack.c.b16 %v2769, %v2768
        %v2808 = vpack.c.b16 %v2771, %v2770
        %v2809 = vpack.c.b16 %v2773, %v2772
        %v2810 = vpack.c.b16 %v2775, %v2774
        %v2811 = vpack.c.b16 %v2777, %v2776
        %v2812 = vpack.c.b16 %v2779, %v2778
        %v2813 = vpack.c.b16 %v2781, %v2780
        %v2814 = vpack.c.b16 %v2783, %v2782
        %v2815 = vpack.c.b16 %v2785, %v2784
        %v2816 = vpack.c.b16 %v2787, %v2786
        %v2817 = vpack.c.b16 %v2789, %v2788
        %v2818 = vpack.c.b16 %v2791, %v2790
        %v2819 = vpack.c.b16 %v2793, %v2792
        %v2820 = vpack.c.b16 %v2795, %v2794
        %v2821 = vpack.c.b16 %v2797, %v2796
        %2846 = vmatprep.subr.bf16.mxu0 0
        %2847 = vmatpush1.bf16.msra.mxu0 %v2805
        %2848 = vmatprep.subr.bf16.mxu0 0
        %2849 = vmatpush1.bf16.msra.mxu0 %v2804
        %2850 = vmatprep.subr.bf16.mxu0 0
        %2851 = vmatpush1.bf16.msra.mxu0 %v2803
        %2852 = vmatprep.subr.bf16.mxu0 0
        %2853 = vmatpush1.bf16.msra.mxu0 %v2802
        %2854 = vmatprep.subr.bf16.mxu0 0
        %2855 = vmatpush1.bf16.msra.mxu0 %v2801
        %2856 = vmatprep.subr.bf16.mxu0 0
        %2857 = vmatpush1.bf16.msra.mxu0 %v2800
        %2858 = vmatprep.subr.bf16.mxu0 0
        %2859 = vmatpush1.bf16.msra.mxu0 %v2799
        %2860 = vmatprep.subr.bf16.mxu0 0
        %2861 = vmatpush1.bf16.msra.mxu0 %v2798
        %2862 = vmatprep.subr.bf16.mxu0 0
        %2863 = vmatpush2.bf16.msra.mxu0 %v2813
        %2864 = vmatprep.subr.bf16.mxu0 0
        %2865 = vmatpush2.bf16.msra.mxu0 %v2812
        %2866 = vmatprep.subr.bf16.mxu0 0
        %2867 = vmatpush2.bf16.msra.mxu0 %v2811
        %2868 = vmatprep.subr.bf16.mxu0 0
        %2869 = vmatpush2.bf16.msra.mxu0 %v2810
        %2870 = vmatprep.subr.bf16.mxu0 0
        %2871 = vmatpush2.bf16.msra.mxu0 %v2809
        %2872 = vmatprep.subr.bf16.mxu0 0
        %2873 = vmatpush2.bf16.msra.mxu0 %v2808
        %2874 = vmatprep.subr.bf16.mxu0 0
        %2875 = vmatpush2.bf16.msra.mxu0 %v2807
        %2876 = vmatprep.subr.bf16.mxu0 0
        %2877 = vmatpush2.bf16.msra.mxu0 %v2806
        %2878 = vmatprep.mubr.bf16.mxu0 %v2682
        %2879 = vmatmul.mubr.bf16.gmra.mxu0 %v2692
        %v2880 = vpop.f32.mrf.mxu0
        %v2881 = vadd.f32 %v2701, %v2880
        %v2882 = vpop.f32.mrf.mxu0
        %v2883 = vpop.f32.mrf.mxu0
        %v2884 = vpop.f32.mrf.mxu0
        %2885 = vdwg.mxu0
        %2886 = vmatprep.subr.bf16.mxu0 0
        %2887 = vmatpush1.bf16.msra.mxu0 %v2821
        %2888 = vmatprep.subr.bf16.mxu0 0
        %2889 = vmatpush1.bf16.msra.mxu0 %v2820
        %2890 = vmatprep.subr.bf16.mxu0 0
        %2891 = vmatpush1.bf16.msra.mxu0 %v2819
        %2892 = vmatprep.subr.bf16.mxu0 0
        %2893 = vmatpush1.bf16.msra.mxu0 %v2818
        %2894 = vmatprep.subr.bf16.mxu0 0
        %2895 = vmatpush1.bf16.msra.mxu0 %v2817
        %2896 = vmatprep.subr.bf16.mxu0 0
        %2897 = vmatpush1.bf16.msra.mxu0 %v2816
        %2898 = vmatprep.subr.bf16.mxu0 0
        %2899 = vmatpush1.bf16.msra.mxu0 %v2815
        %2900 = vmatprep.subr.bf16.mxu0 0
        %2901 = vmatpush1.bf16.msra.mxu0 %v2814
        %2902 = vmatprep.subr.bf16.mxu0 0
        %2903 = vmatpush2.bf16.msra.mxu0 0
        %2904 = vmatprep.subr.bf16.mxu0 0
        %2905 = vmatpush2.bf16.msra.mxu0 0
        %2906 = vmatprep.subr.bf16.mxu0 0
        %2907 = vmatpush2.bf16.msra.mxu0 0
        %2908 = vmatprep.subr.bf16.mxu0 0
        %2909 = vmatpush2.bf16.msra.mxu0 0
        %2910 = vmatprep.subr.bf16.mxu0 0
        %2911 = vmatpush2.bf16.msra.mxu0 0
        %2912 = vmatprep.subr.bf16.mxu0 0
        %2913 = vmatpush2.bf16.msra.mxu0 0
        %2914 = vmatprep.subr.bf16.mxu0 0
        %2915 = vmatpush2.bf16.msra.mxu0 0
        %2916 = vmatprep.subr.bf16.mxu0 0
        %2917 = vmatpush2.bf16.msra.mxu0 0
        %2918 = vmatprep.mubr.bf16.mxu0 0
        %2919 = vmatmul.mubr.bf16.gmra.mxu0 %v2697
        %v2920 = vpop.f32.mrf.mxu0
        %v2921 = vadd.f32 %v2881, %v2920
        %v2922 = vpop.f32.mrf.mxu0
        %v2923 = vpop.f32.mrf.mxu0
        %v2924 = vpop.f32.mrf.mxu0
        %2925 = vdwg.mxu0
        %v2926 = vadd.f32 %v2921, %v2327
        %v2928 = vrot.slane %v2926, 7
        %v2930 = vsel %vm1636, 0.0, %v2928
        %v2931 = vsel %vm2431, -inf, %v2930
        %v2932 = vrot.slane %v2926, 1
        %v2934 = vsel %vm1653, %v2932, 0.0
        %v2935 = vsel %vm2432, -inf, %v2934
        %v2936 = vmax.f32 %v2931, %v2926
        %v2937 = vmax.f32 %v2936, %v2935
        %2938 = vst [vmem:[#allocation2] sm:$0xff] %v2937
        %v2939 = vld [vmem:[#allocation2] ss:$2 sm:$0xf]
        %s2940 = scalar_lea.vmem [#allocation12], 384
        %v2941 = vld [vmem:[%s2940] sm:$0xf]
        %v2942 = vld [vmem:[%s2940 + $0x4] sm:$0xf]
        %v2943 = vld [vmem:[%s2940 + $0x8] sm:$0xf]
        %v2944 = vld [vmem:[%s2940 + $0xc] sm:$0xf]
        %v2945 = vld [vmem:[%s2940 + $0x10] sm:$0xf]
        %v2946 = vld [vmem:[%s2940 + $0x14] sm:$0xf]
        %v2947 = vld [vmem:[%s2940 + $0x18] sm:$0xf]
        %v2948 = vld [vmem:[%s2940 + $0x1c] sm:$0xf]
        %v2949 = vld [vmem:[%s2940 + $0x20] sm:$0xf]
        %v2950 = vld [vmem:[%s2940 + $0x24] sm:$0xf]
        %v2951 = vld [vmem:[%s2940 + $0x28] sm:$0xf]
        %v2952 = vld [vmem:[%s2940 + $0x2c] sm:$0xf]
        %v2953 = vld [vmem:[%s2940 + $0x30] sm:$0xf]
        %v2954 = vld [vmem:[%s2940 + $0x34] sm:$0xf]
        %v2955 = vld [vmem:[%s2940 + $0x38] sm:$0xf]
        %v2956 = vld [vmem:[%s2940 + $0x3c] sm:$0xf]
        %v2957 = vld [vmem:[%s2940 + $0x40] sm:$0xf]
        %v2958 = vld [vmem:[%s2940 + $0x44] sm:$0xf]
        %v2959 = vld [vmem:[%s2940 + $0x48] sm:$0xf]
        %v2960 = vld [vmem:[%s2940 + $0x4c] sm:$0xf]
        %v2961 = vld [vmem:[%s2940 + $0x50] sm:$0xf]
        %v2962 = vld [vmem:[%s2940 + $0x54] sm:$0xf]
        %v2963 = vld [vmem:[%s2940 + $0x58] sm:$0xf]
        %v2964 = vld [vmem:[%s2940 + $0x5c] sm:$0xf]
        %v2965 = vld [vmem:[%s2940 + $0x60] sm:$0xf]
        %v2966 = vld [vmem:[%s2940 + $0x64] sm:$0xf]
        %v2967 = vld [vmem:[%s2940 + $0x68] sm:$0xf]
        %v2968 = vld [vmem:[%s2940 + $0x6c] sm:$0xf]
        %v2969 = vld [vmem:[%s2940 + $0x70] sm:$0xf]
        %v2970 = vld [vmem:[%s2940 + $0x74] sm:$0xf]
        %v2971 = vld [vmem:[%s2940 + $0x78] sm:$0xf]
        %v2972 = vld [vmem:[%s2940 + $0x7c] sm:$0xf]
        %v2973 = vld [vmem:[%s2940 + $0x80] sm:$0xf]
        %v2974 = vld [vmem:[%s2940 + $0x84] sm:$0xf]
        %v2975 = vld [vmem:[%s2940 + $0x88] sm:$0xf]
        %v2976 = vld [vmem:[%s2940 + $0x8c] sm:$0xf]
        %v2977 = vld [vmem:[%s2940 + $0x90] sm:$0xf]
        %v2978 = vld [vmem:[%s2940 + $0x94] sm:$0xf]
        %v2979 = vld [vmem:[%s2940 + $0x98] sm:$0xf]
        %v2980 = vld [vmem:[%s2940 + $0x9c] sm:$0xf]
        %v2981 = vld [vmem:[%s2940 + $0xa0] sm:$0xf]
        %v2982 = vld [vmem:[%s2940 + $0xa4] sm:$0xf]
        %v2983 = vld [vmem:[%s2940 + $0xa8] sm:$0xf]
        %v2984 = vld [vmem:[%s2940 + $0xac] sm:$0xf]
        %v2985 = vld [vmem:[%s2940 + $0xb0] sm:$0xf]
        %v2986 = vld [vmem:[%s2940 + $0xb4] sm:$0xf]
        %v2987 = vld [vmem:[%s2940 + $0xb8] sm:$0xf]
        %v2988 = vld [vmem:[%s2940 + $0xbc] sm:$0xf]
        %v2989 = vld [vmem:[%s8 + $0x2] sm:$0x1]
        %s2990 = scalar_lea.vmem [#allocation14], 384
        %v2991 = vld [vmem:[%s2990] sm:$0xf]
        %v2992 = vld [vmem:[%s2990 + $0x4] sm:$0xf]
        %v2993 = vld [vmem:[%s2990 + $0x8] sm:$0xf]
        %v2994 = vld [vmem:[%s2990 + $0xc] sm:$0xf]
        %v2995 = vld [vmem:[%s2990 + $0x10] sm:$0xf]
        %v2996 = vld [vmem:[%s2990 + $0x14] sm:$0xf]
        %v2997 = vld [vmem:[%s2990 + $0x18] sm:$0xf]
        %v2998 = vld [vmem:[%s2990 + $0x1c] sm:$0xf]
        %v2999 = vld [vmem:[%s2990 + $0x20] sm:$0xf]
        %v3000 = vld [vmem:[%s2990 + $0x24] sm:$0xf]
        %v3001 = vld [vmem:[%s2990 + $0x28] sm:$0xf]
        %v3002 = vld [vmem:[%s2990 + $0x2c] sm:$0xf]
        %v3003 = vld [vmem:[%s2990 + $0x30] sm:$0xf]
        %v3004 = vld [vmem:[%s2990 + $0x34] sm:$0xf]
        %v3005 = vld [vmem:[%s2990 + $0x38] sm:$0xf]
        %v3006 = vld [vmem:[%s2990 + $0x3c] sm:$0xf]
        %v3007 = vld [vmem:[%s2990 + $0x40] sm:$0xf]
        %v3008 = vld [vmem:[%s2990 + $0x44] sm:$0xf]
        %v3009 = vld [vmem:[%s2990 + $0x48] sm:$0xf]
        %v3010 = vld [vmem:[%s2990 + $0x4c] sm:$0xf]
        %v3011 = vld [vmem:[%s2990 + $0x50] sm:$0xf]
        %v3012 = vld [vmem:[%s2990 + $0x54] sm:$0xf]
        %v3013 = vld [vmem:[%s2990 + $0x58] sm:$0xf]
        %v3014 = vld [vmem:[%s2990 + $0x5c] sm:$0xf]
        %v3015 = vld [vmem:[%s2990 + $0x60] sm:$0xf]
        %v3016 = vld [vmem:[%s2990 + $0x64] sm:$0xf]
        %v3017 = vld [vmem:[%s2990 + $0x68] sm:$0xf]
        %v3018 = vld [vmem:[%s2990 + $0x6c] sm:$0xf]
        %v3019 = vld [vmem:[%s2990 + $0x70] sm:$0xf]
        %v3020 = vld [vmem:[%s2990 + $0x74] sm:$0xf]
        %v3021 = vld [vmem:[%s2990 + $0x78] sm:$0xf]
        %v3022 = vld [vmem:[%s2990 + $0x7c] sm:$0xf]
        %v3023 = vld [vmem:[%s2990 + $0x80] sm:$0xf]
        %v3024 = vld [vmem:[%s2990 + $0x84] sm:$0xf]
        %v3025 = vld [vmem:[%s2990 + $0x88] sm:$0xf]
        %v3026 = vld [vmem:[%s2990 + $0x8c] sm:$0xf]
        %v3027 = vld [vmem:[%s2990 + $0x90] sm:$0xf]
        %v3028 = vld [vmem:[%s2990 + $0x94] sm:$0xf]
        %v3029 = vld [vmem:[%s2990 + $0x98] sm:$0xf]
        %v3030 = vld [vmem:[%s2990 + $0x9c] sm:$0xf]
        %v3031 = vld [vmem:[%s2990 + $0xa0] sm:$0xf]
        %v3032 = vld [vmem:[%s2990 + $0xa4] sm:$0xf]
        %v3033 = vld [vmem:[%s2990 + $0xa8] sm:$0xf]
        %v3034 = vld [vmem:[%s2990 + $0xac] sm:$0xf]
        %v3035 = vld [vmem:[%s2990 + $0xb0] sm:$0xf]
        %v3036 = vld [vmem:[%s2990 + $0xb4] sm:$0xf]
        %v3037 = vld [vmem:[%s2990 + $0xb8] sm:$0xf]
        %v3038 = vld [vmem:[%s2990 + $0xbc] sm:$0xf]
        %v3039 = vld [vmem:[%s10 + $0x2] sm:$0x1]
        %v3040 = vmax.f32 %v2939, 0.0
        %v3041 = vpack.c.bf16 %v3040, %v3040
        %v3042 = vlaneseq
        %v3043 = vshrl.u32 %v3042, 7
        %v3044 = vsub.s32 0, %v3043
        %v3045 = vrot.slane %v2989, %v3044
        %v3094 = vunpack.c.l.b16 %v2941
        %v3095 = vunpack.c.l.b16 %v2942
        %v3096 = vunpack.c.l.b16 %v2943
        %v3097 = vunpack.c.l.b16 %v2944
        %v3098 = vunpack.c.l.b16 %v2945
        %v3099 = vunpack.c.l.b16 %v2946
        %v3100 = vunpack.c.l.b16 %v2947
        %v3101 = vunpack.c.l.b16 %v2948
        %v3102 = vunpack.c.l.b16 %v2949
        %v3103 = vunpack.c.l.b16 %v2950
        %v3104 = vunpack.c.l.b16 %v2951
        %v3105 = vunpack.c.l.b16 %v2952
        %v3106 = vunpack.c.l.b16 %v2953
        %v3107 = vunpack.c.l.b16 %v2954
        %v3108 = vunpack.c.l.b16 %v2955
        %v3109 = vunpack.c.l.b16 %v2956
        %v3110 = vunpack.c.l.b16 %v2957
        %v3111 = vunpack.c.l.b16 %v2958
        %v3112 = vunpack.c.l.b16 %v2959
        %v3113 = vunpack.c.l.b16 %v2960
        %v3114 = vunpack.c.l.b16 %v2961
        %v3115 = vunpack.c.l.b16 %v2962
        %v3116 = vunpack.c.l.b16 %v2963
        %v3117 = vunpack.c.l.b16 %v2964
        %v3118 = vunpack.c.l.b16 %v2965
        %v3119 = vunpack.c.l.b16 %v2966
        %v3120 = vunpack.c.l.b16 %v2967
        %v3121 = vunpack.c.l.b16 %v2968
        %v3122 = vunpack.c.l.b16 %v2969
        %v3123 = vunpack.c.l.b16 %v2970
        %v3124 = vunpack.c.l.b16 %v2971
        %v3125 = vunpack.c.l.b16 %v2972
        %v3126 = vunpack.c.l.b16 %v2973
        %v3127 = vunpack.c.l.b16 %v2974
        %v3128 = vunpack.c.l.b16 %v2975
        %v3129 = vunpack.c.l.b16 %v2976
        %v3130 = vunpack.c.l.b16 %v2977
        %v3131 = vunpack.c.l.b16 %v2978
        %v3132 = vunpack.c.l.b16 %v2979
        %v3133 = vunpack.c.l.b16 %v2980
        %v3134 = vunpack.c.l.b16 %v2981
        %v3135 = vunpack.c.l.b16 %v2982
        %v3136 = vunpack.c.l.b16 %v2983
        %v3137 = vunpack.c.l.b16 %v2984
        %v3138 = vunpack.c.l.b16 %v2985
        %v3139 = vunpack.c.l.b16 %v2986
        %v3140 = vunpack.c.l.b16 %v2987
        %v3141 = vunpack.c.l.b16 %v2988
        %v3142 = vpack.c.b16 %v3095, %v3094
        %v3143 = vpack.c.b16 %v3097, %v3096
        %v3144 = vpack.c.b16 %v3099, %v3098
        %v3145 = vpack.c.b16 %v3101, %v3100
        %v3146 = vpack.c.b16 %v3103, %v3102
        %v3147 = vpack.c.b16 %v3105, %v3104
        %v3148 = vpack.c.b16 %v3107, %v3106
        %v3149 = vpack.c.b16 %v3109, %v3108
        %v3150 = vpack.c.b16 %v3111, %v3110
        %v3151 = vpack.c.b16 %v3113, %v3112
        %v3152 = vpack.c.b16 %v3115, %v3114
        %v3153 = vpack.c.b16 %v3117, %v3116
        %v3154 = vpack.c.b16 %v3119, %v3118
        %v3155 = vpack.c.b16 %v3121, %v3120
        %v3156 = vpack.c.b16 %v3123, %v3122
        %v3157 = vpack.c.b16 %v3125, %v3124
        %v3158 = vpack.c.b16 %v3127, %v3126
        %v3159 = vpack.c.b16 %v3129, %v3128
        %v3160 = vpack.c.b16 %v3131, %v3130
        %v3161 = vpack.c.b16 %v3133, %v3132
        %v3162 = vpack.c.b16 %v3135, %v3134
        %v3163 = vpack.c.b16 %v3137, %v3136
        %v3164 = vpack.c.b16 %v3139, %v3138
        %v3165 = vpack.c.b16 %v3141, %v3140
        %3190 = vmatprep.subr.bf16.mxu0 0
        %3191 = vmatpush1.bf16.msra.mxu0 %v3149
        %3192 = vmatprep.subr.bf16.mxu0 0
        %3193 = vmatpush1.bf16.msra.mxu0 %v3148
        %3194 = vmatprep.subr.bf16.mxu0 0
        %3195 = vmatpush1.bf16.msra.mxu0 %v3147
        %3196 = vmatprep.subr.bf16.mxu0 0
        %3197 = vmatpush1.bf16.msra.mxu0 %v3146
        %3198 = vmatprep.subr.bf16.mxu0 0
        %3199 = vmatpush1.bf16.msra.mxu0 %v3145
        %3200 = vmatprep.subr.bf16.mxu0 0
        %3201 = vmatpush1.bf16.msra.mxu0 %v3144
        %3202 = vmatprep.subr.bf16.mxu0 0
        %3203 = vmatpush1.bf16.msra.mxu0 %v3143
        %3204 = vmatprep.subr.bf16.mxu0 0
        %3205 = vmatpush1.bf16.msra.mxu0 %v3142
        %3206 = vmatprep.subr.bf16.mxu0 0
        %3207 = vmatpush2.bf16.msra.mxu0 %v3157
        %3208 = vmatprep.subr.bf16.mxu0 0
        %3209 = vmatpush2.bf16.msra.mxu0 %v3156
        %3210 = vmatprep.subr.bf16.mxu0 0
        %3211 = vmatpush2.bf16.msra.mxu0 %v3155
        %3212 = vmatprep.subr.bf16.mxu0 0
        %3213 = vmatpush2.bf16.msra.mxu0 %v3154
        %3214 = vmatprep.subr.bf16.mxu0 0
        %3215 = vmatpush2.bf16.msra.mxu0 %v3153
        %3216 = vmatprep.subr.bf16.mxu0 0
        %3217 = vmatpush2.bf16.msra.mxu0 %v3152
        %3218 = vmatprep.subr.bf16.mxu0 0
        %3219 = vmatpush2.bf16.msra.mxu0 %v3151
        %3220 = vmatprep.subr.bf16.mxu0 0
        %3221 = vmatpush2.bf16.msra.mxu0 %v3150
        %3222 = vmatprep.mubr.bf16.mxu0 %v3041
        %3223 = vmatmul.mubr.bf16.gmra.mxu0 0
        %v3224 = vpop.f32.mrf.mxu0
        %v3225 = vadd.f32 %v3045, %v3224
        %v3226 = vpop.f32.mrf.mxu0
        %v3227 = vpop.f32.mrf.mxu0
        %v3228 = vpop.f32.mrf.mxu0
        %3229 = vdwg.mxu0
        %3230 = vmatprep.subr.bf16.mxu0 0
        %3231 = vmatpush1.bf16.msra.mxu0 %v3165
        %3232 = vmatprep.subr.bf16.mxu0 0
        %3233 = vmatpush1.bf16.msra.mxu0 %v3164
        %3234 = vmatprep.subr.bf16.mxu0 0
        %3235 = vmatpush1.bf16.msra.mxu0 %v3163
        %3236 = vmatprep.subr.bf16.mxu0 0
        %3237 = vmatpush1.bf16.msra.mxu0 %v3162
        %3238 = vmatprep.subr.bf16.mxu0 0
        %3239 = vmatpush1.bf16.msra.mxu0 %v3161
        %3240 = vmatprep.subr.bf16.mxu0 0
        %3241 = vmatpush1.bf16.msra.mxu0 %v3160
        %3242 = vmatprep.subr.bf16.mxu0 0
        %3243 = vmatpush1.bf16.msra.mxu0 %v3159
        %3244 = vmatprep.subr.bf16.mxu0 0
        %3245 = vmatpush1.bf16.msra.mxu0 %v3158
        %3246 = vmatprep.subr.bf16.mxu0 0
        %3247 = vmatpush2.bf16.msra.mxu0 0
        %3248 = vmatprep.subr.bf16.mxu0 0
        %3249 = vmatpush2.bf16.msra.mxu0 0
        %3250 = vmatprep.subr.bf16.mxu0 0
        %3251 = vmatpush2.bf16.msra.mxu0 0
        %3252 = vmatprep.subr.bf16.mxu0 0
        %3253 = vmatpush2.bf16.msra.mxu0 0
        %3254 = vmatprep.subr.bf16.mxu0 0
        %3255 = vmatpush2.bf16.msra.mxu0 0
        %3256 = vmatprep.subr.bf16.mxu0 0
        %3257 = vmatpush2.bf16.msra.mxu0 0
        %3258 = vmatprep.subr.bf16.mxu0 0
        %3259 = vmatpush2.bf16.msra.mxu0 0
        %3260 = vmatprep.subr.bf16.mxu0 0
        %3261 = vmatpush2.bf16.msra.mxu0 0
        %3262 = vmatprep.mubr.bf16.mxu0 0
        %3263 = vmatmul.mubr.bf16.gmra.mxu0 0
        %v3264 = vpop.f32.mrf.mxu0
        %v3265 = vadd.f32 %v3225, %v3264
        %v3266 = vpop.f32.mrf.mxu0
        %v3267 = vpop.f32.mrf.mxu0
        %v3268 = vpop.f32.mrf.mxu0
        %3269 = vdwg.mxu0
        %v3270 = vmax.f32 %v3265, 0.0
        %v3271 = vpack.c.bf16 %v3270, %v3270
        %v3272 = vlaneseq
        %v3273 = vshrl.u32 %v3272, 7
        %v3274 = vsub.s32 0, %v3273
        %v3275 = vrot.slane %v3039, %v3274
        %v3324 = vunpack.c.l.b16 %v2991
        %v3325 = vunpack.c.l.b16 %v2992
        %v3326 = vunpack.c.l.b16 %v2993
        %v3327 = vunpack.c.l.b16 %v2994
        %v3328 = vunpack.c.l.b16 %v2995
        %v3329 = vunpack.c.l.b16 %v2996
        %v3330 = vunpack.c.l.b16 %v2997
        %v3331 = vunpack.c.l.b16 %v2998
        %v3332 = vunpack.c.l.b16 %v2999
        %v3333 = vunpack.c.l.b16 %v3000
        %v3334 = vunpack.c.l.b16 %v3001
        %v3335 = vunpack.c.l.b16 %v3002
        %v3336 = vunpack.c.l.b16 %v3003
        %v3337 = vunpack.c.l.b16 %v3004
        %v3338 = vunpack.c.l.b16 %v3005
        %v3339 = vunpack.c.l.b16 %v3006
        %v3340 = vunpack.c.l.b16 %v3007
        %v3341 = vunpack.c.l.b16 %v3008
        %v3342 = vunpack.c.l.b16 %v3009
        %v3343 = vunpack.c.l.b16 %v3010
        %v3344 = vunpack.c.l.b16 %v3011
        %v3345 = vunpack.c.l.b16 %v3012
        %v3346 = vunpack.c.l.b16 %v3013
        %v3347 = vunpack.c.l.b16 %v3014
        %v3348 = vunpack.c.l.b16 %v3015
        %v3349 = vunpack.c.l.b16 %v3016
        %v3350 = vunpack.c.l.b16 %v3017
        %v3351 = vunpack.c.l.b16 %v3018
        %v3352 = vunpack.c.l.b16 %v3019
        %v3353 = vunpack.c.l.b16 %v3020
        %v3354 = vunpack.c.l.b16 %v3021
        %v3355 = vunpack.c.l.b16 %v3022
        %v3356 = vunpack.c.l.b16 %v3023
        %v3357 = vunpack.c.l.b16 %v3024
        %v3358 = vunpack.c.l.b16 %v3025
        %v3359 = vunpack.c.l.b16 %v3026
        %v3360 = vunpack.c.l.b16 %v3027
        %v3361 = vunpack.c.l.b16 %v3028
        %v3362 = vunpack.c.l.b16 %v3029
        %v3363 = vunpack.c.l.b16 %v3030
        %v3364 = vunpack.c.l.b16 %v3031
        %v3365 = vunpack.c.l.b16 %v3032
        %v3366 = vunpack.c.l.b16 %v3033
        %v3367 = vunpack.c.l.b16 %v3034
        %v3368 = vunpack.c.l.b16 %v3035
        %v3369 = vunpack.c.l.b16 %v3036
        %v3370 = vunpack.c.l.b16 %v3037
        %v3371 = vunpack.c.l.b16 %v3038
        %v3372 = vpack.c.b16 %v3325, %v3324
        %v3373 = vpack.c.b16 %v3327, %v3326
        %v3374 = vpack.c.b16 %v3329, %v3328
        %v3375 = vpack.c.b16 %v3331, %v3330
        %v3376 = vpack.c.b16 %v3333, %v3332
        %v3377 = vpack.c.b16 %v3335, %v3334
        %v3378 = vpack.c.b16 %v3337, %v3336
        %v3379 = vpack.c.b16 %v3339, %v3338
        %v3380 = vpack.c.b16 %v3341, %v3340
        %v3381 = vpack.c.b16 %v3343, %v3342
        %v3382 = vpack.c.b16 %v3345, %v3344
        %v3383 = vpack.c.b16 %v3347, %v3346
        %v3384 = vpack.c.b16 %v3349, %v3348
        %v3385 = vpack.c.b16 %v3351, %v3350
        %v3386 = vpack.c.b16 %v3353, %v3352
        %v3387 = vpack.c.b16 %v3355, %v3354
        %v3388 = vpack.c.b16 %v3357, %v3356
        %v3389 = vpack.c.b16 %v3359, %v3358
        %v3390 = vpack.c.b16 %v3361, %v3360
        %v3391 = vpack.c.b16 %v3363, %v3362
        %v3392 = vpack.c.b16 %v3365, %v3364
        %v3393 = vpack.c.b16 %v3367, %v3366
        %v3394 = vpack.c.b16 %v3369, %v3368
        %v3395 = vpack.c.b16 %v3371, %v3370
        %3420 = vmatprep.subr.bf16.mxu0 0
        %3421 = vmatpush1.bf16.msra.mxu0 %v3379
        %3422 = vmatprep.subr.bf16.mxu0 0
        %3423 = vmatpush1.bf16.msra.mxu0 %v3378
        %3424 = vmatprep.subr.bf16.mxu0 0
        %3425 = vmatpush1.bf16.msra.mxu0 %v3377
        %3426 = vmatprep.subr.bf16.mxu0 0
        %3427 = vmatpush1.bf16.msra.mxu0 %v3376
        %3428 = vmatprep.subr.bf16.mxu0 0
        %3429 = vmatpush1.bf16.msra.mxu0 %v3375
        %3430 = vmatprep.subr.bf16.mxu0 0
        %3431 = vmatpush1.bf16.msra.mxu0 %v3374
        %3432 = vmatprep.subr.bf16.mxu0 0
        %3433 = vmatpush1.bf16.msra.mxu0 %v3373
        %3434 = vmatprep.subr.bf16.mxu0 0
        %3435 = vmatpush1.bf16.msra.mxu0 %v3372
        %3436 = vmatprep.subr.bf16.mxu0 0
        %3437 = vmatpush2.bf16.msra.mxu0 %v3387
        %3438 = vmatprep.subr.bf16.mxu0 0
        %3439 = vmatpush2.bf16.msra.mxu0 %v3386
        %3440 = vmatprep.subr.bf16.mxu0 0
        %3441 = vmatpush2.bf16.msra.mxu0 %v3385
        %3442 = vmatprep.subr.bf16.mxu0 0
        %3443 = vmatpush2.bf16.msra.mxu0 %v3384
        %3444 = vmatprep.subr.bf16.mxu0 0
        %3445 = vmatpush2.bf16.msra.mxu0 %v3383
        %3446 = vmatprep.subr.bf16.mxu0 0
        %3447 = vmatpush2.bf16.msra.mxu0 %v3382
        %3448 = vmatprep.subr.bf16.mxu0 0
        %3449 = vmatpush2.bf16.msra.mxu0 %v3381
        %3450 = vmatprep.subr.bf16.mxu0 0
        %3451 = vmatpush2.bf16.msra.mxu0 %v3380
        %3452 = vmatprep.mubr.bf16.mxu0 %v3271
        %3453 = vmatmul.mubr.bf16.gmra.mxu0 0
        %v3454 = vpop.f32.mrf.mxu0
        %v3455 = vadd.f32 %v3275, %v3454
        %v3456 = vpop.f32.mrf.mxu0
        %v3457 = vpop.f32.mrf.mxu0
        %v3458 = vpop.f32.mrf.mxu0
        %3459 = vdwg.mxu0
        %3460 = vmatprep.subr.bf16.mxu0 0
        %3461 = vmatpush1.bf16.msra.mxu0 %v3395
        %3462 = vmatprep.subr.bf16.mxu0 0
        %3463 = vmatpush1.bf16.msra.mxu0 %v3394
        %3464 = vmatprep.subr.bf16.mxu0 0
        %3465 = vmatpush1.bf16.msra.mxu0 %v3393
        %3466 = vmatprep.subr.bf16.mxu0 0
        %3467 = vmatpush1.bf16.msra.mxu0 %v3392
        %3468 = vmatprep.subr.bf16.mxu0 0
        %3469 = vmatpush1.bf16.msra.mxu0 %v3391
        %3470 = vmatprep.subr.bf16.mxu0 0
        %3471 = vmatpush1.bf16.msra.mxu0 %v3390
        %3472 = vmatprep.subr.bf16.mxu0 0
        %3473 = vmatpush1.bf16.msra.mxu0 %v3389
        %3474 = vmatprep.subr.bf16.mxu0 0
        %3475 = vmatpush1.bf16.msra.mxu0 %v3388
        %3476 = vmatprep.subr.bf16.mxu0 0
        %3477 = vmatpush2.bf16.msra.mxu0 0
        %3478 = vmatprep.subr.bf16.mxu0 0
        %3479 = vmatpush2.bf16.msra.mxu0 0
        %3480 = vmatprep.subr.bf16.mxu0 0
        %3481 = vmatpush2.bf16.msra.mxu0 0
        %3482 = vmatprep.subr.bf16.mxu0 0
        %3483 = vmatpush2.bf16.msra.mxu0 0
        %3484 = vmatprep.subr.bf16.mxu0 0
        %3485 = vmatpush2.bf16.msra.mxu0 0
        %3486 = vmatprep.subr.bf16.mxu0 0
        %3487 = vmatpush2.bf16.msra.mxu0 0
        %3488 = vmatprep.subr.bf16.mxu0 0
        %3489 = vmatpush2.bf16.msra.mxu0 0
        %3490 = vmatprep.subr.bf16.mxu0 0
        %3491 = vmatpush2.bf16.msra.mxu0 0
        %3492 = vmatprep.mubr.bf16.mxu0 0
        %3493 = vmatmul.mubr.bf16.gmra.mxu0 0
        %v3494 = vpop.f32.mrf.mxu0
        %v3495 = vadd.f32 %v3455, %v3494
        %v3496 = vpop.f32.mrf.mxu0
        %v3497 = vpop.f32.mrf.mxu0
        %v3498 = vpop.f32.mrf.mxu0
        %3499 = vdwg.mxu0
        %v3500 = vadd.f32 %v3495, %v2939
        %v3501 = vpack.c.bf16 %v3500, %v3500
        %v3502 = vld [vmem:[#allocation15] sm:$0xf]
        %v3503 = vld [vmem:[#allocation15 + $0x4] sm:$0xf]
        %v3504 = vld [vmem:[#allocation15 + $0x8] sm:$0xf]
        %v3505 = vld [vmem:[#allocation15 + $0xc] sm:$0xf]
        %v3506 = vld [vmem:[#allocation15 + $0x10] sm:$0xf]
        %v3507 = vld [vmem:[#allocation15 + $0x14] sm:$0xf]
        %v3508 = vld [vmem:[#allocation15 + $0x18] sm:$0xf]
        %v3509 = vld [vmem:[#allocation15 + $0x1c] sm:$0xf]
        %v3510 = vld [vmem:[#allocation15 + $0x20] sm:$0xf]
        %v3511 = vld [vmem:[#allocation15 + $0x24] sm:$0xf]
        %v3512 = vld [vmem:[#allocation15 + $0x28] sm:$0xf]
        %v3513 = vld [vmem:[#allocation15 + $0x2c] sm:$0xf]
        %v3514 = vld [vmem:[#allocation15 + $0x30] sm:$0xf]
        %v3515 = vld [vmem:[#allocation15 + $0x34] sm:$0xf]
        %v3516 = vld [vmem:[#allocation15 + $0x38] sm:$0xf]
        %v3517 = vld [vmem:[#allocation15 + $0x3c] sm:$0xf]
        %v3518 = vld [vmem:[%s12] sm:$0x1]
        %v3520 = vlaneseq
        %v3521 = vshrl.u32 %v3520, 7
        %v3522 = vsub.s32 0, %v3521
        %v3523 = vrot.slane %v3518, %v3522
        %v3541 = vunpack.c.l.b16 %v3502
        %v3542 = vunpack.c.l.b16 %v3503
        %v3543 = vunpack.c.l.b16 %v3504
        %v3544 = vunpack.c.l.b16 %v3505
        %v3545 = vunpack.c.l.b16 %v3506
        %v3546 = vunpack.c.l.b16 %v3507
        %v3547 = vunpack.c.l.b16 %v3508
        %v3548 = vunpack.c.l.b16 %v3509
        %v3549 = vunpack.c.l.b16 %v3510
        %v3550 = vunpack.c.l.b16 %v3511
        %v3551 = vunpack.c.l.b16 %v3512
        %v3552 = vunpack.c.l.b16 %v3513
        %v3553 = vunpack.c.l.b16 %v3514
        %v3554 = vunpack.c.l.b16 %v3515
        %v3555 = vunpack.c.l.b16 %v3516
        %v3556 = vunpack.c.l.b16 %v3517
        %v3557 = vpack.c.b16 %v3542, %v3541
        %v3558 = vpack.c.b16 %v3544, %v3543
        %v3559 = vpack.c.b16 %v3546, %v3545
        %v3560 = vpack.c.b16 %v3548, %v3547
        %v3561 = vpack.c.b16 %v3550, %v3549
        %v3562 = vpack.c.b16 %v3552, %v3551
        %v3563 = vpack.c.b16 %v3554, %v3553
        %v3564 = vpack.c.b16 %v3556, %v3555
        %3573 = vmatprep.subr.bf16.mxu0 0
        %3574 = vmatpush1.bf16.msra.mxu0 %v3564
        %3575 = vmatprep.subr.bf16.mxu0 0
        %3576 = vmatpush1.bf16.msra.mxu0 %v3563
        %3577 = vmatprep.subr.bf16.mxu0 0
        %3578 = vmatpush1.bf16.msra.mxu0 %v3562
        %3579 = vmatprep.subr.bf16.mxu0 0
        %3580 = vmatpush1.bf16.msra.mxu0 %v3561
        %3581 = vmatprep.subr.bf16.mxu0 0
        %3582 = vmatpush1.bf16.msra.mxu0 %v3560
        %3583 = vmatprep.subr.bf16.mxu0 0
        %3584 = vmatpush1.bf16.msra.mxu0 %v3559
        %3585 = vmatprep.subr.bf16.mxu0 0
        %3586 = vmatpush1.bf16.msra.mxu0 %v3558
        %3587 = vmatprep.subr.bf16.mxu0 0
        %3588 = vmatpush1.bf16.msra.mxu0 %v3557
        %3589 = vmatprep.subr.bf16.mxu0 0
        %3590 = vmatpush2.bf16.msra.mxu0 0
        %3591 = vmatprep.subr.bf16.mxu0 0
        %3592 = vmatpush2.bf16.msra.mxu0 0
        %3593 = vmatprep.subr.bf16.mxu0 0
        %3594 = vmatpush2.bf16.msra.mxu0 0
        %3595 = vmatprep.subr.bf16.mxu0 0
        %3596 = vmatpush2.bf16.msra.mxu0 0
        %3597 = vmatprep.subr.bf16.mxu0 0
        %3598 = vmatpush2.bf16.msra.mxu0 0
        %3599 = vmatprep.subr.bf16.mxu0 0
        %3600 = vmatpush2.bf16.msra.mxu0 0
        %3601 = vmatprep.subr.bf16.mxu0 0
        %3602 = vmatpush2.bf16.msra.mxu0 0
        %3603 = vmatprep.subr.bf16.mxu0 0
        %3604 = vmatpush2.bf16.msra.mxu0 0
        %3605 = vmatprep.mubr.bf16.mxu0 0
        %3606 = vmatmul.mubr.bf16.gmra.mxu0 %v3501
        %v3607 = vpop.f32.mrf.mxu0
        %v3608 = vadd.f32 %v3523, %v3607
        %v3609 = vpop.f32.mrf.mxu0
        %v3610 = vpop.f32.mrf.mxu0
        %v3611 = vpop.f32.mrf.mxu0
        %3612 = vdwg.mxu0
        %v3615 = vunpack.c.l.s4 1966171168
        %v3616 = vunpack.c.0.s8 %v3615
        %v3617 = vlaneseq
        %v3618 = vshrl.u32 %v3617, 7
        %v3619 = vsub.s32 %v3616, %v3618
        %v3620 = vrot.slane %v3608, %v3619
        %v3621 = vcombine.high %v3620, %v3620
        %v3623 = vunpack.c.l.s4 1966171168
        %v3624 = vunpack.c.0.s8 %v3623
        %v3625 = vlaneseq
        %v3626 = vshrl.u32 %v3625, 7
        %v3627 = vsub.s32 %v3624, %v3626
        %v3628 = vrot.slane %v3620, %v3627
        %v3630 = vunpack.c.l.s4 1966171168
        %v3631 = vunpack.c.0.s8 %v3630
        %v3632 = vlaneseq
        %v3633 = vshrl.u32 %v3632, 7
        %v3634 = vsub.s32 %v3631, %v3633
        %v3635 = vrot.slane %v3621, %v3634
        %v3636 = vcombine.high %v3628, %v3628
        %v3637 = vcombine.high %v3635, %v3635
        %3642 = vst [vmem:[%s558] sm:$0x1] %v3628
        %3643 = vst [vmem:[%s558 + $0x1] sm:$0x1] %v3635
        %3644 = vst [vmem:[%s558 + $0x2] sm:$0x1] %v3636
        %3645 = vst [vmem:[%s558 + $0x3] sm:$0x1] %v3637
        %s3646 = sand.u32 %s320, 1
        %s3647 = scalar_lea.sflag [#allocation5], %s3646
        %s3648 = sand.u32 %s320, 1
        %s3649 = smul.addr %s3648, 4
        %s3650 = scalar_lea.vmem [#allocation17], %s3649
        // Predicated region
        $region105: #{tpu_custom_call.1} parent=71 // pred_check
          %p3651 = pneg %p330
        $region106: #{tpu_custom_call.1} parent=71 // pred_check_branch
          %3653 = sbr.rel (%p3651) target = $region108
        $region107: #{tpu_custom_call.1} parent=71 // pred_region
          %s3654 = smul.u32 4, %s34
          %s3656 = ssub.s32 64, 64
          %3657 = vsyncadd %s3647, %s3656
          %s3658 = smul.addr %s3654, 16
          %s3659 = scalar_lea.hbm %s13, %s3658
          %s3660 = sshll.u32 %s3650, 4
          %s3661 = int_to_ptr.vmem [resolvable:$true] %s3660
          %3666 = dma.vmem_to_hbm [thread:$0]  %s3661, 64, %s3659, %s3647, 16, 16, 1
        $region108: #{tpu_custom_call.1} parent=71 // pred_fallthru
          _
      $region72: #{tpu_custom_call.1} parent=5 // pred_fallthru
        _
      %p3667 = scmp.le.s32.totalorder 2, %s29
      // Predicated region
      $region109: #{tpu_custom_call.1} parent=5 // pred_check
        %p3668 = pneg %p3667
      $region110: #{tpu_custom_call.1} parent=5 // pred_check_branch
        %3670 = sbr.rel (%p3668) target = $region112
      $region111: #{tpu_custom_call.1} parent=5 // pred_region
        %s3671 = ssub.s32 %s29, 2
        // Predicated region
        $region113: #{tpu_custom_call.1} parent=111 // pred_check
          %p3672 = pneg %p336
        $region114: #{tpu_custom_call.1} parent=111 // pred_check_branch
          %3674 = sbr.rel (%p3672) target = $region116
        $region115: #{tpu_custom_call.1} parent=111 // pred_region
          %s3675 = sand.u32 %s321, 1
          %s3676 = scalar_lea.sflag [#allocation5], %s3675
          %s3677 = sand.u32 %s321, 1
          %s3678 = smul.addr %s3677, 4
          %s3679 = scalar_lea.vmem [#allocation17], %s3678
          %3680 = dma.done %s3676, 64
        $region116: #{tpu_custom_call.1} parent=111 // pred_fallthru
          _
      $region112: #{tpu_custom_call.1} parent=5 // pred_fallthru
        _
    $region6: #{tpu_custom_call.1} parent=1 // loop_footer
      %s33 = sadd.s32 1, %s29
    $region7: #{tpu_custom_call.1} parent=1 // loop_footer_branch
      %28 = sbr.rel target = $region3
    $region8: #{tpu_custom_call.1} parent=1 // loop_exit
      _
    %3681 = vsyncpa [#allocation4], 1
    %s3682 = scalar_lea.sflag [#allocation4], 1
    %3683 = vsyncpa %s3682, 1
    %3684 = vsyncpa [#allocation7], 1
    %3685 = vsyncpa [#allocation10], 1
    %3686 = vsyncpa [#allocation13], 1
    %3687 = vsyncpa [#allocation16], 1
    %3688 = vsyncpa [#allocation5], 1
    %s3689 = scalar_lea.sflag [#allocation5], 1
    %3690 = vsyncpa %s3689, 1

</llo_original>
